<compile_context>
chip_gen: v5e
topology: v5e:2x2
jax: 0.10.0
libtpu: 0.0.40
codegen_flags: <defaults>
</compile_context>

<pallas_src>
import functools

import jax
import jax.numpy as jnp
from jax.experimental import pallas as pl
from jax.experimental.pallas import tpu as pltpu

BN_EPS = 1e-5


# ----------------------------- in-kernel helpers ------------------------------
def _mm(a, b):
    """Channel-mixing matmul on the MXU: bf16 operands, f32 accumulation."""
    return jnp.dot(a.astype(jnp.bfloat16), b.astype(jnp.bfloat16),
                   preferred_element_type=jnp.float32)


def _hop(adp_t_b, v):
    """One graph hop as a batched node-axis matmul.

    adp_t_b: [BT, N, N] (adjacency transposed, bf16, broadcast over the BT batch axis)
    v:       [BT, N, C]
    returns  out[m, w, c] = sum_v adp^T[w, v] * v[m, v, c]   (== nconv(x, adp))
    """
    return jax.lax.dot_general(
        adp_t_b, v.astype(jnp.bfloat16),
        dimension_numbers=(((2,), (1,)), ((0,), (0,))),
        preferred_element_type=jnp.float32)


def _bn_rows(x, gamma=None, beta=None):
    """Training-mode BatchNorm over rows (stats per channel/lane), centered 2-pass."""
    mu = jnp.mean(x, axis=0, keepdims=True)
    xc = x - mu
    var = jnp.mean(xc * xc, axis=0, keepdims=True)
    y = xc * jax.lax.rsqrt(var + BN_EPS)
    if gamma is not None:
        y = y * gamma + beta
    return y


# ----------------------------- the fused kernel -------------------------------
def _pgwnet_kernel(x_ref, nv2t_ref, nv1t_ref, w_start_ref, b_start_ref,
                   w_fg_ref, b_fg_ref, w_sk_ref, b_sk_ref,
                   w_gc_ref, b_gc_ref, gamma_ref, beta_ref,
                   wq_t_ref, bq_t_ref, poi_vec_t_ref, poi_ref,
                   w_e1_ref, b_e1_ref, w_e2_ref, b_e2_ref,
                   y_ref, dist_ref, gate_ref,
                   *, batch, n_nodes, t_in, rf, ksize, dilations,
                   c_res, c_dil, c_skip, out_dim):
    f32 = jnp.float32
    B, N, T = batch, n_nodes, t_in

    # ---- stem: bn_1 (affine=False, batch stats) fused with the start 1x1 conv -----
    # padded input channels are all-zero -> they normalize to exactly 0 and hit zero
    # weight rows, so the MXU K-padding of the start conv is free.
    cin = x_ref.shape[-1]
    x2 = x_ref[...].astype(f32).reshape(B * T * N, cin)
    xn = _bn_rows(x2)
    x2 = _mm(xn, w_start_ref[...]) + b_start_ref[...]            # [B*T*N, c_res]
    x = x2.reshape(B, T, N, c_res)

    # temporal left pad (applied AFTER bn_1, like the torch forward); start_conv of the
    # zero pad is just its bias, written directly into the VMEM-resident activation.
    pad = rf - T
    if pad > 0:
        pad_blk = jnp.broadcast_to(b_start_ref[...].reshape(1, 1, 1, c_res),
                                   (B, pad, N, c_res))
        x = jnp.concatenate([pad_blk, x], axis=1)
    t_cur = max(T, rf)

    # ---- adaptive adjacency: adp = softmax(relu(nodevec1 @ nodevec2), dim=1) -------
    # built directly in transposed form (adp^T) from pre-transposed node vectors so the
    # graph hop needs no in-kernel transpose; kept VMEM resident for all layers.
    s_t = jnp.dot(nv2t_ref[...], nv1t_ref[...], preferred_element_type=f32)   # [N, N]
    s_t = jnp.maximum(s_t, 0.0)
    e = jnp.exp(s_t - jnp.max(s_t, axis=0, keepdims=True))
    adp_t = e * pl.reciprocal(jnp.sum(e, axis=0, keepdims=True), approx=True)
    adp_t = adp_t.astype(jnp.bfloat16)

    # ---- residual layers, fully unrolled inside this single kernel -----------------
    skip = None
    for li, d in enumerate(dilations):
        t_out = t_cur - d * (ksize - 1)
        m2 = B * t_out * N

        # dilated taps: in-kernel static slices of the VMEM-resident activation
        taps = [x[:, j * d:j * d + t_out].reshape(m2, c_res) for j in range(ksize)]

        # gated TCN: filter|gate fused into one wide [k*c_res, 2*c_dil] weight
        wfg = w_fg_ref[li]
        fg = b_fg_ref[li]
        for j in range(ksize):
            fg = fg + _mm(taps[j], wfg[j * c_res:(j + 1) * c_res])
        h = jnp.tanh(fg[:, :c_dil]) * jax.nn.sigmoid(fg[:, c_dil:])       # [m2, c_dil]

        # skip 1x1 conv + accumulation with the time-aligned previous skip (in VMEM)
        s4 = (_mm(h, w_sk_ref[li]) + b_sk_ref[li]).reshape(B, t_out, N, c_skip)
        if skip is not None:
            s4 = s4 + skip[:, skip.shape[1] - t_out:]
        skip = s4

        # graph conv: 2 hops of the adaptive support as batched node-axis matmuls
        bt = B * t_out
        h3 = h.reshape(bt, N, c_dil)
        adp_b = jnp.broadcast_to(adp_t, (bt, N, N))
        h1 = _hop(adp_b, h3)
        h2 = _hop(adp_b, h1)

        wgc = w_gc_ref[li]                                    # rows: [hop0|hop1|hop2]
        gc = (_mm(h, wgc[:c_dil])
              + _mm(h1.reshape(m2, c_dil), wgc[c_dil:2 * c_dil])
              + _mm(h2.reshape(m2, c_dil), wgc[2 * c_dil:])
              + b_gc_ref[li])                                 # [m2, c_res]
        # TODO(synk): F.dropout in multi_gcn omitted (deterministic / eval-mode identity).

        # residual add (residual[..., -t_out:] == the last tap) + training-mode BN
        xo = _bn_rows(gc + taps[ksize - 1], gamma_ref[li], beta_ref[li])
        x = xo.reshape(B, t_out, N, c_res)
        t_cur = t_out

    # ---- Cross_P POI attention ------------------------------------------------------
    # TODO(synk): Cross_P source is not in the provided module; implemented as a
    # single-head POI-category -> node cross attention returning (dist, per-node gate).
    t_f = t_cur
    bt_f = B * t_f
    xs3 = jnp.maximum(skip, 0.0).reshape(bt_f, N, c_skip)     # relu(skip)
    k = jnp.mean(xs3, axis=0)                                 # [N, c_skip] (time+batch mean)
    q_t = (jnp.dot(wq_t_ref[...], poi_vec_t_ref[...],
                   preferred_element_type=f32) + bq_t_ref[...])          # [c_skip, P]
    sc_t = jnp.dot(k, q_t, preferred_element_type=f32) * (c_skip ** -0.5)  # [N, P]
    e = jnp.exp(sc_t - jnp.max(sc_t, axis=0, keepdims=True))
    dist_t = e * pl.reciprocal(jnp.sum(e, axis=0, keepdims=True), approx=True)  # [N, P]
    dist_ref[...] = dist_t.astype(dist_ref.dtype)

    gate = jax.nn.sigmoid(jnp.sum(poi_ref[...] * dist_t, axis=1, keepdims=True))  # [N, 1]
    gate_ref[...] = gate.astype(gate_ref.dtype)

    # ---- gated end-conv head (gate expanded in-kernel, no XLA broadcast) ------------
    xg = (xs3 * (gate + 1.0)).reshape(bt_f * N, c_skip)
    hh = jnp.maximum(_mm(xg, w_e1_ref[...]) + b_e1_ref[...], 0.0)
    y = _mm(hh, w_e2_ref[...]) + b_e2_ref[...]                # [bt_f*N, out_dim]
    y_ref[...] = y.reshape(B, t_f, N, out_dim).astype(y_ref.dtype)


# ----------------------------- XLA wrapper ------------------------------------
def _schedule(blocks, layers, kernel_size):
    """Per-layer dilations and receptive field, exactly as in the torch __init__."""
    rf = 1
    dil = []
    for _ in range(blocks):
        add = kernel_size - 1
        d = 1
        for _ in range(layers):
            dil.append(d)
            rf += add
            add *= 2
            d *= 2
    return tuple(dil), rf


def pgwnet_forward(params, inp, cfg):
    B, in_dim, N, T = inp.shape
    c_res, c_dil = cfg["residual_channels"], cfg["dilation_channels"]
    c_skip, out_dim = cfg["skip_channels"], cfg["out_dim"]
    ksize = cfg["kernel_size"]
    P = params["poi_vec"].shape[0]
    dilations, rf = _schedule(cfg["blocks"], cfg["layers"], ksize)

    t_f = max(T, rf)
    for d in dilations:
        t_f -= d * (ksize - 1)

    # feature-last layout [B, T, N, Cin]; pad channels with zeros (folded into zero
    # rows of w_start so they never perturb the result).
    x_fl = jnp.transpose(inp, (0, 3, 2, 1)).astype(jnp.float32)
    cin_pad = params["w_start"].shape[0]
    if cin_pad > in_dim:
        x_fl = jnp.pad(x_fl, ((0, 0), (0, 0), (0, 0), (0, cin_pad - in_dim)))

    kern = functools.partial(
        _pgwnet_kernel, batch=B, n_nodes=N, t_in=T, rf=rf, ksize=ksize,
        dilations=dilations, c_res=c_res, c_dil=c_dil, c_skip=c_skip, out_dim=out_dim)

    y4, dist_t, gate = pl.pallas_call(
        kern,
        out_shape=(jax.ShapeDtypeStruct((B, t_f, N, out_dim), jnp.float32),
                   jax.ShapeDtypeStruct((N, P), jnp.float32),
                   jax.ShapeDtypeStruct((N, 1), jnp.float32)),
        compiler_params=pltpu.CompilerParams(vmem_limit_bytes=32 * 1024 * 1024),
    )(x_fl,
      params["nodevec2"].T, params["nodevec1"].T,
      params["w_start"], params["b_start"],
      params["w_fg"], params["b_fg"],
      params["w_skip"], params["b_skip"],
      params["w_gconv"], params["b_gconv"],
      params["bn_gamma"], params["bn_beta"],
      params["w_q"].T, params["b_q"].T, params["poi_vec"].T, params["poi"],
      params["w_end1"], params["b_end1"],
      params["w_end2"], params["b_end2"])

    y = jnp.transpose(y4, (0, 3, 2, 1))                       # [B, out_dim, N, t_f]
    dist = dist_t.T                                           # [P, N]
    poi_gate = gate.reshape(1, 1, N, 1)
    return y, dist, poi_gate


# ----------------------------- parameter init ---------------------------------
def init_params(key, cfg):
    N = cfg["num_nodes"]
    c_res, c_dil = cfg["residual_channels"], cfg["dilation_channels"]
    c_skip, c_end = cfg["skip_channels"], cfg["end_channels"]
    in_dim, out_dim = cfg["in_dim"], cfg["out_dim"]
    ksize = cfg["kernel_size"]
    L = cfg["blocks"] * cfg["layers"]
    P, Dp = cfg["num_poi"], cfg["poi_dim"]
    cin_pad = max(8, in_dim)               # fold MXU K-padding of the start conv

    keys = iter(jax.random.split(key, 32))

    def rnd(shape, scale=0.1):
        return scale * jax.random.normal(next(keys), shape, dtype=jnp.float32)

    w_start = jnp.zeros((cin_pad, c_res), jnp.float32).at[:in_dim].set(
        rnd((in_dim, c_res)))

    return {
        # all conv weights stored feature-last as [Cin, Cout] (applied as X @ W)
        "w_start": w_start, "b_start": rnd((1, c_res)),
        "nodevec1": jax.random.normal(next(keys), (N, 10), dtype=jnp.float32),
        "nodevec2": jax.random.normal(next(keys), (10, N), dtype=jnp.float32),
        # gated TCN: rows = [tap0 | tap1 | ...], cols = [filter | gate]
        "w_fg": rnd((L, ksize * c_res, 2 * c_dil)),
        "b_fg": rnd((L, 1, 2 * c_dil)),
        "w_skip": rnd((L, c_dil, c_skip)), "b_skip": rnd((L, 1, c_skip)),
        # gconv MLP (order=2, support_len=1): rows = [hop0 | hop1 | hop2]
        "w_gconv": rnd((L, 3 * c_dil, c_res)), "b_gconv": rnd((L, 1, c_res)),
        "bn_gamma": jnp.ones((L, 1, c_res), jnp.float32),
        "bn_beta": jnp.zeros((L, 1, c_res), jnp.float32),
        "w_end1": rnd((c_skip, c_end)), "b_end1": rnd((1, c_end)),
        "w_end2": rnd((c_end, out_dim)), "b_end2": rnd((1, out_dim)),
        # masks = [mask1, poi, poi_vec]
        "mask1": rnd((N, N)),                          # stored but unused in forward
        "poi": jnp.abs(rnd((N, P), scale=1.0)),        # node x POI-category counts
        "poi_vec": rnd((P, Dp), scale=1.0),            # POI-category embeddings
        "w_q": rnd((Dp, c_skip)), "b_q": rnd((1, c_skip)),   # Cross_P query projection
    }


# ----------------------------- main --------------------------------------------
if __name__ == "__main__":
    cfg = dict(num_nodes=8, in_dim=1, out_dim=4,
               residual_channels=8, dilation_channels=8,
               skip_channels=16, end_channels=32,
               kernel_size=2, blocks=2, layers=2,
               num_poi=8, poi_dim=8)

    key = jax.random.PRNGKey(0)
    kp, kx = jax.random.split(key)
    params = init_params(kp, cfg)

    B, T = 2, 8
    x = jax.random.normal(kx, (B, cfg["in_dim"], cfg["num_nodes"], T), dtype=jnp.float32)

    fwd = jax.jit(functools.partial(pgwnet_forward, cfg=cfg))
    out, dist, poi = fwd(params, x)
    jax.block_until_ready((out, dist, poi))

    # final time length: 8 - (1+2) - (1+2) = 2
    assert out.shape == (B, cfg["out_dim"], cfg["num_nodes"], 2), out.shape
    assert dist.shape == (cfg["num_poi"], cfg["num_nodes"]), dist.shape
    assert poi.shape == (1, 1, cfg["num_nodes"], 1), poi.shape
    print("KERNEL_OK")
</pallas_src>

<mosaic_0001>
module attributes {stable_mosaic.version = 11 : i64} {
  func.func @_pgwnet_kernel(%arg0: memref<2x8x8x8xf32, #tpu.memory_space<vmem>>, %arg1: memref<8x10xf32, #tpu.memory_space<vmem>>, %arg2: memref<10x8xf32, #tpu.memory_space<vmem>>, %arg3: memref<8x8xf32, #tpu.memory_space<vmem>>, %arg4: memref<1x8xf32, #tpu.memory_space<vmem>>, %arg5: memref<4x16x16xf32, #tpu.memory_space<vmem>>, %arg6: memref<4x1x16xf32, #tpu.memory_space<vmem>>, %arg7: memref<4x8x16xf32, #tpu.memory_space<vmem>>, %arg8: memref<4x1x16xf32, #tpu.memory_space<vmem>>, %arg9: memref<4x24x8xf32, #tpu.memory_space<vmem>>, %arg10: memref<4x1x8xf32, #tpu.memory_space<vmem>>, %arg11: memref<4x1x8xf32, #tpu.memory_space<vmem>>, %arg12: memref<4x1x8xf32, #tpu.memory_space<vmem>>, %arg13: memref<16x8xf32, #tpu.memory_space<vmem>>, %arg14: memref<16x1xf32, #tpu.memory_space<vmem>>, %arg15: memref<8x8xf32, #tpu.memory_space<vmem>>, %arg16: memref<8x8xf32, #tpu.memory_space<vmem>>, %arg17: memref<16x32xf32, #tpu.memory_space<vmem>>, %arg18: memref<1x32xf32, #tpu.memory_space<vmem>>, %arg19: memref<32x4xf32, #tpu.memory_space<vmem>>, %arg20: memref<1x4xf32, #tpu.memory_space<vmem>>, %arg21: memref<2x2x8x4xf32, #tpu.memory_space<vmem>>, %arg22: memref<8x8xf32, #tpu.memory_space<vmem>>, %arg23: memref<8x1xf32, #tpu.memory_space<vmem>>) attributes {dimension_semantics = [], scalar_prefetch = 0 : i64, scratch_operands = 0 : i64, tpu.core_type = #tpu.core_type<tc>} {
    %c0 = arith.constant 0 : index
    %c0_0 = arith.constant 0 : index
    %c0_1 = arith.constant 0 : index
    %c0_2 = arith.constant 0 : index
    %0 = vector.load %arg0[%c0, %c0_0, %c0_1, %c0_2] : memref<2x8x8x8xf32, #tpu.memory_space<vmem>>, vector<2x8x8x8xf32>
    %1 = vector.shape_cast %0 : vector<2x8x8x8xf32> to vector<128x8xf32>
    %cst = arith.constant dense<0.000000e+00> : vector<8xf32>
    %2 = vector.multi_reduction <add>, %1, %cst [0] : vector<128x8xf32> to vector<8xf32>
    %3 = vector.shape_cast %2 : vector<8xf32> to vector<1x8xf32>
    %cst_3 = arith.constant 1.280000e+02 : f32
    %4 = vector.broadcast %cst_3 : f32 to vector<1x8xf32>
    %5 = arith.divf %3, %4 : vector<1x8xf32>
    %6 = vector.broadcast %5 : vector<1x8xf32> to vector<128x8xf32>
    %7 = arith.subf %1, %6 : vector<128x8xf32>
    %8 = arith.mulf %7, %7 : vector<128x8xf32>
    %cst_4 = arith.constant dense<0.000000e+00> : vector<8xf32>
    %9 = vector.multi_reduction <add>, %8, %cst_4 [0] : vector<128x8xf32> to vector<8xf32>
    %10 = vector.shape_cast %9 : vector<8xf32> to vector<1x8xf32>
    %cst_5 = arith.constant 1.280000e+02 : f32
    %11 = vector.broadcast %cst_5 : f32 to vector<1x8xf32>
    %12 = arith.divf %10, %11 : vector<1x8xf32>
    %cst_6 = arith.constant 9.99999974E-6 : f32
    %13 = vector.broadcast %cst_6 : f32 to vector<1x8xf32>
    %14 = arith.addf %12, %13 : vector<1x8xf32>
    %15 = math.rsqrt %14 : vector<1x8xf32>
    %16 = vector.broadcast %15 : vector<1x8xf32> to vector<128x8xf32>
    %17 = arith.mulf %7, %16 : vector<128x8xf32>
    %c0_7 = arith.constant 0 : index
    %c0_8 = arith.constant 0 : index
    %18 = vector.load %arg3[%c0_7, %c0_8] : memref<8x8xf32, #tpu.memory_space<vmem>>, vector<8x8xf32>
    %19 = arith.truncf %17 : vector<128x8xf32> to vector<128x8xbf16>
    %20 = arith.truncf %18 : vector<8x8xf32> to vector<8x8xbf16>
    %cst_9 = arith.constant dense<0.000000e+00> : vector<128x8xf32>
    %21 = tpu.matmul %19, %20, %cst_9 {dimension_numbers = #tpu.dot_dimension_numbers<[1], [0], [0], [1], [0, 0, 1, 1], [], []>} : vector<128x8xbf16>, vector<8x8xbf16>, vector<128x8xf32> -> vector<128x8xf32>
    %c0_10 = arith.constant 0 : index
    %c0_11 = arith.constant 0 : index
    %22 = vector.load %arg4[%c0_10, %c0_11] : memref<1x8xf32, #tpu.memory_space<vmem>>, vector<1x8xf32>
    %23 = vector.broadcast %22 : vector<1x8xf32> to vector<128x8xf32>
    %24 = arith.addf %21, %23 : vector<128x8xf32>
    %25 = vector.shape_cast %24 : vector<128x8xf32> to vector<2x8x8x8xf32>
    %c0_12 = arith.constant 0 : index
    %c0_13 = arith.constant 0 : index
    %26 = vector.load %arg1[%c0_12, %c0_13] : memref<8x10xf32, #tpu.memory_space<vmem>>, vector<8x10xf32>
    %c0_14 = arith.constant 0 : index
    %c0_15 = arith.constant 0 : index
    %27 = vector.load %arg2[%c0_14, %c0_15] : memref<10x8xf32, #tpu.memory_space<vmem>>, vector<10x8xf32>
    %cst_16 = arith.constant dense<0.000000e+00> : vector<8x8xf32>
    %28 = tpu.matmul %26, %27, %cst_16 {dimension_numbers = #tpu.dot_dimension_numbers<[1], [0], [0], [1], [0, 0, 1, 1], [], []>} : vector<8x10xf32>, vector<10x8xf32>, vector<8x8xf32> -> vector<8x8xf32>
    %cst_17 = arith.constant 0.000000e+00 : f32
    %29 = vector.broadcast %cst_17 : f32 to vector<8x8xf32>
    %30 = arith.maximumf %28, %29 : vector<8x8xf32>
    %cst_18 = arith.constant dense<0xFF800000> : vector<8xf32>
    %31 = vector.multi_reduction <maximumf>, %30, %cst_18 [0] : vector<8x8xf32> to vector<8xf32>
    %32 = vector.shape_cast %31 : vector<8xf32> to vector<1x8xf32>
    %33 = vector.broadcast %32 : vector<1x8xf32> to vector<8x8xf32>
    %34 = arith.subf %30, %33 : vector<8x8xf32>
    %35 = math.exp %34 : vector<8x8xf32>
    %cst_19 = arith.constant dense<0.000000e+00> : vector<8xf32>
    %36 = vector.multi_reduction <add>, %35, %cst_19 [0] : vector<8x8xf32> to vector<8xf32>
    %37 = vector.shape_cast %36 : vector<8xf32> to vector<1x8xf32>
    %38 = tpu.reciprocal %37 {approx = true} : vector<1x8xf32> -> vector<1x8xf32>
    %39 = vector.broadcast %38 : vector<1x8xf32> to vector<8x8xf32>
    %40 = arith.mulf %35, %39 : vector<8x8xf32>
    %41 = arith.truncf %40 : vector<8x8xf32> to vector<8x8xbf16>
    %42 = vector.extract_strided_slice %25 {offsets = [0, 0, 0, 0], sizes = [2, 7, 8, 8], strides = [1, 1, 1, 1]} : vector<2x8x8x8xf32> to vector<2x7x8x8xf32>
    %43 = vector.shape_cast %42 : vector<2x7x8x8xf32> to vector<112x8xf32>
    %44 = vector.extract_strided_slice %25 {offsets = [0, 1, 0, 0], sizes = [2, 7, 8, 8], strides = [1, 1, 1, 1]} : vector<2x8x8x8xf32> to vector<2x7x8x8xf32>
    %45 = vector.shape_cast %44 : vector<2x7x8x8xf32> to vector<112x8xf32>
    %c0_20 = arith.constant 0 : index
    %c0_21 = arith.constant 0 : index
    %c0_22 = arith.constant 0 : index
    %46 = vector.load %arg5[%c0_20, %c0_21, %c0_22] : memref<4x16x16xf32, #tpu.memory_space<vmem>>, vector<1x16x16xf32>
    %47 = vector.shape_cast %46 : vector<1x16x16xf32> to vector<16x16xf32>
    %c0_23 = arith.constant 0 : index
    %c0_24 = arith.constant 0 : index
    %c0_25 = arith.constant 0 : index
    %48 = vector.load %arg6[%c0_23, %c0_24, %c0_25] : memref<4x1x16xf32, #tpu.memory_space<vmem>>, vector<1x1x16xf32>
    %49 = vector.shape_cast %48 : vector<1x1x16xf32> to vector<1x16xf32>
    %50 = vector.extract_strided_slice %47 {offsets = [0, 0], sizes = [8, 16], strides = [1, 1]} : vector<16x16xf32> to vector<8x16xf32>
    %51 = arith.truncf %43 : vector<112x8xf32> to vector<112x8xbf16>
    %52 = arith.truncf %50 : vector<8x16xf32> to vector<8x16xbf16>
    %cst_26 = arith.constant dense<0.000000e+00> : vector<112x16xf32>
    %53 = tpu.matmul %51, %52, %cst_26 {dimension_numbers = #tpu.dot_dimension_numbers<[1], [0], [0], [1], [0, 0, 1, 1], [], []>} : vector<112x8xbf16>, vector<8x16xbf16>, vector<112x16xf32> -> vector<112x16xf32>
    %54 = vector.broadcast %49 : vector<1x16xf32> to vector<112x16xf32>
    %55 = arith.addf %54, %53 : vector<112x16xf32>
    %56 = vector.extract_strided_slice %47 {offsets = [8, 0], sizes = [8, 16], strides = [1, 1]} : vector<16x16xf32> to vector<8x16xf32>
    %57 = arith.truncf %45 : vector<112x8xf32> to vector<112x8xbf16>
    %58 = arith.truncf %56 : vector<8x16xf32> to vector<8x16xbf16>
    %cst_27 = arith.constant dense<0.000000e+00> : vector<112x16xf32>
    %59 = tpu.matmul %57, %58, %cst_27 {dimension_numbers = #tpu.dot_dimension_numbers<[1], [0], [0], [1], [0, 0, 1, 1], [], []>} : vector<112x8xbf16>, vector<8x16xbf16>, vector<112x16xf32> -> vector<112x16xf32>
    %60 = arith.addf %55, %59 : vector<112x16xf32>
    %61 = vector.extract_strided_slice %60 {offsets = [0, 0], sizes = [112, 8], strides = [1, 1]} : vector<112x16xf32> to vector<112x8xf32>
    %62 = math.tanh %61 : vector<112x8xf32>
    %63 = vector.extract_strided_slice %60 {offsets = [0, 8], sizes = [112, 8], strides = [1, 1]} : vector<112x16xf32> to vector<112x8xf32>
    %64 = arith.negf %63 : vector<112x8xf32>
    %65 = math.exp %64 : vector<112x8xf32>
    %cst_28 = arith.constant 1.000000e+00 : f32
    %66 = vector.broadcast %cst_28 : f32 to vector<112x8xf32>
    %67 = arith.addf %66, %65 : vector<112x8xf32>
    %68 = arith.divf %66, %67 : vector<112x8xf32>
    %69 = arith.mulf %62, %68 : vector<112x8xf32>
    %c0_29 = arith.constant 0 : index
    %c0_30 = arith.constant 0 : index
    %c0_31 = arith.constant 0 : index
    %70 = vector.load %arg7[%c0_29, %c0_30, %c0_31] : memref<4x8x16xf32, #tpu.memory_space<vmem>>, vector<1x8x16xf32>
    %71 = vector.shape_cast %70 : vector<1x8x16xf32> to vector<8x16xf32>
    %72 = arith.truncf %69 : vector<112x8xf32> to vector<112x8xbf16>
    %73 = arith.truncf %71 : vector<8x16xf32> to vector<8x16xbf16>
    %cst_32 = arith.constant dense<0.000000e+00> : vector<112x16xf32>
    %74 = tpu.matmul %72, %73, %cst_32 {dimension_numbers = #tpu.dot_dimension_numbers<[1], [0], [0], [1], [0, 0, 1, 1], [], []>} : vector<112x8xbf16>, vector<8x16xbf16>, vector<112x16xf32> -> vector<112x16xf32>
    %c0_33 = arith.constant 0 : index
    %c0_34 = arith.constant 0 : index
    %c0_35 = arith.constant 0 : index
    %75 = vector.load %arg8[%c0_33, %c0_34, %c0_35] : memref<4x1x16xf32, #tpu.memory_space<vmem>>, vector<1x1x16xf32>
    %76 = vector.shape_cast %75 : vector<1x1x16xf32> to vector<1x16xf32>
    %77 = vector.broadcast %76 : vector<1x16xf32> to vector<112x16xf32>
    %78 = arith.addf %74, %77 : vector<112x16xf32>
    %79 = vector.shape_cast %78 : vector<112x16xf32> to vector<2x7x8x16xf32>
    %80 = vector.shape_cast %69 : vector<112x8xf32> to vector<14x8x8xf32>
    %81 = vector.shape_cast %41 : vector<8x8xbf16> to vector<1x8x8xbf16>
    %82 = vector.broadcast %81 : vector<1x8x8xbf16> to vector<14x8x8xbf16>
    %83 = arith.truncf %80 : vector<14x8x8xf32> to vector<14x8x8xbf16>
    %cst_36 = arith.constant dense<0.000000e+00> : vector<14x8x8xf32>
    %84 = tpu.matmul %82, %83, %cst_36 {dimension_numbers = #tpu.dot_dimension_numbers<[2], [1], [1], [2], [0, 0, 0, 1, 1, 2], [0], [0]>} : vector<14x8x8xbf16>, vector<14x8x8xbf16>, vector<14x8x8xf32> -> vector<14x8x8xf32>
    %85 = arith.truncf %84 : vector<14x8x8xf32> to vector<14x8x8xbf16>
    %cst_37 = arith.constant dense<0.000000e+00> : vector<14x8x8xf32>
    %86 = tpu.matmul %82, %85, %cst_37 {dimension_numbers = #tpu.dot_dimension_numbers<[2], [1], [1], [2], [0, 0, 0, 1, 1, 2], [0], [0]>} : vector<14x8x8xbf16>, vector<14x8x8xbf16>, vector<14x8x8xf32> -> vector<14x8x8xf32>
    %c0_38 = arith.constant 0 : index
    %c0_39 = arith.constant 0 : index
    %c0_40 = arith.constant 0 : index
    %87 = vector.load %arg9[%c0_38, %c0_39, %c0_40] : memref<4x24x8xf32, #tpu.memory_space<vmem>>, vector<1x24x8xf32>
    %88 = vector.shape_cast %87 : vector<1x24x8xf32> to vector<24x8xf32>
    %89 = vector.extract_strided_slice %88 {offsets = [0, 0], sizes = [8, 8], strides = [1, 1]} : vector<24x8xf32> to vector<8x8xf32>
    %90 = arith.truncf %69 : vector<112x8xf32> to vector<112x8xbf16>
    %91 = arith.truncf %89 : vector<8x8xf32> to vector<8x8xbf16>
    %cst_41 = arith.constant dense<0.000000e+00> : vector<112x8xf32>
    %92 = tpu.matmul %90, %91, %cst_41 {dimension_numbers = #tpu.dot_dimension_numbers<[1], [0], [0], [1], [0, 0, 1, 1], [], []>} : vector<112x8xbf16>, vector<8x8xbf16>, vector<112x8xf32> -> vector<112x8xf32>
    %93 = vector.shape_cast %84 : vector<14x8x8xf32> to vector<112x8xf32>
    %94 = vector.extract_strided_slice %88 {offsets = [8, 0], sizes = [8, 8], strides = [1, 1]} : vector<24x8xf32> to vector<8x8xf32>
    %95 = arith.truncf %93 : vector<112x8xf32> to vector<112x8xbf16>
    %96 = arith.truncf %94 : vector<8x8xf32> to vector<8x8xbf16>
    %cst_42 = arith.constant dense<0.000000e+00> : vector<112x8xf32>
    %97 = tpu.matmul %95, %96, %cst_42 {dimension_numbers = #tpu.dot_dimension_numbers<[1], [0], [0], [1], [0, 0, 1, 1], [], []>} : vector<112x8xbf16>, vector<8x8xbf16>, vector<112x8xf32> -> vector<112x8xf32>
    %98 = arith.addf %92, %97 : vector<112x8xf32>
    %99 = vector.shape_cast %86 : vector<14x8x8xf32> to vector<112x8xf32>
    %100 = vector.extract_strided_slice %88 {offsets = [16, 0], sizes = [8, 8], strides = [1, 1]} : vector<24x8xf32> to vector<8x8xf32>
    %101 = arith.truncf %99 : vector<112x8xf32> to vector<112x8xbf16>
    %102 = arith.truncf %100 : vector<8x8xf32> to vector<8x8xbf16>
    %cst_43 = arith.constant dense<0.000000e+00> : vector<112x8xf32>
    %103 = tpu.matmul %101, %102, %cst_43 {dimension_numbers = #tpu.dot_dimension_numbers<[1], [0], [0], [1], [0, 0, 1, 1], [], []>} : vector<112x8xbf16>, vector<8x8xbf16>, vector<112x8xf32> -> vector<112x8xf32>
    %104 = arith.addf %98, %103 : vector<112x8xf32>
    %c0_44 = arith.constant 0 : index
    %c0_45 = arith.constant 0 : index
    %c0_46 = arith.constant 0 : index
    %105 = vector.load %arg10[%c0_44, %c0_45, %c0_46] : memref<4x1x8xf32, #tpu.memory_space<vmem>>, vector<1x1x8xf32>
    %106 = vector.shape_cast %105 : vector<1x1x8xf32> to vector<1x8xf32>
    %107 = vector.broadcast %106 : vector<1x8xf32> to vector<112x8xf32>
    %108 = arith.addf %104, %107 : vector<112x8xf32>
    %109 = arith.addf %108, %45 : vector<112x8xf32>
    %c0_47 = arith.constant 0 : index
    %c0_48 = arith.constant 0 : index
    %c0_49 = arith.constant 0 : index
    %110 = vector.load %arg11[%c0_47, %c0_48, %c0_49] : memref<4x1x8xf32, #tpu.memory_space<vmem>>, vector<1x1x8xf32>
    %111 = vector.shape_cast %110 : vector<1x1x8xf32> to vector<1x8xf32>
    %c0_50 = arith.constant 0 : index
    %c0_51 = arith.constant 0 : index
    %c0_52 = arith.constant 0 : index
    %112 = vector.load %arg12[%c0_50, %c0_51, %c0_52] : memref<4x1x8xf32, #tpu.memory_space<vmem>>, vector<1x1x8xf32>
    %113 = vector.shape_cast %112 : vector<1x1x8xf32> to vector<1x8xf32>
    %cst_53 = arith.constant dense<0.000000e+00> : vector<8xf32>
    %114 = vector.multi_reduction <add>, %109, %cst_53 [0] : vector<112x8xf32> to vector<8xf32>
    %115 = vector.shape_cast %114 : vector<8xf32> to vector<1x8xf32>
    %cst_54 = arith.constant 1.120000e+02 : f32
    %116 = vector.broadcast %cst_54 : f32 to vector<1x8xf32>
    %117 = arith.divf %115, %116 : vector<1x8xf32>
    %118 = vector.broadcast %117 : vector<1x8xf32> to vector<112x8xf32>
    %119 = arith.subf %109, %118 : vector<112x8xf32>
    %120 = arith.mulf %119, %119 : vector<112x8xf32>
    %cst_55 = arith.constant dense<0.000000e+00> : vector<8xf32>
    %121 = vector.multi_reduction <add>, %120, %cst_55 [0] : vector<112x8xf32> to vector<8xf32>
    %122 = vector.shape_cast %121 : vector<8xf32> to vector<1x8xf32>
    %cst_56 = arith.constant 1.120000e+02 : f32
    %123 = vector.broadcast %cst_56 : f32 to vector<1x8xf32>
    %124 = arith.divf %122, %123 : vector<1x8xf32>
    %cst_57 = arith.constant 9.99999974E-6 : f32
    %125 = vector.broadcast %cst_57 : f32 to vector<1x8xf32>
    %126 = arith.addf %124, %125 : vector<1x8xf32>
    %127 = math.rsqrt %126 : vector<1x8xf32>
    %128 = vector.broadcast %127 : vector<1x8xf32> to vector<112x8xf32>
    %129 = arith.mulf %119, %128 : vector<112x8xf32>
    %130 = vector.broadcast %111 : vector<1x8xf32> to vector<112x8xf32>
    %131 = arith.mulf %129, %130 : vector<112x8xf32>
    %132 = vector.broadcast %113 : vector<1x8xf32> to vector<112x8xf32>
    %133 = arith.addf %131, %132 : vector<112x8xf32>
    %134 = vector.shape_cast %133 : vector<112x8xf32> to vector<2x7x8x8xf32>
    %135 = vector.extract_strided_slice %134 {offsets = [0, 0, 0, 0], sizes = [2, 5, 8, 8], strides = [1, 1, 1, 1]} : vector<2x7x8x8xf32> to vector<2x5x8x8xf32>
    %136 = vector.shape_cast %135 : vector<2x5x8x8xf32> to vector<80x8xf32>
    %137 = vector.extract_strided_slice %134 {offsets = [0, 2, 0, 0], sizes = [2, 5, 8, 8], strides = [1, 1, 1, 1]} : vector<2x7x8x8xf32> to vector<2x5x8x8xf32>
    %138 = vector.shape_cast %137 : vector<2x5x8x8xf32> to vector<80x8xf32>
    %c1 = arith.constant 1 : index
    %c0_58 = arith.constant 0 : index
    %c0_59 = arith.constant 0 : index
    %139 = vector.load %arg5[%c1, %c0_58, %c0_59] : memref<4x16x16xf32, #tpu.memory_space<vmem>>, vector<1x16x16xf32>
    %140 = vector.shape_cast %139 : vector<1x16x16xf32> to vector<16x16xf32>
    %c1_60 = arith.constant 1 : index
    %c0_61 = arith.constant 0 : index
    %c0_62 = arith.constant 0 : index
    %141 = vector.load %arg6[%c1_60, %c0_61, %c0_62] : memref<4x1x16xf32, #tpu.memory_space<vmem>>, vector<1x1x16xf32>
    %142 = vector.shape_cast %141 : vector<1x1x16xf32> to vector<1x16xf32>
    %143 = vector.extract_strided_slice %140 {offsets = [0, 0], sizes = [8, 16], strides = [1, 1]} : vector<16x16xf32> to vector<8x16xf32>
    %144 = arith.truncf %136 : vector<80x8xf32> to vector<80x8xbf16>
    %145 = arith.truncf %143 : vector<8x16xf32> to vector<8x16xbf16>
    %cst_63 = arith.constant dense<0.000000e+00> : vector<80x16xf32>
    %146 = tpu.matmul %144, %145, %cst_63 {dimension_numbers = #tpu.dot_dimension_numbers<[1], [0], [0], [1], [0, 0, 1, 1], [], []>} : vector<80x8xbf16>, vector<8x16xbf16>, vector<80x16xf32> -> vector<80x16xf32>
    %147 = vector.broadcast %142 : vector<1x16xf32> to vector<80x16xf32>
    %148 = arith.addf %147, %146 : vector<80x16xf32>
    %149 = vector.extract_strided_slice %140 {offsets = [8, 0], sizes = [8, 16], strides = [1, 1]} : vector<16x16xf32> to vector<8x16xf32>
    %150 = arith.truncf %138 : vector<80x8xf32> to vector<80x8xbf16>
    %151 = arith.truncf %149 : vector<8x16xf32> to vector<8x16xbf16>
    %cst_64 = arith.constant dense<0.000000e+00> : vector<80x16xf32>
    %152 = tpu.matmul %150, %151, %cst_64 {dimension_numbers = #tpu.dot_dimension_numbers<[1], [0], [0], [1], [0, 0, 1, 1], [], []>} : vector<80x8xbf16>, vector<8x16xbf16>, vector<80x16xf32> -> vector<80x16xf32>
    %153 = arith.addf %148, %152 : vector<80x16xf32>
    %154 = vector.extract_strided_slice %153 {offsets = [0, 0], sizes = [80, 8], strides = [1, 1]} : vector<80x16xf32> to vector<80x8xf32>
    %155 = math.tanh %154 : vector<80x8xf32>
    %156 = vector.extract_strided_slice %153 {offsets = [0, 8], sizes = [80, 8], strides = [1, 1]} : vector<80x16xf32> to vector<80x8xf32>
    %157 = arith.negf %156 : vector<80x8xf32>
    %158 = math.exp %157 : vector<80x8xf32>
    %cst_65 = arith.constant 1.000000e+00 : f32
    %159 = vector.broadcast %cst_65 : f32 to vector<80x8xf32>
    %160 = arith.addf %159, %158 : vector<80x8xf32>
    %161 = arith.divf %159, %160 : vector<80x8xf32>
    %162 = arith.mulf %155, %161 : vector<80x8xf32>
    %c1_66 = arith.constant 1 : index
    %c0_67 = arith.constant 0 : index
    %c0_68 = arith.constant 0 : index
    %163 = vector.load %arg7[%c1_66, %c0_67, %c0_68] : memref<4x8x16xf32, #tpu.memory_space<vmem>>, vector<1x8x16xf32>
    %164 = vector.shape_cast %163 : vector<1x8x16xf32> to vector<8x16xf32>
    %165 = arith.truncf %162 : vector<80x8xf32> to vector<80x8xbf16>
    %166 = arith.truncf %164 : vector<8x16xf32> to vector<8x16xbf16>
    %cst_69 = arith.constant dense<0.000000e+00> : vector<80x16xf32>
    %167 = tpu.matmul %165, %166, %cst_69 {dimension_numbers = #tpu.dot_dimension_numbers<[1], [0], [0], [1], [0, 0, 1, 1], [], []>} : vector<80x8xbf16>, vector<8x16xbf16>, vector<80x16xf32> -> vector<80x16xf32>
    %c1_70 = arith.constant 1 : index
    %c0_71 = arith.constant 0 : index
    %c0_72 = arith.constant 0 : index
    %168 = vector.load %arg8[%c1_70, %c0_71, %c0_72] : memref<4x1x16xf32, #tpu.memory_space<vmem>>, vector<1x1x16xf32>
    %169 = vector.shape_cast %168 : vector<1x1x16xf32> to vector<1x16xf32>
    %170 = vector.broadcast %169 : vector<1x16xf32> to vector<80x16xf32>
    %171 = arith.addf %167, %170 : vector<80x16xf32>
    %172 = vector.shape_cast %171 : vector<80x16xf32> to vector<2x5x8x16xf32>
    %173 = vector.extract_strided_slice %79 {offsets = [0, 2, 0, 0], sizes = [2, 5, 8, 16], strides = [1, 1, 1, 1]} : vector<2x7x8x16xf32> to vector<2x5x8x16xf32>
    %174 = arith.addf %172, %173 : vector<2x5x8x16xf32>
    %175 = vector.shape_cast %162 : vector<80x8xf32> to vector<10x8x8xf32>
    %176 = vector.shape_cast %41 : vector<8x8xbf16> to vector<1x8x8xbf16>
    %177 = vector.broadcast %176 : vector<1x8x8xbf16> to vector<10x8x8xbf16>
    %178 = arith.truncf %175 : vector<10x8x8xf32> to vector<10x8x8xbf16>
    %cst_73 = arith.constant dense<0.000000e+00> : vector<10x8x8xf32>
    %179 = tpu.matmul %177, %178, %cst_73 {dimension_numbers = #tpu.dot_dimension_numbers<[2], [1], [1], [2], [0, 0, 0, 1, 1, 2], [0], [0]>} : vector<10x8x8xbf16>, vector<10x8x8xbf16>, vector<10x8x8xf32> -> vector<10x8x8xf32>
    %180 = arith.truncf %179 : vector<10x8x8xf32> to vector<10x8x8xbf16>
    %cst_74 = arith.constant dense<0.000000e+00> : vector<10x8x8xf32>
    %181 = tpu.matmul %177, %180, %cst_74 {dimension_numbers = #tpu.dot_dimension_numbers<[2], [1], [1], [2], [0, 0, 0, 1, 1, 2], [0], [0]>} : vector<10x8x8xbf16>, vector<10x8x8xbf16>, vector<10x8x8xf32> -> vector<10x8x8xf32>
    %c1_75 = arith.constant 1 : index
    %c0_76 = arith.constant 0 : index
    %c0_77 = arith.constant 0 : index
    %182 = vector.load %arg9[%c1_75, %c0_76, %c0_77] : memref<4x24x8xf32, #tpu.memory_space<vmem>>, vector<1x24x8xf32>
    %183 = vector.shape_cast %182 : vector<1x24x8xf32> to vector<24x8xf32>
    %184 = vector.extract_strided_slice %183 {offsets = [0, 0], sizes = [8, 8], strides = [1, 1]} : vector<24x8xf32> to vector<8x8xf32>
    %185 = arith.truncf %162 : vector<80x8xf32> to vector<80x8xbf16>
    %186 = arith.truncf %184 : vector<8x8xf32> to vector<8x8xbf16>
    %cst_78 = arith.constant dense<0.000000e+00> : vector<80x8xf32>
    %187 = tpu.matmul %185, %186, %cst_78 {dimension_numbers = #tpu.dot_dimension_numbers<[1], [0], [0], [1], [0, 0, 1, 1], [], []>} : vector<80x8xbf16>, vector<8x8xbf16>, vector<80x8xf32> -> vector<80x8xf32>
    %188 = vector.shape_cast %179 : vector<10x8x8xf32> to vector<80x8xf32>
    %189 = vector.extract_strided_slice %183 {offsets = [8, 0], sizes = [8, 8], strides = [1, 1]} : vector<24x8xf32> to vector<8x8xf32>
    %190 = arith.truncf %188 : vector<80x8xf32> to vector<80x8xbf16>
    %191 = arith.truncf %189 : vector<8x8xf32> to vector<8x8xbf16>
    %cst_79 = arith.constant dense<0.000000e+00> : vector<80x8xf32>
    %192 = tpu.matmul %190, %191, %cst_79 {dimension_numbers = #tpu.dot_dimension_numbers<[1], [0], [0], [1], [0, 0, 1, 1], [], []>} : vector<80x8xbf16>, vector<8x8xbf16>, vector<80x8xf32> -> vector<80x8xf32>
    %193 = arith.addf %187, %192 : vector<80x8xf32>
    %194 = vector.shape_cast %181 : vector<10x8x8xf32> to vector<80x8xf32>
    %195 = vector.extract_strided_slice %183 {offsets = [16, 0], sizes = [8, 8], strides = [1, 1]} : vector<24x8xf32> to vector<8x8xf32>
    %196 = arith.truncf %194 : vector<80x8xf32> to vector<80x8xbf16>
    %197 = arith.truncf %195 : vector<8x8xf32> to vector<8x8xbf16>
    %cst_80 = arith.constant dense<0.000000e+00> : vector<80x8xf32>
    %198 = tpu.matmul %196, %197, %cst_80 {dimension_numbers = #tpu.dot_dimension_numbers<[1], [0], [0], [1], [0, 0, 1, 1], [], []>} : vector<80x8xbf16>, vector<8x8xbf16>, vector<80x8xf32> -> vector<80x8xf32>
    %199 = arith.addf %193, %198 : vector<80x8xf32>
    %c1_81 = arith.constant 1 : index
    %c0_82 = arith.constant 0 : index
    %c0_83 = arith.constant 0 : index
    %200 = vector.load %arg10[%c1_81, %c0_82, %c0_83] : memref<4x1x8xf32, #tpu.memory_space<vmem>>, vector<1x1x8xf32>
    %201 = vector.shape_cast %200 : vector<1x1x8xf32> to vector<1x8xf32>
    %202 = vector.broadcast %201 : vector<1x8xf32> to vector<80x8xf32>
    %203 = arith.addf %199, %202 : vector<80x8xf32>
    %204 = arith.addf %203, %138 : vector<80x8xf32>
    %c1_84 = arith.constant 1 : index
    %c0_85 = arith.constant 0 : index
    %c0_86 = arith.constant 0 : index
    %205 = vector.load %arg11[%c1_84, %c0_85, %c0_86] : memref<4x1x8xf32, #tpu.memory_space<vmem>>, vector<1x1x8xf32>
    %206 = vector.shape_cast %205 : vector<1x1x8xf32> to vector<1x8xf32>
    %c1_87 = arith.constant 1 : index
    %c0_88 = arith.constant 0 : index
    %c0_89 = arith.constant 0 : index
    %207 = vector.load %arg12[%c1_87, %c0_88, %c0_89] : memref<4x1x8xf32, #tpu.memory_space<vmem>>, vector<1x1x8xf32>
    %208 = vector.shape_cast %207 : vector<1x1x8xf32> to vector<1x8xf32>
    %cst_90 = arith.constant dense<0.000000e+00> : vector<8xf32>
    %209 = vector.multi_reduction <add>, %204, %cst_90 [0] : vector<80x8xf32> to vector<8xf32>
    %210 = vector.shape_cast %209 : vector<8xf32> to vector<1x8xf32>
    %cst_91 = arith.constant 8.000000e+01 : f32
    %211 = vector.broadcast %cst_91 : f32 to vector<1x8xf32>
    %212 = arith.divf %210, %211 : vector<1x8xf32>
    %213 = vector.broadcast %212 : vector<1x8xf32> to vector<80x8xf32>
    %214 = arith.subf %204, %213 : vector<80x8xf32>
    %215 = arith.mulf %214, %214 : vector<80x8xf32>
    %cst_92 = arith.constant dense<0.000000e+00> : vector<8xf32>
    %216 = vector.multi_reduction <add>, %215, %cst_92 [0] : vector<80x8xf32> to vector<8xf32>
    %217 = vector.shape_cast %216 : vector<8xf32> to vector<1x8xf32>
    %cst_93 = arith.constant 8.000000e+01 : f32
    %218 = vector.broadcast %cst_93 : f32 to vector<1x8xf32>
    %219 = arith.divf %217, %218 : vector<1x8xf32>
    %cst_94 = arith.constant 9.99999974E-6 : f32
    %220 = vector.broadcast %cst_94 : f32 to vector<1x8xf32>
    %221 = arith.addf %219, %220 : vector<1x8xf32>
    %222 = math.rsqrt %221 : vector<1x8xf32>
    %223 = vector.broadcast %222 : vector<1x8xf32> to vector<80x8xf32>
    %224 = arith.mulf %214, %223 : vector<80x8xf32>
    %225 = vector.broadcast %206 : vector<1x8xf32> to vector<80x8xf32>
    %226 = arith.mulf %224, %225 : vector<80x8xf32>
    %227 = vector.broadcast %208 : vector<1x8xf32> to vector<80x8xf32>
    %228 = arith.addf %226, %227 : vector<80x8xf32>
    %229 = vector.shape_cast %228 : vector<80x8xf32> to vector<2x5x8x8xf32>
    %230 = vector.extract_strided_slice %229 {offsets = [0, 0, 0, 0], sizes = [2, 4, 8, 8], strides = [1, 1, 1, 1]} : vector<2x5x8x8xf32> to vector<2x4x8x8xf32>
    %231 = vector.shape_cast %230 : vector<2x4x8x8xf32> to vector<64x8xf32>
    %232 = vector.extract_strided_slice %229 {offsets = [0, 1, 0, 0], sizes = [2, 4, 8, 8], strides = [1, 1, 1, 1]} : vector<2x5x8x8xf32> to vector<2x4x8x8xf32>
    %233 = vector.shape_cast %232 : vector<2x4x8x8xf32> to vector<64x8xf32>
    %c2 = arith.constant 2 : index
    %c0_95 = arith.constant 0 : index
    %c0_96 = arith.constant 0 : index
    %234 = vector.load %arg5[%c2, %c0_95, %c0_96] : memref<4x16x16xf32, #tpu.memory_space<vmem>>, vector<1x16x16xf32>
    %235 = vector.shape_cast %234 : vector<1x16x16xf32> to vector<16x16xf32>
    %c2_97 = arith.constant 2 : index
    %c0_98 = arith.constant 0 : index
    %c0_99 = arith.constant 0 : index
    %236 = vector.load %arg6[%c2_97, %c0_98, %c0_99] : memref<4x1x16xf32, #tpu.memory_space<vmem>>, vector<1x1x16xf32>
    %237 = vector.shape_cast %236 : vector<1x1x16xf32> to vector<1x16xf32>
    %238 = vector.extract_strided_slice %235 {offsets = [0, 0], sizes = [8, 16], strides = [1, 1]} : vector<16x16xf32> to vector<8x16xf32>
    %239 = arith.truncf %231 : vector<64x8xf32> to vector<64x8xbf16>
    %240 = arith.truncf %238 : vector<8x16xf32> to vector<8x16xbf16>
    %cst_100 = arith.constant dense<0.000000e+00> : vector<64x16xf32>
    %241 = tpu.matmul %239, %240, %cst_100 {dimension_numbers = #tpu.dot_dimension_numbers<[1], [0], [0], [1], [0, 0, 1, 1], [], []>} : vector<64x8xbf16>, vector<8x16xbf16>, vector<64x16xf32> -> vector<64x16xf32>
    %242 = vector.broadcast %237 : vector<1x16xf32> to vector<64x16xf32>
    %243 = arith.addf %242, %241 : vector<64x16xf32>
    %244 = vector.extract_strided_slice %235 {offsets = [8, 0], sizes = [8, 16], strides = [1, 1]} : vector<16x16xf32> to vector<8x16xf32>
    %245 = arith.truncf %233 : vector<64x8xf32> to vector<64x8xbf16>
    %246 = arith.truncf %244 : vector<8x16xf32> to vector<8x16xbf16>
    %cst_101 = arith.constant dense<0.000000e+00> : vector<64x16xf32>
    %247 = tpu.matmul %245, %246, %cst_101 {dimension_numbers = #tpu.dot_dimension_numbers<[1], [0], [0], [1], [0, 0, 1, 1], [], []>} : vector<64x8xbf16>, vector<8x16xbf16>, vector<64x16xf32> -> vector<64x16xf32>
    %248 = arith.addf %243, %247 : vector<64x16xf32>
    %249 = vector.extract_strided_slice %248 {offsets = [0, 0], sizes = [64, 8], strides = [1, 1]} : vector<64x16xf32> to vector<64x8xf32>
    %250 = math.tanh %249 : vector<64x8xf32>
    %251 = vector.extract_strided_slice %248 {offsets = [0, 8], sizes = [64, 8], strides = [1, 1]} : vector<64x16xf32> to vector<64x8xf32>
    %252 = arith.negf %251 : vector<64x8xf32>
    %253 = math.exp %252 : vector<64x8xf32>
    %cst_102 = arith.constant 1.000000e+00 : f32
    %254 = vector.broadcast %cst_102 : f32 to vector<64x8xf32>
    %255 = arith.addf %254, %253 : vector<64x8xf32>
    %256 = arith.divf %254, %255 : vector<64x8xf32>
    %257 = arith.mulf %250, %256 : vector<64x8xf32>
    %c2_103 = arith.constant 2 : index
    %c0_104 = arith.constant 0 : index
    %c0_105 = arith.constant 0 : index
    %258 = vector.load %arg7[%c2_103, %c0_104, %c0_105] : memref<4x8x16xf32, #tpu.memory_space<vmem>>, vector<1x8x16xf32>
    %259 = vector.shape_cast %258 : vector<1x8x16xf32> to vector<8x16xf32>
    %260 = arith.truncf %257 : vector<64x8xf32> to vector<64x8xbf16>
    %261 = arith.truncf %259 : vector<8x16xf32> to vector<8x16xbf16>
    %cst_106 = arith.constant dense<0.000000e+00> : vector<64x16xf32>
    %262 = tpu.matmul %260, %261, %cst_106 {dimension_numbers = #tpu.dot_dimension_numbers<[1], [0], [0], [1], [0, 0, 1, 1], [], []>} : vector<64x8xbf16>, vector<8x16xbf16>, vector<64x16xf32> -> vector<64x16xf32>
    %c2_107 = arith.constant 2 : index
    %c0_108 = arith.constant 0 : index
    %c0_109 = arith.constant 0 : index
    %263 = vector.load %arg8[%c2_107, %c0_108, %c0_109] : memref<4x1x16xf32, #tpu.memory_space<vmem>>, vector<1x1x16xf32>
    %264 = vector.shape_cast %263 : vector<1x1x16xf32> to vector<1x16xf32>
    %265 = vector.broadcast %264 : vector<1x16xf32> to vector<64x16xf32>
    %266 = arith.addf %262, %265 : vector<64x16xf32>
    %267 = vector.shape_cast %266 : vector<64x16xf32> to vector<2x4x8x16xf32>
    %268 = vector.extract_strided_slice %174 {offsets = [0, 1, 0, 0], sizes = [2, 4, 8, 16], strides = [1, 1, 1, 1]} : vector<2x5x8x16xf32> to vector<2x4x8x16xf32>
    %269 = arith.addf %267, %268 : vector<2x4x8x16xf32>
    %270 = vector.shape_cast %257 : vector<64x8xf32> to vector<8x8x8xf32>
    %271 = vector.shape_cast %41 : vector<8x8xbf16> to vector<1x8x8xbf16>
    %272 = vector.broadcast %271 : vector<1x8x8xbf16> to vector<8x8x8xbf16>
    %273 = arith.truncf %270 : vector<8x8x8xf32> to vector<8x8x8xbf16>
    %cst_110 = arith.constant dense<0.000000e+00> : vector<8x8x8xf32>
    %274 = tpu.matmul %272, %273, %cst_110 {dimension_numbers = #tpu.dot_dimension_numbers<[2], [1], [1], [2], [0, 0, 0, 1, 1, 2], [0], [0]>} : vector<8x8x8xbf16>, vector<8x8x8xbf16>, vector<8x8x8xf32> -> vector<8x8x8xf32>
    %275 = arith.truncf %274 : vector<8x8x8xf32> to vector<8x8x8xbf16>
    %cst_111 = arith.constant dense<0.000000e+00> : vector<8x8x8xf32>
    %276 = tpu.matmul %272, %275, %cst_111 {dimension_numbers = #tpu.dot_dimension_numbers<[2], [1], [1], [2], [0, 0, 0, 1, 1, 2], [0], [0]>} : vector<8x8x8xbf16>, vector<8x8x8xbf16>, vector<8x8x8xf32> -> vector<8x8x8xf32>
    %c2_112 = arith.constant 2 : index
    %c0_113 = arith.constant 0 : index
    %c0_114 = arith.constant 0 : index
    %277 = vector.load %arg9[%c2_112, %c0_113, %c0_114] : memref<4x24x8xf32, #tpu.memory_space<vmem>>, vector<1x24x8xf32>
    %278 = vector.shape_cast %277 : vector<1x24x8xf32> to vector<24x8xf32>
    %279 = vector.extract_strided_slice %278 {offsets = [0, 0], sizes = [8, 8], strides = [1, 1]} : vector<24x8xf32> to vector<8x8xf32>
    %280 = arith.truncf %257 : vector<64x8xf32> to vector<64x8xbf16>
    %281 = arith.truncf %279 : vector<8x8xf32> to vector<8x8xbf16>
    %cst_115 = arith.constant dense<0.000000e+00> : vector<64x8xf32>
    %282 = tpu.matmul %280, %281, %cst_115 {dimension_numbers = #tpu.dot_dimension_numbers<[1], [0], [0], [1], [0, 0, 1, 1], [], []>} : vector<64x8xbf16>, vector<8x8xbf16>, vector<64x8xf32> -> vector<64x8xf32>
    %283 = vector.shape_cast %274 : vector<8x8x8xf32> to vector<64x8xf32>
    %284 = vector.extract_strided_slice %278 {offsets = [8, 0], sizes = [8, 8], strides = [1, 1]} : vector<24x8xf32> to vector<8x8xf32>
    %285 = arith.truncf %283 : vector<64x8xf32> to vector<64x8xbf16>
    %286 = arith.truncf %284 : vector<8x8xf32> to vector<8x8xbf16>
    %cst_116 = arith.constant dense<0.000000e+00> : vector<64x8xf32>
    %287 = tpu.matmul %285, %286, %cst_116 {dimension_numbers = #tpu.dot_dimension_numbers<[1], [0], [0], [1], [0, 0, 1, 1], [], []>} : vector<64x8xbf16>, vector<8x8xbf16>, vector<64x8xf32> -> vector<64x8xf32>
    %288 = arith.addf %282, %287 : vector<64x8xf32>
    %289 = vector.shape_cast %276 : vector<8x8x8xf32> to vector<64x8xf32>
    %290 = vector.extract_strided_slice %278 {offsets = [16, 0], sizes = [8, 8], strides = [1, 1]} : vector<24x8xf32> to vector<8x8xf32>
    %291 = arith.truncf %289 : vector<64x8xf32> to vector<64x8xbf16>
    %292 = arith.truncf %290 : vector<8x8xf32> to vector<8x8xbf16>
    %cst_117 = arith.constant dense<0.000000e+00> : vector<64x8xf32>
    %293 = tpu.matmul %291, %292, %cst_117 {dimension_numbers = #tpu.dot_dimension_numbers<[1], [0], [0], [1], [0, 0, 1, 1], [], []>} : vector<64x8xbf16>, vector<8x8xbf16>, vector<64x8xf32> -> vector<64x8xf32>
    %294 = arith.addf %288, %293 : vector<64x8xf32>
    %c2_118 = arith.constant 2 : index
    %c0_119 = arith.constant 0 : index
    %c0_120 = arith.constant 0 : index
    %295 = vector.load %arg10[%c2_118, %c0_119, %c0_120] : memref<4x1x8xf32, #tpu.memory_space<vmem>>, vector<1x1x8xf32>
    %296 = vector.shape_cast %295 : vector<1x1x8xf32> to vector<1x8xf32>
    %297 = vector.broadcast %296 : vector<1x8xf32> to vector<64x8xf32>
    %298 = arith.addf %294, %297 : vector<64x8xf32>
    %299 = arith.addf %298, %233 : vector<64x8xf32>
    %c2_121 = arith.constant 2 : index
    %c0_122 = arith.constant 0 : index
    %c0_123 = arith.constant 0 : index
    %300 = vector.load %arg11[%c2_121, %c0_122, %c0_123] : memref<4x1x8xf32, #tpu.memory_space<vmem>>, vector<1x1x8xf32>
    %301 = vector.shape_cast %300 : vector<1x1x8xf32> to vector<1x8xf32>
    %c2_124 = arith.constant 2 : index
    %c0_125 = arith.constant 0 : index
    %c0_126 = arith.constant 0 : index
    %302 = vector.load %arg12[%c2_124, %c0_125, %c0_126] : memref<4x1x8xf32, #tpu.memory_space<vmem>>, vector<1x1x8xf32>
    %303 = vector.shape_cast %302 : vector<1x1x8xf32> to vector<1x8xf32>
    %cst_127 = arith.constant dense<0.000000e+00> : vector<8xf32>
    %304 = vector.multi_reduction <add>, %299, %cst_127 [0] : vector<64x8xf32> to vector<8xf32>
    %305 = vector.shape_cast %304 : vector<8xf32> to vector<1x8xf32>
    %cst_128 = arith.constant 6.400000e+01 : f32
    %306 = vector.broadcast %cst_128 : f32 to vector<1x8xf32>
    %307 = arith.divf %305, %306 : vector<1x8xf32>
    %308 = vector.broadcast %307 : vector<1x8xf32> to vector<64x8xf32>
    %309 = arith.subf %299, %308 : vector<64x8xf32>
    %310 = arith.mulf %309, %309 : vector<64x8xf32>
    %cst_129 = arith.constant dense<0.000000e+00> : vector<8xf32>
    %311 = vector.multi_reduction <add>, %310, %cst_129 [0] : vector<64x8xf32> to vector<8xf32>
    %312 = vector.shape_cast %311 : vector<8xf32> to vector<1x8xf32>
    %cst_130 = arith.constant 6.400000e+01 : f32
    %313 = vector.broadcast %cst_130 : f32 to vector<1x8xf32>
    %314 = arith.divf %312, %313 : vector<1x8xf32>
    %cst_131 = arith.constant 9.99999974E-6 : f32
    %315 = vector.broadcast %cst_131 : f32 to vector<1x8xf32>
    %316 = arith.addf %314, %315 : vector<1x8xf32>
    %317 = math.rsqrt %316 : vector<1x8xf32>
    %318 = vector.broadcast %317 : vector<1x8xf32> to vector<64x8xf32>
    %319 = arith.mulf %309, %318 : vector<64x8xf32>
    %320 = vector.broadcast %301 : vector<1x8xf32> to vector<64x8xf32>
    %321 = arith.mulf %319, %320 : vector<64x8xf32>
    %322 = vector.broadcast %303 : vector<1x8xf32> to vector<64x8xf32>
    %323 = arith.addf %321, %322 : vector<64x8xf32>
    %324 = vector.shape_cast %323 : vector<64x8xf32> to vector<2x4x8x8xf32>
    %325 = vector.extract_strided_slice %324 {offsets = [0, 0, 0, 0], sizes = [2, 2, 8, 8], strides = [1, 1, 1, 1]} : vector<2x4x8x8xf32> to vector<2x2x8x8xf32>
    %326 = vector.shape_cast %325 : vector<2x2x8x8xf32> to vector<32x8xf32>
    %327 = vector.extract_strided_slice %324 {offsets = [0, 2, 0, 0], sizes = [2, 2, 8, 8], strides = [1, 1, 1, 1]} : vector<2x4x8x8xf32> to vector<2x2x8x8xf32>
    %328 = vector.shape_cast %327 : vector<2x2x8x8xf32> to vector<32x8xf32>
    %c3 = arith.constant 3 : index
    %c0_132 = arith.constant 0 : index
    %c0_133 = arith.constant 0 : index
    %329 = vector.load %arg5[%c3, %c0_132, %c0_133] : memref<4x16x16xf32, #tpu.memory_space<vmem>>, vector<1x16x16xf32>
    %330 = vector.shape_cast %329 : vector<1x16x16xf32> to vector<16x16xf32>
    %c3_134 = arith.constant 3 : index
    %c0_135 = arith.constant 0 : index
    %c0_136 = arith.constant 0 : index
    %331 = vector.load %arg6[%c3_134, %c0_135, %c0_136] : memref<4x1x16xf32, #tpu.memory_space<vmem>>, vector<1x1x16xf32>
    %332 = vector.shape_cast %331 : vector<1x1x16xf32> to vector<1x16xf32>
    %333 = vector.extract_strided_slice %330 {offsets = [0, 0], sizes = [8, 16], strides = [1, 1]} : vector<16x16xf32> to vector<8x16xf32>
    %334 = arith.truncf %326 : vector<32x8xf32> to vector<32x8xbf16>
    %335 = arith.truncf %333 : vector<8x16xf32> to vector<8x16xbf16>
    %cst_137 = arith.constant dense<0.000000e+00> : vector<32x16xf32>
    %336 = tpu.matmul %334, %335, %cst_137 {dimension_numbers = #tpu.dot_dimension_numbers<[1], [0], [0], [1], [0, 0, 1, 1], [], []>} : vector<32x8xbf16>, vector<8x16xbf16>, vector<32x16xf32> -> vector<32x16xf32>
    %337 = vector.broadcast %332 : vector<1x16xf32> to vector<32x16xf32>
    %338 = arith.addf %337, %336 : vector<32x16xf32>
    %339 = vector.extract_strided_slice %330 {offsets = [8, 0], sizes = [8, 16], strides = [1, 1]} : vector<16x16xf32> to vector<8x16xf32>
    %340 = arith.truncf %328 : vector<32x8xf32> to vector<32x8xbf16>
    %341 = arith.truncf %339 : vector<8x16xf32> to vector<8x16xbf16>
    %cst_138 = arith.constant dense<0.000000e+00> : vector<32x16xf32>
    %342 = tpu.matmul %340, %341, %cst_138 {dimension_numbers = #tpu.dot_dimension_numbers<[1], [0], [0], [1], [0, 0, 1, 1], [], []>} : vector<32x8xbf16>, vector<8x16xbf16>, vector<32x16xf32> -> vector<32x16xf32>
    %343 = arith.addf %338, %342 : vector<32x16xf32>
    %344 = vector.extract_strided_slice %343 {offsets = [0, 0], sizes = [32, 8], strides = [1, 1]} : vector<32x16xf32> to vector<32x8xf32>
    %345 = math.tanh %344 : vector<32x8xf32>
    %346 = vector.extract_strided_slice %343 {offsets = [0, 8], sizes = [32, 8], strides = [1, 1]} : vector<32x16xf32> to vector<32x8xf32>
    %347 = arith.negf %346 : vector<32x8xf32>
    %348 = math.exp %347 : vector<32x8xf32>
    %cst_139 = arith.constant 1.000000e+00 : f32
    %349 = vector.broadcast %cst_139 : f32 to vector<32x8xf32>
    %350 = arith.addf %349, %348 : vector<32x8xf32>
    %351 = arith.divf %349, %350 : vector<32x8xf32>
    %352 = arith.mulf %345, %351 : vector<32x8xf32>
    %c3_140 = arith.constant 3 : index
    %c0_141 = arith.constant 0 : index
    %c0_142 = arith.constant 0 : index
    %353 = vector.load %arg7[%c3_140, %c0_141, %c0_142] : memref<4x8x16xf32, #tpu.memory_space<vmem>>, vector<1x8x16xf32>
    %354 = vector.shape_cast %353 : vector<1x8x16xf32> to vector<8x16xf32>
    %355 = arith.truncf %352 : vector<32x8xf32> to vector<32x8xbf16>
    %356 = arith.truncf %354 : vector<8x16xf32> to vector<8x16xbf16>
    %cst_143 = arith.constant dense<0.000000e+00> : vector<32x16xf32>
    %357 = tpu.matmul %355, %356, %cst_143 {dimension_numbers = #tpu.dot_dimension_numbers<[1], [0], [0], [1], [0, 0, 1, 1], [], []>} : vector<32x8xbf16>, vector<8x16xbf16>, vector<32x16xf32> -> vector<32x16xf32>
    %c3_144 = arith.constant 3 : index
    %c0_145 = arith.constant 0 : index
    %c0_146 = arith.constant 0 : index
    %358 = vector.load %arg8[%c3_144, %c0_145, %c0_146] : memref<4x1x16xf32, #tpu.memory_space<vmem>>, vector<1x1x16xf32>
    %359 = vector.shape_cast %358 : vector<1x1x16xf32> to vector<1x16xf32>
    %360 = vector.broadcast %359 : vector<1x16xf32> to vector<32x16xf32>
    %361 = arith.addf %357, %360 : vector<32x16xf32>
    %362 = vector.shape_cast %361 : vector<32x16xf32> to vector<2x2x8x16xf32>
    %363 = vector.extract_strided_slice %269 {offsets = [0, 2, 0, 0], sizes = [2, 2, 8, 16], strides = [1, 1, 1, 1]} : vector<2x4x8x16xf32> to vector<2x2x8x16xf32>
    %364 = arith.addf %362, %363 : vector<2x2x8x16xf32>
    %cst_147 = arith.constant 0.000000e+00 : f32
    %365 = vector.broadcast %cst_147 : f32 to vector<2x2x8x16xf32>
    %366 = arith.maximumf %364, %365 : vector<2x2x8x16xf32>
    %367 = vector.shape_cast %366 : vector<2x2x8x16xf32> to vector<4x8x16xf32>
    %cst_148 = arith.constant dense<0.000000e+00> : vector<8x16xf32>
    %368 = vector.multi_reduction <add>, %367, %cst_148 [0] : vector<4x8x16xf32> to vector<8x16xf32>
    %cst_149 = arith.constant 4.000000e+00 : f32
    %369 = vector.broadcast %cst_149 : f32 to vector<8x16xf32>
    %370 = arith.divf %368, %369 : vector<8x16xf32>
    %c0_150 = arith.constant 0 : index
    %c0_151 = arith.constant 0 : index
    %371 = vector.load %arg13[%c0_150, %c0_151] : memref<16x8xf32, #tpu.memory_space<vmem>>, vector<16x8xf32>
    %c0_152 = arith.constant 0 : index
    %c0_153 = arith.constant 0 : index
    %372 = vector.load %arg15[%c0_152, %c0_153] : memref<8x8xf32, #tpu.memory_space<vmem>>, vector<8x8xf32>
    %cst_154 = arith.constant dense<0.000000e+00> : vector<16x8xf32>
    %373 = tpu.matmul %371, %372, %cst_154 {dimension_numbers = #tpu.dot_dimension_numbers<[1], [0], [0], [1], [0, 0, 1, 1], [], []>} : vector<16x8xf32>, vector<8x8xf32>, vector<16x8xf32> -> vector<16x8xf32>
    %c0_155 = arith.constant 0 : index
    %c0_156 = arith.constant 0 : index
    %374 = vector.load %arg14[%c0_155, %c0_156] : memref<16x1xf32, #tpu.memory_space<vmem>>, vector<16x1xf32>
    %375 = vector.broadcast %374 : vector<16x1xf32> to vector<16x8xf32>
    %376 = arith.addf %373, %375 : vector<16x8xf32>
    %cst_157 = arith.constant dense<0.000000e+00> : vector<8x8xf32>
    %377 = tpu.matmul %370, %376, %cst_157 {dimension_numbers = #tpu.dot_dimension_numbers<[1], [0], [0], [1], [0, 0, 1, 1], [], []>} : vector<8x16xf32>, vector<16x8xf32>, vector<8x8xf32> -> vector<8x8xf32>
    %cst_158 = arith.constant 2.500000e-01 : f32
    %378 = vector.broadcast %cst_158 : f32 to vector<8x8xf32>
    %379 = arith.mulf %377, %378 : vector<8x8xf32>
    %cst_159 = arith.constant dense<0xFF800000> : vector<8xf32>
    %380 = vector.multi_reduction <maximumf>, %379, %cst_159 [0] : vector<8x8xf32> to vector<8xf32>
    %381 = vector.shape_cast %380 : vector<8xf32> to vector<1x8xf32>
    %382 = vector.broadcast %381 : vector<1x8xf32> to vector<8x8xf32>
    %383 = arith.subf %379, %382 : vector<8x8xf32>
    %384 = math.exp %383 : vector<8x8xf32>
    %cst_160 = arith.constant dense<0.000000e+00> : vector<8xf32>
    %385 = vector.multi_reduction <add>, %384, %cst_160 [0] : vector<8x8xf32> to vector<8xf32>
    %386 = vector.shape_cast %385 : vector<8xf32> to vector<1x8xf32>
    %387 = tpu.reciprocal %386 {approx = true} : vector<1x8xf32> -> vector<1x8xf32>
    %388 = vector.broadcast %387 : vector<1x8xf32> to vector<8x8xf32>
    %389 = arith.mulf %384, %388 : vector<8x8xf32>
    %c0_161 = arith.constant 0 : index
    %c0_162 = arith.constant 0 : index
    %390 = vector.load %arg22[%c0_161, %c0_162] : memref<8x8xf32, #tpu.memory_space<vmem>>, vector<8x8xf32>
    tpu.vector_store %arg22[%c0_161, %c0_162], %389 {strides = array<i32>} : memref<8x8xf32, #tpu.memory_space<vmem>>, vector<8x8xf32>,
    %c0_163 = arith.constant 0 : index
    %c0_164 = arith.constant 0 : index
    %391 = vector.load %arg16[%c0_163, %c0_164] : memref<8x8xf32, #tpu.memory_space<vmem>>, vector<8x8xf32>
    %392 = arith.mulf %391, %389 : vector<8x8xf32>
    %cst_165 = arith.constant dense<0.000000e+00> : vector<8xf32>
    %393 = vector.multi_reduction <add>, %392, %cst_165 [1] : vector<8x8xf32> to vector<8xf32>
    %394 = vector.shape_cast %393 : vector<8xf32> to vector<8x1xf32>
    %395 = arith.negf %394 : vector<8x1xf32>
    %396 = math.exp %395 : vector<8x1xf32>
    %cst_166 = arith.constant 1.000000e+00 : f32
    %397 = vector.broadcast %cst_166 : f32 to vector<8x1xf32>
    %398 = arith.addf %397, %396 : vector<8x1xf32>
    %399 = arith.divf %397, %398 : vector<8x1xf32>
    %c0_167 = arith.constant 0 : index
    %c0_168 = arith.constant 0 : index
    %400 = vector.load %arg23[%c0_167, %c0_168] : memref<8x1xf32, #tpu.memory_space<vmem>>, vector<8x1xf32>
    tpu.vector_store %arg23[%c0_167, %c0_168], %399 {strides = array<i32>} : memref<8x1xf32, #tpu.memory_space<vmem>>, vector<8x1xf32>,
    %cst_169 = arith.constant 1.000000e+00 : f32
    %401 = vector.broadcast %cst_169 : f32 to vector<8x1xf32>
    %402 = arith.addf %399, %401 : vector<8x1xf32>
    %403 = vector.shape_cast %402 : vector<8x1xf32> to vector<1x8x1xf32>
    %404 = vector.broadcast %403 : vector<1x8x1xf32> to vector<4x8x16xf32>
    %405 = arith.mulf %367, %404 : vector<4x8x16xf32>
    %406 = vector.shape_cast %405 : vector<4x8x16xf32> to vector<32x16xf32>
    %c0_170 = arith.constant 0 : index
    %c0_171 = arith.constant 0 : index
    %407 = vector.load %arg17[%c0_170, %c0_171] : memref<16x32xf32, #tpu.memory_space<vmem>>, vector<16x32xf32>
    %408 = arith.truncf %406 : vector<32x16xf32> to vector<32x16xbf16>
    %409 = arith.truncf %407 : vector<16x32xf32> to vector<16x32xbf16>
    %cst_172 = arith.constant dense<0.000000e+00> : vector<32x32xf32>
    %410 = tpu.matmul %408, %409, %cst_172 {dimension_numbers = #tpu.dot_dimension_numbers<[1], [0], [0], [1], [0, 0, 1, 1], [], []>} : vector<32x16xbf16>, vector<16x32xbf16>, vector<32x32xf32> -> vector<32x32xf32>
    %c0_173 = arith.constant 0 : index
    %c0_174 = arith.constant 0 : index
    %411 = vector.load %arg18[%c0_173, %c0_174] : memref<1x32xf32, #tpu.memory_space<vmem>>, vector<1x32xf32>
    %412 = vector.broadcast %411 : vector<1x32xf32> to vector<32x32xf32>
    %413 = arith.addf %410, %412 : vector<32x32xf32>
    %cst_175 = arith.constant 0.000000e+00 : f32
    %414 = vector.broadcast %cst_175 : f32 to vector<32x32xf32>
    %415 = arith.maximumf %413, %414 : vector<32x32xf32>
    %c0_176 = arith.constant 0 : index
    %c0_177 = arith.constant 0 : index
    %416 = vector.load %arg19[%c0_176, %c0_177] : memref<32x4xf32, #tpu.memory_space<vmem>>, vector<32x4xf32>
    %417 = arith.truncf %415 : vector<32x32xf32> to vector<32x32xbf16>
    %418 = arith.truncf %416 : vector<32x4xf32> to vector<32x4xbf16>
    %cst_178 = arith.constant dense<0.000000e+00> : vector<32x4xf32>
    %419 = tpu.matmul %417, %418, %cst_178 {dimension_numbers = #tpu.dot_dimension_numbers<[1], [0], [0], [1], [0, 0, 1, 1], [], []>} : vector<32x32xbf16>, vector<32x4xbf16>, vector<32x4xf32> -> vector<32x4xf32>
    %c0_179 = arith.constant 0 : index
    %c0_180 = arith.constant 0 : index
    %420 = vector.load %arg20[%c0_179, %c0_180] : memref<1x4xf32, #tpu.memory_space<vmem>>, vector<1x4xf32>
    %421 = vector.broadcast %420 : vector<1x4xf32> to vector<32x4xf32>
    %422 = arith.addf %419, %421 : vector<32x4xf32>
    %423 = vector.shape_cast %422 : vector<32x4xf32> to vector<2x2x8x4xf32>
    %c0_181 = arith.constant 0 : index
    %c0_182 = arith.constant 0 : index
    %c0_183 = arith.constant 0 : index
    %c0_184 = arith.constant 0 : index
    %424 = vector.load %arg21[%c0_181, %c0_182, %c0_183, %c0_184] : memref<2x2x8x4xf32, #tpu.memory_space<vmem>>, vector<2x2x8x4xf32>
    tpu.vector_store %arg21[%c0_181, %c0_182, %c0_183, %c0_184], %423 {strides = array<i32>} : memref<2x2x8x4xf32, #tpu.memory_space<vmem>>, vector<2x2x8x4xf32>,
    return
  }
}

</mosaic_0001>

<llo_original>
// kernel: pgwnet_forward.1
$region0: #{pgwnet_forward.1}
  #allocation0 [shape = 'u32[]', space=smem, size = 0x4, offset = 0x4, fixed_abs, tag = 'smem constant byte address 0x4 - core index']
  #allocation1 [shape = 'u32[72,128]{1,0:T(1,128)}', space=vmem, size = 0x9000, scoped, tag = 'internal scratch']
  %s0 = inlined_call_operand.vmem [shape: f32[2,8,8,8], index: 0, kind: input, shape index: {}]
  %s1 = inlined_call_operand.vmem [shape: f32[8,10], index: 1, kind: input, shape index: {}]
  %s2 = inlined_call_operand.vmem [shape: f32[10,8], index: 2, kind: input, shape index: {}]
  %s3 = inlined_call_operand.vmem [shape: f32[8,8], index: 3, kind: input, shape index: {}]
  %s4 = inlined_call_operand.vmem [shape: f32[1,8], index: 4, kind: input, shape index: {}]
  %s5 = inlined_call_operand.vmem [shape: f32[4,16,16], index: 5, kind: input, shape index: {}]
  %s6 = inlined_call_operand.vmem [shape: f32[4,1,16], index: 6, kind: input, shape index: {}]
  %s7 = inlined_call_operand.vmem [shape: f32[4,8,16], index: 7, kind: input, shape index: {}]
  %s8 = inlined_call_operand.vmem [shape: f32[4,1,16], index: 8, kind: input, shape index: {}]
  %s9 = inlined_call_operand.vmem [shape: f32[4,24,8], index: 9, kind: input, shape index: {}]
  %s10 = inlined_call_operand.vmem [shape: f32[4,1,8], index: 10, kind: input, shape index: {}]
  %s11 = inlined_call_operand.vmem [shape: f32[4,1,8], index: 11, kind: input, shape index: {}]
  %s12 = inlined_call_operand.vmem [shape: f32[4,1,8], index: 12, kind: input, shape index: {}]
  %s13 = inlined_call_operand.vmem [shape: f32[16,8], index: 13, kind: input, shape index: {}]
  %s14 = inlined_call_operand.vmem [shape: f32[16,1], index: 14, kind: input, shape index: {}]
  %s15 = inlined_call_operand.vmem [shape: f32[8,8], index: 15, kind: input, shape index: {}]
  %s16 = inlined_call_operand.vmem [shape: f32[8,8], index: 16, kind: input, shape index: {}]
  %s17 = inlined_call_operand.vmem [shape: f32[16,32], index: 17, kind: input, shape index: {}]
  %s18 = inlined_call_operand.vmem [shape: f32[1,32], index: 18, kind: input, shape index: {}]
  %s19 = inlined_call_operand.vmem [shape: f32[32,4], index: 19, kind: input, shape index: {}]
  %s20 = inlined_call_operand.vmem [shape: f32[1,4], index: 20, kind: input, shape index: {}]
  %s21 = inlined_call_operand.vmem [shape: f32[2,2,8,4], index: 21, kind: output, shape index: {0}]
  %s22 = inlined_call_operand.vmem [shape: f32[8,8], index: 22, kind: output, shape index: {1}]
  %s23 = inlined_call_operand.vmem [shape: f32[8,1], index: 23, kind: output, shape index: {2}]
  %24 = xla_tuple %s21, %s22, %s23
  %s25 = sld [smem:[#allocation0]]
  $region110: #{pgwnet_forward.1} parent=0
    _
  %s27 = ssub.s32 1, %s25
  %s28 = scalar_select 0, %s27, %s25
  // Predicated region
  $region2: #{pgwnet_forward.1} parent=0 // pred_check
    _
  $region3: #{pgwnet_forward.1} parent=0 // pred_check_branch
    %30 = sbr.rel (0) target = $region5
  $region4: #{pgwnet_forward.1} parent=0 // pred_region
    _
  $region5: #{pgwnet_forward.1} parent=0 // pred_fallthru
    _
  // Predicated region
  $region6: #{pgwnet_forward.1} parent=0 // pred_check
    _
  $region7: #{pgwnet_forward.1} parent=0 // pred_check_branch
    %32 = sbr.rel (0) target = $region9
  $region8: #{pgwnet_forward.1} parent=0 // pred_region
    _
  $region9: #{pgwnet_forward.1} parent=0 // pred_fallthru
    _
  // Predicated region
  $region10: #{pgwnet_forward.1} parent=0 // pred_check
    _
  $region11: #{pgwnet_forward.1} parent=0 // pred_check_branch
    %34 = sbr.rel (0) target = $region13
  $region12: #{pgwnet_forward.1} parent=0 // pred_region
    _
  $region13: #{pgwnet_forward.1} parent=0 // pred_fallthru
    _
  // Predicated region
  $region14: #{pgwnet_forward.1} parent=0 // pred_check
    _
  $region15: #{pgwnet_forward.1} parent=0 // pred_check_branch
    %36 = sbr.rel (0) target = $region17
  $region16: #{pgwnet_forward.1} parent=0 // pred_region
    _
  $region17: #{pgwnet_forward.1} parent=0 // pred_fallthru
    _
  // Predicated region
  $region18: #{pgwnet_forward.1} parent=0 // pred_check
    _
  $region19: #{pgwnet_forward.1} parent=0 // pred_check_branch
    %38 = sbr.rel (0) target = $region21
  $region20: #{pgwnet_forward.1} parent=0 // pred_region
    _
  $region21: #{pgwnet_forward.1} parent=0 // pred_fallthru
    _
  // Predicated region
  $region22: #{pgwnet_forward.1} parent=0 // pred_check
    _
  $region23: #{pgwnet_forward.1} parent=0 // pred_check_branch
    %40 = sbr.rel (0) target = $region25
  $region24: #{pgwnet_forward.1} parent=0 // pred_region
    _
  $region25: #{pgwnet_forward.1} parent=0 // pred_fallthru
    _
  // Predicated region
  $region26: #{pgwnet_forward.1} parent=0 // pred_check
    _
  $region27: #{pgwnet_forward.1} parent=0 // pred_check_branch
    %42 = sbr.rel (0) target = $region29
  $region28: #{pgwnet_forward.1} parent=0 // pred_region
    _
  $region29: #{pgwnet_forward.1} parent=0 // pred_fallthru
    _
  // Predicated region
  $region30: #{pgwnet_forward.1} parent=0 // pred_check
    _
  $region31: #{pgwnet_forward.1} parent=0 // pred_check_branch
    %44 = sbr.rel (0) target = $region33
  $region32: #{pgwnet_forward.1} parent=0 // pred_region
    _
  $region33: #{pgwnet_forward.1} parent=0 // pred_fallthru
    _
  // Predicated region
  $region34: #{pgwnet_forward.1} parent=0 // pred_check
    _
  $region35: #{pgwnet_forward.1} parent=0 // pred_check_branch
    %46 = sbr.rel (0) target = $region37
  $region36: #{pgwnet_forward.1} parent=0 // pred_region
    _
  $region37: #{pgwnet_forward.1} parent=0 // pred_fallthru
    _
  // Predicated region
  $region38: #{pgwnet_forward.1} parent=0 // pred_check
    _
  $region39: #{pgwnet_forward.1} parent=0 // pred_check_branch
    %48 = sbr.rel (0) target = $region41
  $region40: #{pgwnet_forward.1} parent=0 // pred_region
    _
  $region41: #{pgwnet_forward.1} parent=0 // pred_fallthru
    _
  // Predicated region
  $region42: #{pgwnet_forward.1} parent=0 // pred_check
    _
  $region43: #{pgwnet_forward.1} parent=0 // pred_check_branch
    %50 = sbr.rel (0) target = $region45
  $region44: #{pgwnet_forward.1} parent=0 // pred_region
    _
  $region45: #{pgwnet_forward.1} parent=0 // pred_fallthru
    _
  // Predicated region
  $region46: #{pgwnet_forward.1} parent=0 // pred_check
    _
  $region47: #{pgwnet_forward.1} parent=0 // pred_check_branch
    %52 = sbr.rel (0) target = $region49
  $region48: #{pgwnet_forward.1} parent=0 // pred_region
    _
  $region49: #{pgwnet_forward.1} parent=0 // pred_fallthru
    _
  // Predicated region
  $region50: #{pgwnet_forward.1} parent=0 // pred_check
    _
  $region51: #{pgwnet_forward.1} parent=0 // pred_check_branch
    %54 = sbr.rel (0) target = $region53
  $region52: #{pgwnet_forward.1} parent=0 // pred_region
    _
  $region53: #{pgwnet_forward.1} parent=0 // pred_fallthru
    _
  // Predicated region
  $region54: #{pgwnet_forward.1} parent=0 // pred_check
    _
  $region55: #{pgwnet_forward.1} parent=0 // pred_check_branch
    %56 = sbr.rel (0) target = $region57
  $region56: #{pgwnet_forward.1} parent=0 // pred_region
    _
  $region57: #{pgwnet_forward.1} parent=0 // pred_fallthru
    _
  // Predicated region
  $region58: #{pgwnet_forward.1} parent=0 // pred_check
    _
  $region59: #{pgwnet_forward.1} parent=0 // pred_check_branch
    %58 = sbr.rel (0) target = $region61
  $region60: #{pgwnet_forward.1} parent=0 // pred_region
    _
  $region61: #{pgwnet_forward.1} parent=0 // pred_fallthru
    _
  // Predicated region
  $region62: #{pgwnet_forward.1} parent=0 // pred_check
    _
  $region63: #{pgwnet_forward.1} parent=0 // pred_check_branch
    %60 = sbr.rel (0) target = $region65
  $region64: #{pgwnet_forward.1} parent=0 // pred_region
    _
  $region65: #{pgwnet_forward.1} parent=0 // pred_fallthru
    _
  // Predicated region
  $region66: #{pgwnet_forward.1} parent=0 // pred_check
    _
  $region67: #{pgwnet_forward.1} parent=0 // pred_check_branch
    %62 = sbr.rel (0) target = $region69
  $region68: #{pgwnet_forward.1} parent=0 // pred_region
    _
  $region69: #{pgwnet_forward.1} parent=0 // pred_fallthru
    _
  // Predicated region
  $region70: #{pgwnet_forward.1} parent=0 // pred_check
    _
  $region71: #{pgwnet_forward.1} parent=0 // pred_check_branch
    %64 = sbr.rel (0) target = $region73
  $region72: #{pgwnet_forward.1} parent=0 // pred_region
    _
  $region73: #{pgwnet_forward.1} parent=0 // pred_fallthru
    _
  // Predicated region
  $region74: #{pgwnet_forward.1} parent=0 // pred_check
    _
  $region75: #{pgwnet_forward.1} parent=0 // pred_check_branch
    %66 = sbr.rel (0) target = $region77
  $region76: #{pgwnet_forward.1} parent=0 // pred_region
    _
  $region77: #{pgwnet_forward.1} parent=0 // pred_fallthru
    _
  // Predicated region
  $region78: #{pgwnet_forward.1} parent=0 // pred_check
    _
  $region79: #{pgwnet_forward.1} parent=0 // pred_check_branch
    %68 = sbr.rel (0) target = $region81
  $region80: #{pgwnet_forward.1} parent=0 // pred_region
    _
  $region81: #{pgwnet_forward.1} parent=0 // pred_fallthru
    _
  // Predicated region
  $region82: #{pgwnet_forward.1} parent=0 // pred_check
    _
  $region83: #{pgwnet_forward.1} parent=0 // pred_check_branch
    %70 = sbr.rel (0) target = $region85
  $region84: #{pgwnet_forward.1} parent=0 // pred_region
    _
  $region85: #{pgwnet_forward.1} parent=0 // pred_fallthru
    _
  %v72 = vld [vmem:[%s0] sm:$0xff]
  %v73 = vld [vmem:[%s0 + $0x8] sm:$0xff]
  %v74 = vld [vmem:[%s0 + $0x10] sm:$0xff]
  %v75 = vld [vmem:[%s0 + $0x18] sm:$0xff]
  %v76 = vld [vmem:[%s0 + $0x20] sm:$0xff]
  %v77 = vld [vmem:[%s0 + $0x28] sm:$0xff]
  %v78 = vld [vmem:[%s0 + $0x30] sm:$0xff]
  %v79 = vld [vmem:[%s0 + $0x38] sm:$0xff]
  %v80 = vld [vmem:[%s0 + $0x40] sm:$0xff]
  %v81 = vld [vmem:[%s0 + $0x48] sm:$0xff]
  %v82 = vld [vmem:[%s0 + $0x50] sm:$0xff]
  %v83 = vld [vmem:[%s0 + $0x58] sm:$0xff]
  %v84 = vld [vmem:[%s0 + $0x60] sm:$0xff]
  %v85 = vld [vmem:[%s0 + $0x68] sm:$0xff]
  %v86 = vld [vmem:[%s0 + $0x70] sm:$0xff]
  %v87 = vld [vmem:[%s0 + $0x78] sm:$0xff]
  %vm88 = vcmask 64512
  %v89 = vsel %vm88, %v72, 0.0
  %v90 = vsel %vm88, %v73, 0.0
  %v91 = vadd.f32 %v89, %v90
  %v92 = vsel %vm88, %v74, 0.0
  %v93 = vadd.f32 %v91, %v92
  %v94 = vsel %vm88, %v75, 0.0
  %v95 = vadd.f32 %v93, %v94
  %v96 = vsel %vm88, %v76, 0.0
  %v97 = vadd.f32 %v95, %v96
  %v98 = vsel %vm88, %v77, 0.0
  %v99 = vadd.f32 %v97, %v98
  %v100 = vsel %vm88, %v78, 0.0
  %v101 = vadd.f32 %v99, %v100
  %v102 = vsel %vm88, %v79, 0.0
  %v103 = vadd.f32 %v101, %v102
  %v104 = vsel %vm88, %v80, 0.0
  %v105 = vadd.f32 %v103, %v104
  %v106 = vsel %vm88, %v81, 0.0
  %v107 = vadd.f32 %v105, %v106
  %v108 = vsel %vm88, %v82, 0.0
  %v109 = vadd.f32 %v107, %v108
  %v110 = vsel %vm88, %v83, 0.0
  %v111 = vadd.f32 %v109, %v110
  %v112 = vsel %vm88, %v84, 0.0
  %v113 = vadd.f32 %v111, %v112
  %v114 = vsel %vm88, %v85, 0.0
  %v115 = vadd.f32 %v113, %v114
  %v116 = vsel %vm88, %v86, 0.0
  %v117 = vadd.f32 %v115, %v116
  %v118 = vsel %vm88, %v87, 0.0
  %v119 = vadd.f32 %v117, %v118
  %v120 = vrot.slane %v119, 4
  %v121 = vadd.f32 %v119, %v120
  %v122 = vrot.slane %v121, 2
  %v123 = vadd.f32 %v121, %v122
  %v124 = vrot.slane %v123, 1
  %v125 = vadd.f32 %v123, %v124
  %v126 = vrcp.pop 128.0
  %v127 = vmul.f32 128.0, %v126
  %v128 = vsub.f32 1.0, %v127
  %v129 = vmul.f32 %v126, %v128
  %v130 = vadd.f32 %v126, %v129
  %vm131 = vweird.f32 %v126
  %v132 = vsel %vm131, %v126, %v130
  %v133 = vmul.f32 %v125, %v132
  %v134 = vsub.f32 %v72, %v133
  %v135 = vsub.f32 %v73, %v133
  %v136 = vsub.f32 %v74, %v133
  %v137 = vsub.f32 %v75, %v133
  %v138 = vsub.f32 %v76, %v133
  %v139 = vsub.f32 %v77, %v133
  %v140 = vsub.f32 %v78, %v133
  %v141 = vsub.f32 %v79, %v133
  %v142 = vsub.f32 %v80, %v133
  %v143 = vsub.f32 %v81, %v133
  %v144 = vsub.f32 %v82, %v133
  %v145 = vsub.f32 %v83, %v133
  %v146 = vsub.f32 %v84, %v133
  %v147 = vsub.f32 %v85, %v133
  %v148 = vsub.f32 %v86, %v133
  %v149 = vsub.f32 %v87, %v133
  %v150 = vmul.f32 %v134, %v134
  %v151 = vmul.f32 %v135, %v135
  %v152 = vmul.f32 %v136, %v136
  %v153 = vmul.f32 %v137, %v137
  %v154 = vmul.f32 %v138, %v138
  %v155 = vmul.f32 %v139, %v139
  %v156 = vmul.f32 %v140, %v140
  %v157 = vmul.f32 %v141, %v141
  %v158 = vmul.f32 %v142, %v142
  %v159 = vmul.f32 %v143, %v143
  %v160 = vmul.f32 %v144, %v144
  %v161 = vmul.f32 %v145, %v145
  %v162 = vmul.f32 %v146, %v146
  %v163 = vmul.f32 %v147, %v147
  %v164 = vmul.f32 %v148, %v148
  %v165 = vmul.f32 %v149, %v149
  %v166 = vsel %vm88, %v150, 0.0
  %v167 = vsel %vm88, %v151, 0.0
  %v168 = vadd.f32 %v166, %v167
  %v169 = vsel %vm88, %v152, 0.0
  %v170 = vadd.f32 %v168, %v169
  %v171 = vsel %vm88, %v153, 0.0
  %v172 = vadd.f32 %v170, %v171
  %v173 = vsel %vm88, %v154, 0.0
  %v174 = vadd.f32 %v172, %v173
  %v175 = vsel %vm88, %v155, 0.0
  %v176 = vadd.f32 %v174, %v175
  %v177 = vsel %vm88, %v156, 0.0
  %v178 = vadd.f32 %v176, %v177
  %v179 = vsel %vm88, %v157, 0.0
  %v180 = vadd.f32 %v178, %v179
  %v181 = vsel %vm88, %v158, 0.0
  %v182 = vadd.f32 %v180, %v181
  %v183 = vsel %vm88, %v159, 0.0
  %v184 = vadd.f32 %v182, %v183
  %v185 = vsel %vm88, %v160, 0.0
  %v186 = vadd.f32 %v184, %v185
  %v187 = vsel %vm88, %v161, 0.0
  %v188 = vadd.f32 %v186, %v187
  %v189 = vsel %vm88, %v162, 0.0
  %v190 = vadd.f32 %v188, %v189
  %v191 = vsel %vm88, %v163, 0.0
  %v192 = vadd.f32 %v190, %v191
  %v193 = vsel %vm88, %v164, 0.0
  %v194 = vadd.f32 %v192, %v193
  %v195 = vsel %vm88, %v165, 0.0
  %v196 = vadd.f32 %v194, %v195
  %v197 = vrot.slane %v196, 4
  %v198 = vadd.f32 %v196, %v197
  %v199 = vrot.slane %v198, 2
  %v200 = vadd.f32 %v198, %v199
  %v201 = vrot.slane %v200, 1
  %v202 = vadd.f32 %v200, %v201
  %v203 = vmul.f32 %v202, %v132
  %v204 = vadd.f32 %v203, 1e-05
  %v205 = vrsqrt.pop %v204
  %v206 = vmul.f32 %v205, %v204
  %v207 = vmul.f32 %v206, %v205
  %v208 = vmul.f32 0.5, %v207
  %v209 = vsub.f32 1.5, %v208
  %v210 = vmul.f32 %v205, %v209
  %vm211 = vweird.f32 %v204
  %vm212 = vweird.f32 %v205
  %vm213 = vmor %vm211, %vm212
  %v214 = vsel %vm213, %v205, %v210
  %v215 = vmul.f32 %v134, %v214
  %v216 = vmul.f32 %v135, %v214
  %v217 = vmul.f32 %v136, %v214
  %v218 = vmul.f32 %v137, %v214
  %v219 = vmul.f32 %v138, %v214
  %v220 = vmul.f32 %v139, %v214
  %v221 = vmul.f32 %v140, %v214
  %v222 = vmul.f32 %v141, %v214
  %v223 = vmul.f32 %v142, %v214
  %v224 = vmul.f32 %v143, %v214
  %v225 = vmul.f32 %v144, %v214
  %v226 = vmul.f32 %v145, %v214
  %v227 = vmul.f32 %v146, %v214
  %v228 = vmul.f32 %v147, %v214
  %v229 = vmul.f32 %v148, %v214
  %v230 = vmul.f32 %v149, %v214
  %v231 = vld [vmem:[%s3] sm:$0xff]
  %v232 = vpack.c.bf16 %v216, %v215
  %v233 = vpack.c.bf16 %v218, %v217
  %v234 = vpack.c.bf16 %v220, %v219
  %v235 = vpack.c.bf16 %v222, %v221
  %v236 = vpack.c.bf16 %v224, %v223
  %v237 = vpack.c.bf16 %v226, %v225
  %v238 = vpack.c.bf16 %v228, %v227
  %v239 = vpack.c.bf16 %v230, %v229
  %v240 = vpack.c.bf16 %v231, %v231
  %v241 = vld [vmem:[%s4] sm:$0x1]
  %v243 = vperm.slane %v241, 0
  %v246 = vsel %vm88, %v232, 0
  %v249 = vsel %vm88, %v233, 0
  %v252 = vsel %vm88, %v234, 0
  %v255 = vsel %vm88, %v235, 0
  %v258 = vsel %vm88, %v236, 0
  %v261 = vsel %vm88, %v237, 0
  %v264 = vsel %vm88, %v238, 0
  %v267 = vsel %vm88, %v239, 0
  %vm269 = vcmask 1043456
  %v271 = vsel %vm269, %v240, 0
  %273 = vmatpush.bf16.msra.mxu0 0
  %274 = vmatpush.bf16.msra.mxu0 0
  %275 = vmatpush.bf16.msra.mxu0 0
  %276 = vmatpush.bf16.msra.mxu0 0
  %277 = vmatpush.bf16.msra.mxu0 0
  %278 = vmatpush.bf16.msra.mxu0 0
  %279 = vmatpush.bf16.msra.mxu0 0
  %280 = vmatpush.bf16.msra.mxu0 %v271
  %281 = vmatmul.bf16.gmra.mxu0 %v246
  %v282 = vpop.f32.mrf.mxu0
  %v283 = vadd.f32 %v243, %v282
  %v284 = vpop.f32.mrf.mxu0
  %v285 = vadd.f32 %v243, %v284
  %286 = vmatmul.bf16.gmra.mxu0 %v249
  %v287 = vpop.f32.mrf.mxu0
  %v288 = vadd.f32 %v243, %v287
  %v289 = vpop.f32.mrf.mxu0
  %v290 = vadd.f32 %v243, %v289
  %291 = vmatmul.bf16.gmra.mxu0 %v252
  %v292 = vpop.f32.mrf.mxu0
  %v293 = vadd.f32 %v243, %v292
  %v294 = vpop.f32.mrf.mxu0
  %v295 = vadd.f32 %v243, %v294
  %296 = vmatmul.bf16.gmra.mxu0 %v255
  %v297 = vpop.f32.mrf.mxu0
  %v298 = vadd.f32 %v243, %v297
  %v299 = vpop.f32.mrf.mxu0
  %v300 = vadd.f32 %v243, %v299
  %301 = vmatmul.bf16.gmra.mxu0 %v258
  %v302 = vpop.f32.mrf.mxu0
  %v303 = vadd.f32 %v243, %v302
  %v304 = vpop.f32.mrf.mxu0
  %v305 = vadd.f32 %v243, %v304
  %306 = vmatmul.bf16.gmra.mxu0 %v261
  %v307 = vpop.f32.mrf.mxu0
  %v308 = vadd.f32 %v243, %v307
  %v309 = vpop.f32.mrf.mxu0
  %v310 = vadd.f32 %v243, %v309
  %311 = vmatmul.bf16.gmra.mxu0 %v264
  %v312 = vpop.f32.mrf.mxu0
  %v313 = vadd.f32 %v243, %v312
  %v314 = vpop.f32.mrf.mxu0
  %v315 = vadd.f32 %v243, %v314
  %316 = vmatmul.bf16.gmra.mxu0 %v267
  %v317 = vpop.f32.mrf.mxu0
  %v318 = vadd.f32 %v243, %v317
  %v319 = vpop.f32.mrf.mxu0
  %v320 = vadd.f32 %v243, %v319
  %321 = vdwg.mxu0
  %v322 = vld [vmem:[%s1] sm:$0xff]
  %v323 = vld [vmem:[%s2] sm:$0xff]
  %v324 = vld [vmem:[%s2 + $0x8] sm:$0x3]
  %vm325 = vcmask 80896
  %v327 = vsel %vm325, %v322, 0
  %vm329 = vcmask 1041408
  %v331 = vsel %vm329, %v324, 0
  %333 = vmatpush.msra.mxu0 0.0
  %334 = vmatpush.msra.mxu0 0.0
  %335 = vmatpush.msra.mxu0 0.0
  %336 = vmatpush.msra.mxu0 0.0
  %337 = vmatpush.msra.mxu0 0.0
  %338 = vmatpush.msra.mxu0 0.0
  %339 = vmatpush.msra.mxu0 0.0
  %340 = vmatpush.msra.mxu0 0.0
  %341 = vmatpush.msra.mxu0 0.0
  %342 = vmatpush.msra.mxu0 0.0
  %343 = vmatpush.msra.mxu0 0.0
  %344 = vmatpush.msra.mxu0 0.0
  %345 = vmatpush.msra.mxu0 0.0
  %346 = vmatpush.msra.mxu0 0.0
  %347 = vmatpush.msra.mxu0 %v331
  %348 = vmatpush.msra.mxu0 %v323
  %349 = vmatmul.f32.gmra.mxu0 %v327
  %v350 = vpop.f32.mrf.mxu0
  %v351 = vadd.f32 0.0, %v350
  %352 = vdwg.mxu0
  %v353 = vmax.f32 %v351, 0.0
  %v354 = vsel %vm88, %v353, -inf
  %v355 = vrot.slane %v354, 4
  %v356 = vmax.f32 %v354, %v355
  %v357 = vrot.slane %v356, 2
  %v358 = vmax.f32 %v356, %v357
  %v359 = vrot.slane %v358, 1
  %v360 = vmax.f32 %v358, %v359
  %v361 = vsub.f32 %v353, %v360
  %v362 = vmul.f32 %v361, 1.442695
  %v363 = vpow.pop %v362
  %v364 = vsel %vm88, %v363, 0.0
  %v365 = vrot.slane %v364, 4
  %v366 = vadd.f32 %v364, %v365
  %v367 = vrot.slane %v366, 2
  %v368 = vadd.f32 %v366, %v367
  %v369 = vrot.slane %v368, 1
  %v370 = vadd.f32 %v368, %v369
  %v371 = vrcp.pop %v370
  %v372 = vmul.f32 %v363, %v371
  %v373 = vpack.c.bf16 %v372, %v372
  %v374 = vld [vmem:[%s5] sm:$0xff]
  %v375 = vld [vmem:[%s5 + $0x8] sm:$0xff]
  %v376 = vld [vmem:[%s6] sm:$0x1]
  %v377 = vpack.c.bf16 %v285, %v283
  %v378 = vpack.c.bf16 %v290, %v288
  %v379 = vpack.c.bf16 %v295, %v293
  %v380 = vpack.c.bf16 %v303, %v298
  %v381 = vpack.c.bf16 %v308, %v305
  %v382 = vpack.c.bf16 %v313, %v310
  %v383 = vpack.c.bf16 %v318, %v315
  %v384 = vpack.c.bf16 %v374, %v374
  %v386 = vsel %vm88, %v377, 0
  %v389 = vsel %vm88, %v378, 0
  %v392 = vsel %vm88, %v379, 0
  %v395 = vsel %vm88, %v380, 0
  %v398 = vsel %vm88, %v381, 0
  %v401 = vsel %vm88, %v382, 0
  %v404 = vsel %vm88, %v383, 0
  %v407 = vsel %vm269, %v384, 0
  %409 = vmatpush.bf16.msra.mxu0 0
  %410 = vmatpush.bf16.msra.mxu0 0
  %411 = vmatpush.bf16.msra.mxu0 0
  %412 = vmatpush.bf16.msra.mxu0 0
  %413 = vmatpush.bf16.msra.mxu0 0
  %414 = vmatpush.bf16.msra.mxu0 0
  %415 = vmatpush.bf16.msra.mxu0 0
  %416 = vmatpush.bf16.msra.mxu0 %v407
  %417 = vmatmul.bf16.gmra.mxu0 %v386
  %v418 = vpop.f32.mrf.mxu0
  %v419 = vadd.f32 0.0, %v418
  %v420 = vpop.f32.mrf.mxu0
  %v421 = vadd.f32 0.0, %v420
  %422 = vmatmul.bf16.gmra.mxu0 %v389
  %v423 = vpop.f32.mrf.mxu0
  %v424 = vadd.f32 0.0, %v423
  %v425 = vpop.f32.mrf.mxu0
  %v426 = vadd.f32 0.0, %v425
  %427 = vmatmul.bf16.gmra.mxu0 %v392
  %v428 = vpop.f32.mrf.mxu0
  %v429 = vadd.f32 0.0, %v428
  %v430 = vpop.f32.mrf.mxu0
  %v431 = vadd.f32 0.0, %v430
  %432 = vmatmul.bf16.gmra.mxu0 %v395
  %v433 = vpop.f32.mrf.mxu0
  %v434 = vadd.f32 0.0, %v433
  %v435 = vpop.f32.mrf.mxu0
  %v436 = vadd.f32 0.0, %v435
  %437 = vmatmul.bf16.gmra.mxu0 %v398
  %v438 = vpop.f32.mrf.mxu0
  %v439 = vadd.f32 0.0, %v438
  %v440 = vpop.f32.mrf.mxu0
  %v441 = vadd.f32 0.0, %v440
  %442 = vmatmul.bf16.gmra.mxu0 %v401
  %v443 = vpop.f32.mrf.mxu0
  %v444 = vadd.f32 0.0, %v443
  %v445 = vpop.f32.mrf.mxu0
  %v446 = vadd.f32 0.0, %v445
  %447 = vmatmul.bf16.gmra.mxu0 %v404
  %v448 = vpop.f32.mrf.mxu0
  %v449 = vadd.f32 0.0, %v448
  %v450 = vpop.f32.mrf.mxu0
  %v451 = vadd.f32 0.0, %v450
  %452 = vdwg.mxu0
  %v454 = vperm.slane %v376, 0
  %v456 = vadd.f32 %v454, %v419
  %v457 = vadd.f32 %v454, %v421
  %v458 = vadd.f32 %v454, %v424
  %v459 = vadd.f32 %v454, %v426
  %v460 = vadd.f32 %v454, %v429
  %v461 = vadd.f32 %v454, %v431
  %v462 = vadd.f32 %v454, %v434
  %v463 = vadd.f32 %v454, %v436
  %v464 = vadd.f32 %v454, %v439
  %v465 = vadd.f32 %v454, %v441
  %v466 = vadd.f32 %v454, %v444
  %v467 = vadd.f32 %v454, %v446
  %v468 = vadd.f32 %v454, %v449
  %v469 = vadd.f32 %v454, %v451
  %v470 = vpack.c.bf16 %v288, %v285
  %v471 = vpack.c.bf16 %v293, %v290
  %v472 = vpack.c.bf16 %v298, %v295
  %v473 = vpack.c.bf16 %v305, %v300
  %v474 = vpack.c.bf16 %v310, %v308
  %v475 = vpack.c.bf16 %v315, %v313
  %v476 = vpack.c.bf16 %v320, %v318
  %v477 = vpack.c.bf16 %v375, %v375
  %v479 = vsel %vm88, %v470, 0
  %v482 = vsel %vm88, %v471, 0
  %v485 = vsel %vm88, %v472, 0
  %v488 = vsel %vm88, %v473, 0
  %v491 = vsel %vm88, %v474, 0
  %v494 = vsel %vm88, %v475, 0
  %v497 = vsel %vm88, %v476, 0
  %v500 = vsel %vm269, %v477, 0
  %502 = vmatpush.bf16.msra.mxu0 0
  %503 = vmatpush.bf16.msra.mxu0 0
  %504 = vmatpush.bf16.msra.mxu0 0
  %505 = vmatpush.bf16.msra.mxu0 0
  %506 = vmatpush.bf16.msra.mxu0 0
  %507 = vmatpush.bf16.msra.mxu0 0
  %508 = vmatpush.bf16.msra.mxu0 0
  %509 = vmatpush.bf16.msra.mxu0 %v500
  %510 = vmatmul.bf16.gmra.mxu0 %v479
  %v511 = vpop.f32.mrf.mxu0
  %v512 = vadd.f32 0.0, %v511
  %v513 = vpop.f32.mrf.mxu0
  %v514 = vadd.f32 0.0, %v513
  %515 = vmatmul.bf16.gmra.mxu0 %v482
  %v516 = vpop.f32.mrf.mxu0
  %v517 = vadd.f32 0.0, %v516
  %v518 = vpop.f32.mrf.mxu0
  %v519 = vadd.f32 0.0, %v518
  %520 = vmatmul.bf16.gmra.mxu0 %v485
  %v521 = vpop.f32.mrf.mxu0
  %v522 = vadd.f32 0.0, %v521
  %v523 = vpop.f32.mrf.mxu0
  %v524 = vadd.f32 0.0, %v523
  %525 = vmatmul.bf16.gmra.mxu0 %v488
  %v526 = vpop.f32.mrf.mxu0
  %v527 = vadd.f32 0.0, %v526
  %v528 = vpop.f32.mrf.mxu0
  %v529 = vadd.f32 0.0, %v528
  %530 = vmatmul.bf16.gmra.mxu0 %v491
  %v531 = vpop.f32.mrf.mxu0
  %v532 = vadd.f32 0.0, %v531
  %v533 = vpop.f32.mrf.mxu0
  %v534 = vadd.f32 0.0, %v533
  %535 = vmatmul.bf16.gmra.mxu0 %v494
  %v536 = vpop.f32.mrf.mxu0
  %v537 = vadd.f32 0.0, %v536
  %v538 = vpop.f32.mrf.mxu0
  %v539 = vadd.f32 0.0, %v538
  %540 = vmatmul.bf16.gmra.mxu0 %v497
  %v541 = vpop.f32.mrf.mxu0
  %v542 = vadd.f32 0.0, %v541
  %v543 = vpop.f32.mrf.mxu0
  %v544 = vadd.f32 0.0, %v543
  %545 = vdwg.mxu0
  %v546 = vadd.f32 %v456, %v512
  %v547 = vadd.f32 %v457, %v514
  %v548 = vadd.f32 %v458, %v517
  %v549 = vadd.f32 %v459, %v519
  %v550 = vadd.f32 %v460, %v522
  %v551 = vadd.f32 %v461, %v524
  %v552 = vadd.f32 %v462, %v527
  %v553 = vadd.f32 %v463, %v529
  %v554 = vadd.f32 %v464, %v532
  %v555 = vadd.f32 %v465, %v534
  %v556 = vadd.f32 %v466, %v537
  %v557 = vadd.f32 %v467, %v539
  %v558 = vadd.f32 %v468, %v542
  %v559 = vadd.f32 %v469, %v544
  %v560 = vtanh.pop %v546
  %v561 = vtanh.pop %v547
  %v562 = vtanh.pop %v548
  %v563 = vtanh.pop %v549
  %v564 = vtanh.pop %v550
  %v565 = vtanh.pop %v551
  %v566 = vtanh.pop %v552
  %v567 = vtanh.pop %v553
  %v568 = vtanh.pop %v554
  %v569 = vtanh.pop %v555
  %v570 = vtanh.pop %v556
  %v571 = vtanh.pop %v557
  %v572 = vtanh.pop %v558
  %v573 = vtanh.pop %v559
  %v574 = vxor.u32 %v546, 2147483648
  %v575 = vxor.u32 %v547, 2147483648
  %v576 = vxor.u32 %v548, 2147483648
  %v577 = vxor.u32 %v549, 2147483648
  %v578 = vxor.u32 %v550, 2147483648
  %v579 = vxor.u32 %v551, 2147483648
  %v580 = vxor.u32 %v552, 2147483648
  %v581 = vxor.u32 %v553, 2147483648
  %v582 = vxor.u32 %v554, 2147483648
  %v583 = vxor.u32 %v555, 2147483648
  %v584 = vxor.u32 %v556, 2147483648
  %v585 = vxor.u32 %v557, 2147483648
  %v586 = vxor.u32 %v558, 2147483648
  %v587 = vxor.u32 %v559, 2147483648
  %v588 = vmul.f32 %v574, 1.442695
  %v589 = vpow.pop %v588
  %v590 = vmul.f32 %v575, 1.442695
  %v591 = vpow.pop %v590
  %v592 = vmul.f32 %v576, 1.442695
  %v593 = vpow.pop %v592
  %v594 = vmul.f32 %v577, 1.442695
  %v595 = vpow.pop %v594
  %v596 = vmul.f32 %v578, 1.442695
  %v597 = vpow.pop %v596
  %v598 = vmul.f32 %v579, 1.442695
  %v599 = vpow.pop %v598
  %v600 = vmul.f32 %v580, 1.442695
  %v601 = vpow.pop %v600
  %v602 = vmul.f32 %v581, 1.442695
  %v603 = vpow.pop %v602
  %v604 = vmul.f32 %v582, 1.442695
  %v605 = vpow.pop %v604
  %v606 = vmul.f32 %v583, 1.442695
  %v607 = vpow.pop %v606
  %v608 = vmul.f32 %v584, 1.442695
  %v609 = vpow.pop %v608
  %v610 = vmul.f32 %v585, 1.442695
  %v611 = vpow.pop %v610
  %v612 = vmul.f32 %v586, 1.442695
  %v613 = vpow.pop %v612
  %v614 = vmul.f32 %v587, 1.442695
  %v615 = vpow.pop %v614
  %v616 = vadd.f32 %v589, 1.0
  %v617 = vadd.f32 %v591, 1.0
  %v618 = vadd.f32 %v593, 1.0
  %v619 = vadd.f32 %v595, 1.0
  %v620 = vadd.f32 %v597, 1.0
  %v621 = vadd.f32 %v599, 1.0
  %v622 = vadd.f32 %v601, 1.0
  %v623 = vadd.f32 %v603, 1.0
  %v624 = vadd.f32 %v605, 1.0
  %v625 = vadd.f32 %v607, 1.0
  %v626 = vadd.f32 %v609, 1.0
  %v627 = vadd.f32 %v611, 1.0
  %v628 = vadd.f32 %v613, 1.0
  %v629 = vadd.f32 %v615, 1.0
  %v630 = vrcp.pop %v616
  %v631 = vmul.f32 %v616, %v630
  %v632 = vsub.f32 1.0, %v631
  %v633 = vmul.f32 %v630, %v632
  %v634 = vadd.f32 %v630, %v633
  %vm635 = vweird.f32 %v616
  %vm636 = vweird.f32 %v630
  %vm637 = vmor %vm635, %vm636
  %v638 = vsel %vm637, %v630, %v634
  %v639 = vand.u32 2147483647, %v616
  %vm640 = vcmp.eq.f32.partialorder %v639, 8.507059e+37
  %v641 = vand.u32 %v616, 2147483648
  %v642 = vor.u32 1.1754944e-38, %v641
  %v643 = vsel %vm640, %v642, %v638
  %v644 = vmul.f32 1.0, %v643
  %v645 = vrcp.pop %v617
  %v646 = vmul.f32 %v617, %v645
  %v647 = vsub.f32 1.0, %v646
  %v648 = vmul.f32 %v645, %v647
  %v649 = vadd.f32 %v645, %v648
  %vm650 = vweird.f32 %v617
  %vm651 = vweird.f32 %v645
  %vm652 = vmor %vm650, %vm651
  %v653 = vsel %vm652, %v645, %v649
  %v654 = vand.u32 2147483647, %v617
  %vm655 = vcmp.eq.f32.partialorder %v654, 8.507059e+37
  %v656 = vand.u32 %v617, 2147483648
  %v657 = vor.u32 1.1754944e-38, %v656
  %v658 = vsel %vm655, %v657, %v653
  %v659 = vmul.f32 1.0, %v658
  %v660 = vrcp.pop %v618
  %v661 = vmul.f32 %v618, %v660
  %v662 = vsub.f32 1.0, %v661
  %v663 = vmul.f32 %v660, %v662
  %v664 = vadd.f32 %v660, %v663
  %vm665 = vweird.f32 %v618
  %vm666 = vweird.f32 %v660
  %vm667 = vmor %vm665, %vm666
  %v668 = vsel %vm667, %v660, %v664
  %v669 = vand.u32 2147483647, %v618
  %vm670 = vcmp.eq.f32.partialorder %v669, 8.507059e+37
  %v671 = vand.u32 %v618, 2147483648
  %v672 = vor.u32 1.1754944e-38, %v671
  %v673 = vsel %vm670, %v672, %v668
  %v674 = vmul.f32 1.0, %v673
  %v675 = vrcp.pop %v619
  %v676 = vmul.f32 %v619, %v675
  %v677 = vsub.f32 1.0, %v676
  %v678 = vmul.f32 %v675, %v677
  %v679 = vadd.f32 %v675, %v678
  %vm680 = vweird.f32 %v619
  %vm681 = vweird.f32 %v675
  %vm682 = vmor %vm680, %vm681
  %v683 = vsel %vm682, %v675, %v679
  %v684 = vand.u32 2147483647, %v619
  %vm685 = vcmp.eq.f32.partialorder %v684, 8.507059e+37
  %v686 = vand.u32 %v619, 2147483648
  %v687 = vor.u32 1.1754944e-38, %v686
  %v688 = vsel %vm685, %v687, %v683
  %v689 = vmul.f32 1.0, %v688
  %v690 = vrcp.pop %v620
  %v691 = vmul.f32 %v620, %v690
  %v692 = vsub.f32 1.0, %v691
  %v693 = vmul.f32 %v690, %v692
  %v694 = vadd.f32 %v690, %v693
  %vm695 = vweird.f32 %v620
  %vm696 = vweird.f32 %v690
  %vm697 = vmor %vm695, %vm696
  %v698 = vsel %vm697, %v690, %v694
  %v699 = vand.u32 2147483647, %v620
  %vm700 = vcmp.eq.f32.partialorder %v699, 8.507059e+37
  %v701 = vand.u32 %v620, 2147483648
  %v702 = vor.u32 1.1754944e-38, %v701
  %v703 = vsel %vm700, %v702, %v698
  %v704 = vmul.f32 1.0, %v703
  %v705 = vrcp.pop %v621
  %v706 = vmul.f32 %v621, %v705
  %v707 = vsub.f32 1.0, %v706
  %v708 = vmul.f32 %v705, %v707
  %v709 = vadd.f32 %v705, %v708
  %vm710 = vweird.f32 %v621
  %vm711 = vweird.f32 %v705
  %vm712 = vmor %vm710, %vm711
  %v713 = vsel %vm712, %v705, %v709
  %v714 = vand.u32 2147483647, %v621
  %vm715 = vcmp.eq.f32.partialorder %v714, 8.507059e+37
  %v716 = vand.u32 %v621, 2147483648
  %v717 = vor.u32 1.1754944e-38, %v716
  %v718 = vsel %vm715, %v717, %v713
  %v719 = vmul.f32 1.0, %v718
  %v720 = vrcp.pop %v622
  %v721 = vmul.f32 %v622, %v720
  %v722 = vsub.f32 1.0, %v721
  %v723 = vmul.f32 %v720, %v722
  %v724 = vadd.f32 %v720, %v723
  %vm725 = vweird.f32 %v622
  %vm726 = vweird.f32 %v720
  %vm727 = vmor %vm725, %vm726
  %v728 = vsel %vm727, %v720, %v724
  %v729 = vand.u32 2147483647, %v622
  %vm730 = vcmp.eq.f32.partialorder %v729, 8.507059e+37
  %v731 = vand.u32 %v622, 2147483648
  %v732 = vor.u32 1.1754944e-38, %v731
  %v733 = vsel %vm730, %v732, %v728
  %v734 = vmul.f32 1.0, %v733
  %v735 = vrcp.pop %v623
  %v736 = vmul.f32 %v623, %v735
  %v737 = vsub.f32 1.0, %v736
  %v738 = vmul.f32 %v735, %v737
  %v739 = vadd.f32 %v735, %v738
  %vm740 = vweird.f32 %v623
  %vm741 = vweird.f32 %v735
  %vm742 = vmor %vm740, %vm741
  %v743 = vsel %vm742, %v735, %v739
  %v744 = vand.u32 2147483647, %v623
  %vm745 = vcmp.eq.f32.partialorder %v744, 8.507059e+37
  %v746 = vand.u32 %v623, 2147483648
  %v747 = vor.u32 1.1754944e-38, %v746
  %v748 = vsel %vm745, %v747, %v743
  %v749 = vmul.f32 1.0, %v748
  %v750 = vrcp.pop %v624
  %v751 = vmul.f32 %v624, %v750
  %v752 = vsub.f32 1.0, %v751
  %v753 = vmul.f32 %v750, %v752
  %v754 = vadd.f32 %v750, %v753
  %vm755 = vweird.f32 %v624
  %vm756 = vweird.f32 %v750
  %vm757 = vmor %vm755, %vm756
  %v758 = vsel %vm757, %v750, %v754
  %v759 = vand.u32 2147483647, %v624
  %vm760 = vcmp.eq.f32.partialorder %v759, 8.507059e+37
  %v761 = vand.u32 %v624, 2147483648
  %v762 = vor.u32 1.1754944e-38, %v761
  %v763 = vsel %vm760, %v762, %v758
  %v764 = vmul.f32 1.0, %v763
  %v765 = vrcp.pop %v625
  %v766 = vmul.f32 %v625, %v765
  %v767 = vsub.f32 1.0, %v766
  %v768 = vmul.f32 %v765, %v767
  %v769 = vadd.f32 %v765, %v768
  %vm770 = vweird.f32 %v625
  %vm771 = vweird.f32 %v765
  %vm772 = vmor %vm770, %vm771
  %v773 = vsel %vm772, %v765, %v769
  %v774 = vand.u32 2147483647, %v625
  %vm775 = vcmp.eq.f32.partialorder %v774, 8.507059e+37
  %v776 = vand.u32 %v625, 2147483648
  %v777 = vor.u32 1.1754944e-38, %v776
  %v778 = vsel %vm775, %v777, %v773
  %v779 = vmul.f32 1.0, %v778
  %v780 = vrcp.pop %v626
  %v781 = vmul.f32 %v626, %v780
  %v782 = vsub.f32 1.0, %v781
  %v783 = vmul.f32 %v780, %v782
  %v784 = vadd.f32 %v780, %v783
  %vm785 = vweird.f32 %v626
  %vm786 = vweird.f32 %v780
  %vm787 = vmor %vm785, %vm786
  %v788 = vsel %vm787, %v780, %v784
  %v789 = vand.u32 2147483647, %v626
  %vm790 = vcmp.eq.f32.partialorder %v789, 8.507059e+37
  %v791 = vand.u32 %v626, 2147483648
  %v792 = vor.u32 1.1754944e-38, %v791
  %v793 = vsel %vm790, %v792, %v788
  %v794 = vmul.f32 1.0, %v793
  %v795 = vrcp.pop %v627
  %v796 = vmul.f32 %v627, %v795
  %v797 = vsub.f32 1.0, %v796
  %v798 = vmul.f32 %v795, %v797
  %v799 = vadd.f32 %v795, %v798
  %vm800 = vweird.f32 %v627
  %vm801 = vweird.f32 %v795
  %vm802 = vmor %vm800, %vm801
  %v803 = vsel %vm802, %v795, %v799
  %v804 = vand.u32 2147483647, %v627
  %vm805 = vcmp.eq.f32.partialorder %v804, 8.507059e+37
  %v806 = vand.u32 %v627, 2147483648
  %v807 = vor.u32 1.1754944e-38, %v806
  %v808 = vsel %vm805, %v807, %v803
  %v809 = vmul.f32 1.0, %v808
  %v810 = vrcp.pop %v628
  %v811 = vmul.f32 %v628, %v810
  %v812 = vsub.f32 1.0, %v811
  %v813 = vmul.f32 %v810, %v812
  %v814 = vadd.f32 %v810, %v813
  %vm815 = vweird.f32 %v628
  %vm816 = vweird.f32 %v810
  %vm817 = vmor %vm815, %vm816
  %v818 = vsel %vm817, %v810, %v814
  %v819 = vand.u32 2147483647, %v628
  %vm820 = vcmp.eq.f32.partialorder %v819, 8.507059e+37
  %v821 = vand.u32 %v628, 2147483648
  %v822 = vor.u32 1.1754944e-38, %v821
  %v823 = vsel %vm820, %v822, %v818
  %v824 = vmul.f32 1.0, %v823
  %v825 = vrcp.pop %v629
  %v826 = vmul.f32 %v629, %v825
  %v827 = vsub.f32 1.0, %v826
  %v828 = vmul.f32 %v825, %v827
  %v829 = vadd.f32 %v825, %v828
  %vm830 = vweird.f32 %v629
  %vm831 = vweird.f32 %v825
  %vm832 = vmor %vm830, %vm831
  %v833 = vsel %vm832, %v825, %v829
  %v834 = vand.u32 2147483647, %v629
  %vm835 = vcmp.eq.f32.partialorder %v834, 8.507059e+37
  %v836 = vand.u32 %v629, 2147483648
  %v837 = vor.u32 1.1754944e-38, %v836
  %v838 = vsel %vm835, %v837, %v833
  %v839 = vmul.f32 1.0, %v838
  %854 = vrot.lane.b32.xlu0 %v644, 120
  %v855 = vpop.permute.xlu0 %854
  %856 = vrot.lane.b32.xlu0 %v659, 120
  %v857 = vpop.permute.xlu0 %856
  %858 = vrot.lane.b32.xlu0 %v674, 120
  %v859 = vpop.permute.xlu0 %858
  %860 = vrot.lane.b32.xlu0 %v689, 120
  %v861 = vpop.permute.xlu0 %860
  %862 = vrot.lane.b32.xlu0 %v704, 120
  %v863 = vpop.permute.xlu0 %862
  %864 = vrot.lane.b32.xlu0 %v719, 120
  %v865 = vpop.permute.xlu0 %864
  %866 = vrot.lane.b32.xlu0 %v734, 120
  %v867 = vpop.permute.xlu0 %866
  %868 = vrot.lane.b32.xlu0 %v749, 120
  %v869 = vpop.permute.xlu0 %868
  %870 = vrot.lane.b32.xlu0 %v764, 120
  %v871 = vpop.permute.xlu0 %870
  %872 = vrot.lane.b32.xlu0 %v779, 120
  %v873 = vpop.permute.xlu0 %872
  %874 = vrot.lane.b32.xlu0 %v794, 120
  %v875 = vpop.permute.xlu0 %874
  %876 = vrot.lane.b32.xlu0 %v809, 120
  %v877 = vpop.permute.xlu0 %876
  %878 = vrot.lane.b32.xlu0 %v824, 120
  %v879 = vpop.permute.xlu0 %878
  %880 = vrot.lane.b32.xlu0 %v839, 120
  %v881 = vpop.permute.xlu0 %880
  %v896 = vmul.f32 %v560, %v855
  %v897 = vmul.f32 %v561, %v857
  %v898 = vmul.f32 %v562, %v859
  %v899 = vmul.f32 %v563, %v861
  %v900 = vmul.f32 %v564, %v863
  %v901 = vmul.f32 %v565, %v865
  %v902 = vmul.f32 %v566, %v867
  %v903 = vmul.f32 %v567, %v869
  %v904 = vmul.f32 %v568, %v871
  %v905 = vmul.f32 %v569, %v873
  %v906 = vmul.f32 %v570, %v875
  %v907 = vmul.f32 %v571, %v877
  %v908 = vmul.f32 %v572, %v879
  %v909 = vmul.f32 %v573, %v881
  %v910 = vld [vmem:[%s7] sm:$0xff]
  %v911 = vpack.c.bf16 %v897, %v896
  %v912 = vpack.c.bf16 %v899, %v898
  %v913 = vpack.c.bf16 %v901, %v900
  %v914 = vpack.c.bf16 %v903, %v902
  %v915 = vpack.c.bf16 %v905, %v904
  %v916 = vpack.c.bf16 %v907, %v906
  %v917 = vpack.c.bf16 %v909, %v908
  %v918 = vpack.c.bf16 %v910, %v910
  %v919 = vld [vmem:[%s8] sm:$0x1]
  %v921 = vperm.slane %v919, 0
  %v924 = vsel %vm88, %v911, 0
  %v927 = vsel %vm88, %v912, 0
  %v930 = vsel %vm88, %v913, 0
  %v933 = vsel %vm88, %v914, 0
  %v936 = vsel %vm88, %v915, 0
  %v939 = vsel %vm88, %v916, 0
  %v942 = vsel %vm88, %v917, 0
  %v945 = vsel %vm269, %v918, 0
  %947 = vmatpush.bf16.msra.mxu0 0
  %948 = vmatpush.bf16.msra.mxu0 0
  %949 = vmatpush.bf16.msra.mxu0 0
  %950 = vmatpush.bf16.msra.mxu0 0
  %951 = vmatpush.bf16.msra.mxu0 0
  %952 = vmatpush.bf16.msra.mxu0 0
  %953 = vmatpush.bf16.msra.mxu0 0
  %954 = vmatpush.bf16.msra.mxu0 %v945
  %955 = vmatmul.bf16.gmra.mxu0 %v924
  %v956 = vpop.f32.mrf.mxu0
  %v957 = vpop.f32.mrf.mxu0
  %958 = vmatmul.bf16.gmra.mxu0 %v927
  %v959 = vpop.f32.mrf.mxu0
  %v960 = vpop.f32.mrf.mxu0
  %961 = vmatmul.bf16.gmra.mxu0 %v930
  %v962 = vpop.f32.mrf.mxu0
  %v963 = vpop.f32.mrf.mxu0
  %v964 = vadd.f32 %v921, %v963
  %965 = vmatmul.bf16.gmra.mxu0 %v933
  %v966 = vpop.f32.mrf.mxu0
  %v967 = vadd.f32 %v921, %v966
  %v968 = vpop.f32.mrf.mxu0
  %969 = vmatmul.bf16.gmra.mxu0 %v936
  %v970 = vpop.f32.mrf.mxu0
  %v971 = vpop.f32.mrf.mxu0
  %972 = vmatmul.bf16.gmra.mxu0 %v939
  %v973 = vpop.f32.mrf.mxu0
  %v974 = vpop.f32.mrf.mxu0
  %975 = vmatmul.bf16.gmra.mxu0 %v942
  %v976 = vpop.f32.mrf.mxu0
  %v977 = vadd.f32 %v921, %v976
  %v978 = vpop.f32.mrf.mxu0
  %v979 = vadd.f32 %v921, %v978
  %980 = vdwg.mxu0
  %v981 = vpack.c.bf16 %v896, %v896
  %v982 = vpack.c.bf16 %v897, %v897
  %v983 = vpack.c.bf16 %v898, %v898
  %v984 = vpack.c.bf16 %v899, %v899
  %v985 = vpack.c.bf16 %v900, %v900
  %v986 = vpack.c.bf16 %v901, %v901
  %v987 = vpack.c.bf16 %v902, %v902
  %v988 = vpack.c.bf16 %v903, %v903
  %v989 = vpack.c.bf16 %v904, %v904
  %v990 = vpack.c.bf16 %v905, %v905
  %v991 = vpack.c.bf16 %v906, %v906
  %v992 = vpack.c.bf16 %v907, %v907
  %v993 = vpack.c.bf16 %v908, %v908
  %v994 = vpack.c.bf16 %v909, %v909
  %v996 = vsel %vm88, %v373, 0
  %v999 = vsel %vm269, %v981, 0
  %1001 = vmatpush.bf16.msra.mxu0 0
  %1002 = vmatpush.bf16.msra.mxu0 0
  %1003 = vmatpush.bf16.msra.mxu0 0
  %1004 = vmatpush.bf16.msra.mxu0 0
  %1005 = vmatpush.bf16.msra.mxu0 0
  %1006 = vmatpush.bf16.msra.mxu0 0
  %1007 = vmatpush.bf16.msra.mxu0 0
  %1008 = vmatpush.bf16.msra.mxu0 %v999
  %1009 = vmatmul.bf16.gmra.mxu0 %v996
  %v1010 = vpop.f32.mrf.mxu0
  %v1011 = vadd.f32 0.0, %v1010
  %v1012 = vpop.f32.mrf.mxu0
  %1013 = vdwg.mxu0
  %v1015 = vsel %vm269, %v982, 0
  %1017 = vmatpush.bf16.msra.mxu0 0
  %1018 = vmatpush.bf16.msra.mxu0 0
  %1019 = vmatpush.bf16.msra.mxu0 0
  %1020 = vmatpush.bf16.msra.mxu0 0
  %1021 = vmatpush.bf16.msra.mxu0 0
  %1022 = vmatpush.bf16.msra.mxu0 0
  %1023 = vmatpush.bf16.msra.mxu0 0
  %1024 = vmatpush.bf16.msra.mxu0 %v1015
  %1025 = vmatmul.bf16.gmra.mxu0 %v996
  %v1026 = vpop.f32.mrf.mxu0
  %v1027 = vadd.f32 0.0, %v1026
  %v1028 = vpop.f32.mrf.mxu0
  %1029 = vdwg.mxu0
  %v1031 = vsel %vm269, %v983, 0
  %1033 = vmatpush.bf16.msra.mxu0 0
  %1034 = vmatpush.bf16.msra.mxu0 0
  %1035 = vmatpush.bf16.msra.mxu0 0
  %1036 = vmatpush.bf16.msra.mxu0 0
  %1037 = vmatpush.bf16.msra.mxu0 0
  %1038 = vmatpush.bf16.msra.mxu0 0
  %1039 = vmatpush.bf16.msra.mxu0 0
  %1040 = vmatpush.bf16.msra.mxu0 %v1031
  %1041 = vmatmul.bf16.gmra.mxu0 %v996
  %v1042 = vpop.f32.mrf.mxu0
  %v1043 = vadd.f32 0.0, %v1042
  %v1044 = vpop.f32.mrf.mxu0
  %1045 = vdwg.mxu0
  %v1047 = vsel %vm269, %v984, 0
  %1049 = vmatpush.bf16.msra.mxu0 0
  %1050 = vmatpush.bf16.msra.mxu0 0
  %1051 = vmatpush.bf16.msra.mxu0 0
  %1052 = vmatpush.bf16.msra.mxu0 0
  %1053 = vmatpush.bf16.msra.mxu0 0
  %1054 = vmatpush.bf16.msra.mxu0 0
  %1055 = vmatpush.bf16.msra.mxu0 0
  %1056 = vmatpush.bf16.msra.mxu0 %v1047
  %1057 = vmatmul.bf16.gmra.mxu0 %v996
  %v1058 = vpop.f32.mrf.mxu0
  %v1059 = vadd.f32 0.0, %v1058
  %v1060 = vpop.f32.mrf.mxu0
  %1061 = vdwg.mxu0
  %v1063 = vsel %vm269, %v985, 0
  %1065 = vmatpush.bf16.msra.mxu0 0
  %1066 = vmatpush.bf16.msra.mxu0 0
  %1067 = vmatpush.bf16.msra.mxu0 0
  %1068 = vmatpush.bf16.msra.mxu0 0
  %1069 = vmatpush.bf16.msra.mxu0 0
  %1070 = vmatpush.bf16.msra.mxu0 0
  %1071 = vmatpush.bf16.msra.mxu0 0
  %1072 = vmatpush.bf16.msra.mxu0 %v1063
  %1073 = vmatmul.bf16.gmra.mxu0 %v996
  %v1074 = vpop.f32.mrf.mxu0
  %v1075 = vadd.f32 0.0, %v1074
  %v1076 = vpop.f32.mrf.mxu0
  %1077 = vdwg.mxu0
  %v1079 = vsel %vm269, %v986, 0
  %1081 = vmatpush.bf16.msra.mxu0 0
  %1082 = vmatpush.bf16.msra.mxu0 0
  %1083 = vmatpush.bf16.msra.mxu0 0
  %1084 = vmatpush.bf16.msra.mxu0 0
  %1085 = vmatpush.bf16.msra.mxu0 0
  %1086 = vmatpush.bf16.msra.mxu0 0
  %1087 = vmatpush.bf16.msra.mxu0 0
  %1088 = vmatpush.bf16.msra.mxu0 %v1079
  %1089 = vmatmul.bf16.gmra.mxu0 %v996
  %v1090 = vpop.f32.mrf.mxu0
  %v1091 = vadd.f32 0.0, %v1090
  %v1092 = vpop.f32.mrf.mxu0
  %1093 = vdwg.mxu0
  %v1095 = vsel %vm269, %v987, 0
  %1097 = vmatpush.bf16.msra.mxu0 0
  %1098 = vmatpush.bf16.msra.mxu0 0
  %1099 = vmatpush.bf16.msra.mxu0 0
  %1100 = vmatpush.bf16.msra.mxu0 0
  %1101 = vmatpush.bf16.msra.mxu0 0
  %1102 = vmatpush.bf16.msra.mxu0 0
  %1103 = vmatpush.bf16.msra.mxu0 0
  %1104 = vmatpush.bf16.msra.mxu0 %v1095
  %1105 = vmatmul.bf16.gmra.mxu0 %v996
  %v1106 = vpop.f32.mrf.mxu0
  %v1107 = vadd.f32 0.0, %v1106
  %v1108 = vpop.f32.mrf.mxu0
  %1109 = vdwg.mxu0
  %v1111 = vsel %vm269, %v988, 0
  %1113 = vmatpush.bf16.msra.mxu0 0
  %1114 = vmatpush.bf16.msra.mxu0 0
  %1115 = vmatpush.bf16.msra.mxu0 0
  %1116 = vmatpush.bf16.msra.mxu0 0
  %1117 = vmatpush.bf16.msra.mxu0 0
  %1118 = vmatpush.bf16.msra.mxu0 0
  %1119 = vmatpush.bf16.msra.mxu0 0
  %1120 = vmatpush.bf16.msra.mxu0 %v1111
  %1121 = vmatmul.bf16.gmra.mxu0 %v996
  %v1122 = vpop.f32.mrf.mxu0
  %v1123 = vadd.f32 0.0, %v1122
  %v1124 = vpop.f32.mrf.mxu0
  %1125 = vdwg.mxu0
  %v1127 = vsel %vm269, %v989, 0
  %1129 = vmatpush.bf16.msra.mxu0 0
  %1130 = vmatpush.bf16.msra.mxu0 0
  %1131 = vmatpush.bf16.msra.mxu0 0
  %1132 = vmatpush.bf16.msra.mxu0 0
  %1133 = vmatpush.bf16.msra.mxu0 0
  %1134 = vmatpush.bf16.msra.mxu0 0
  %1135 = vmatpush.bf16.msra.mxu0 0
  %1136 = vmatpush.bf16.msra.mxu0 %v1127
  %1137 = vmatmul.bf16.gmra.mxu0 %v996
  %v1138 = vpop.f32.mrf.mxu0
  %v1139 = vadd.f32 0.0, %v1138
  %v1140 = vpop.f32.mrf.mxu0
  %1141 = vdwg.mxu0
  %v1143 = vsel %vm269, %v990, 0
  %1145 = vmatpush.bf16.msra.mxu0 0
  %1146 = vmatpush.bf16.msra.mxu0 0
  %1147 = vmatpush.bf16.msra.mxu0 0
  %1148 = vmatpush.bf16.msra.mxu0 0
  %1149 = vmatpush.bf16.msra.mxu0 0
  %1150 = vmatpush.bf16.msra.mxu0 0
  %1151 = vmatpush.bf16.msra.mxu0 0
  %1152 = vmatpush.bf16.msra.mxu0 %v1143
  %1153 = vmatmul.bf16.gmra.mxu0 %v996
  %v1154 = vpop.f32.mrf.mxu0
  %v1155 = vadd.f32 0.0, %v1154
  %v1156 = vpop.f32.mrf.mxu0
  %1157 = vdwg.mxu0
  %v1159 = vsel %vm269, %v991, 0
  %1161 = vmatpush.bf16.msra.mxu0 0
  %1162 = vmatpush.bf16.msra.mxu0 0
  %1163 = vmatpush.bf16.msra.mxu0 0
  %1164 = vmatpush.bf16.msra.mxu0 0
  %1165 = vmatpush.bf16.msra.mxu0 0
  %1166 = vmatpush.bf16.msra.mxu0 0
  %1167 = vmatpush.bf16.msra.mxu0 0
  %1168 = vmatpush.bf16.msra.mxu0 %v1159
  %1169 = vmatmul.bf16.gmra.mxu0 %v996
  %v1170 = vpop.f32.mrf.mxu0
  %v1171 = vadd.f32 0.0, %v1170
  %v1172 = vpop.f32.mrf.mxu0
  %1173 = vdwg.mxu0
  %v1175 = vsel %vm269, %v992, 0
  %1177 = vmatpush.bf16.msra.mxu0 0
  %1178 = vmatpush.bf16.msra.mxu0 0
  %1179 = vmatpush.bf16.msra.mxu0 0
  %1180 = vmatpush.bf16.msra.mxu0 0
  %1181 = vmatpush.bf16.msra.mxu0 0
  %1182 = vmatpush.bf16.msra.mxu0 0
  %1183 = vmatpush.bf16.msra.mxu0 0
  %1184 = vmatpush.bf16.msra.mxu0 %v1175
  %1185 = vmatmul.bf16.gmra.mxu0 %v996
  %v1186 = vpop.f32.mrf.mxu0
  %v1187 = vadd.f32 0.0, %v1186
  %v1188 = vpop.f32.mrf.mxu0
  %1189 = vdwg.mxu0
  %v1191 = vsel %vm269, %v993, 0
  %1193 = vmatpush.bf16.msra.mxu0 0
  %1194 = vmatpush.bf16.msra.mxu0 0
  %1195 = vmatpush.bf16.msra.mxu0 0
  %1196 = vmatpush.bf16.msra.mxu0 0
  %1197 = vmatpush.bf16.msra.mxu0 0
  %1198 = vmatpush.bf16.msra.mxu0 0
  %1199 = vmatpush.bf16.msra.mxu0 0
  %1200 = vmatpush.bf16.msra.mxu0 %v1191
  %1201 = vmatmul.bf16.gmra.mxu0 %v996
  %v1202 = vpop.f32.mrf.mxu0
  %v1203 = vadd.f32 0.0, %v1202
  %v1204 = vpop.f32.mrf.mxu0
  %1205 = vdwg.mxu0
  %v1207 = vsel %vm269, %v994, 0
  %1209 = vmatpush.bf16.msra.mxu0 0
  %1210 = vmatpush.bf16.msra.mxu0 0
  %1211 = vmatpush.bf16.msra.mxu0 0
  %1212 = vmatpush.bf16.msra.mxu0 0
  %1213 = vmatpush.bf16.msra.mxu0 0
  %1214 = vmatpush.bf16.msra.mxu0 0
  %1215 = vmatpush.bf16.msra.mxu0 0
  %1216 = vmatpush.bf16.msra.mxu0 %v1207
  %1217 = vmatmul.bf16.gmra.mxu0 %v996
  %v1218 = vpop.f32.mrf.mxu0
  %v1219 = vadd.f32 0.0, %v1218
  %v1220 = vpop.f32.mrf.mxu0
  %1221 = vdwg.mxu0
  %v1222 = vpack.c.bf16 %v1011, %v1011
  %v1223 = vpack.c.bf16 %v1027, %v1027
  %v1224 = vpack.c.bf16 %v1043, %v1043
  %v1225 = vpack.c.bf16 %v1059, %v1059
  %v1226 = vpack.c.bf16 %v1075, %v1075
  %v1227 = vpack.c.bf16 %v1091, %v1091
  %v1228 = vpack.c.bf16 %v1107, %v1107
  %v1229 = vpack.c.bf16 %v1123, %v1123
  %v1230 = vpack.c.bf16 %v1139, %v1139
  %v1231 = vpack.c.bf16 %v1155, %v1155
  %v1232 = vpack.c.bf16 %v1171, %v1171
  %v1233 = vpack.c.bf16 %v1187, %v1187
  %v1234 = vpack.c.bf16 %v1203, %v1203
  %v1235 = vpack.c.bf16 %v1219, %v1219
  %v1237 = vsel %vm269, %v1222, 0
  %1239 = vmatpush.bf16.msra.mxu0 0
  %1240 = vmatpush.bf16.msra.mxu0 0
  %1241 = vmatpush.bf16.msra.mxu0 0
  %1242 = vmatpush.bf16.msra.mxu0 0
  %1243 = vmatpush.bf16.msra.mxu0 0
  %1244 = vmatpush.bf16.msra.mxu0 0
  %1245 = vmatpush.bf16.msra.mxu0 0
  %1246 = vmatpush.bf16.msra.mxu0 %v1237
  %1247 = vmatmul.bf16.gmra.mxu0 %v996
  %v1248 = vpop.f32.mrf.mxu0
  %v1249 = vadd.f32 0.0, %v1248
  %v1250 = vpop.f32.mrf.mxu0
  %1251 = vdwg.mxu0
  %v1253 = vsel %vm269, %v1223, 0
  %1255 = vmatpush.bf16.msra.mxu0 0
  %1256 = vmatpush.bf16.msra.mxu0 0
  %1257 = vmatpush.bf16.msra.mxu0 0
  %1258 = vmatpush.bf16.msra.mxu0 0
  %1259 = vmatpush.bf16.msra.mxu0 0
  %1260 = vmatpush.bf16.msra.mxu0 0
  %1261 = vmatpush.bf16.msra.mxu0 0
  %1262 = vmatpush.bf16.msra.mxu0 %v1253
  %1263 = vmatmul.bf16.gmra.mxu0 %v996
  %v1264 = vpop.f32.mrf.mxu0
  %v1265 = vadd.f32 0.0, %v1264
  %v1266 = vpop.f32.mrf.mxu0
  %1267 = vdwg.mxu0
  %v1269 = vsel %vm269, %v1224, 0
  %1271 = vmatpush.bf16.msra.mxu0 0
  %1272 = vmatpush.bf16.msra.mxu0 0
  %1273 = vmatpush.bf16.msra.mxu0 0
  %1274 = vmatpush.bf16.msra.mxu0 0
  %1275 = vmatpush.bf16.msra.mxu0 0
  %1276 = vmatpush.bf16.msra.mxu0 0
  %1277 = vmatpush.bf16.msra.mxu0 0
  %1278 = vmatpush.bf16.msra.mxu0 %v1269
  %1279 = vmatmul.bf16.gmra.mxu0 %v996
  %v1280 = vpop.f32.mrf.mxu0
  %v1281 = vadd.f32 0.0, %v1280
  %v1282 = vpop.f32.mrf.mxu0
  %1283 = vdwg.mxu0
  %v1285 = vsel %vm269, %v1225, 0
  %1287 = vmatpush.bf16.msra.mxu0 0
  %1288 = vmatpush.bf16.msra.mxu0 0
  %1289 = vmatpush.bf16.msra.mxu0 0
  %1290 = vmatpush.bf16.msra.mxu0 0
  %1291 = vmatpush.bf16.msra.mxu0 0
  %1292 = vmatpush.bf16.msra.mxu0 0
  %1293 = vmatpush.bf16.msra.mxu0 0
  %1294 = vmatpush.bf16.msra.mxu0 %v1285
  %1295 = vmatmul.bf16.gmra.mxu0 %v996
  %v1296 = vpop.f32.mrf.mxu0
  %v1297 = vadd.f32 0.0, %v1296
  %v1298 = vpop.f32.mrf.mxu0
  %1299 = vdwg.mxu0
  %v1301 = vsel %vm269, %v1226, 0
  %1303 = vmatpush.bf16.msra.mxu0 0
  %1304 = vmatpush.bf16.msra.mxu0 0
  %1305 = vmatpush.bf16.msra.mxu0 0
  %1306 = vmatpush.bf16.msra.mxu0 0
  %1307 = vmatpush.bf16.msra.mxu0 0
  %1308 = vmatpush.bf16.msra.mxu0 0
  %1309 = vmatpush.bf16.msra.mxu0 0
  %1310 = vmatpush.bf16.msra.mxu0 %v1301
  %1311 = vmatmul.bf16.gmra.mxu0 %v996
  %v1312 = vpop.f32.mrf.mxu0
  %v1313 = vadd.f32 0.0, %v1312
  %v1314 = vpop.f32.mrf.mxu0
  %1315 = vdwg.mxu0
  %v1317 = vsel %vm269, %v1227, 0
  %1319 = vmatpush.bf16.msra.mxu0 0
  %1320 = vmatpush.bf16.msra.mxu0 0
  %1321 = vmatpush.bf16.msra.mxu0 0
  %1322 = vmatpush.bf16.msra.mxu0 0
  %1323 = vmatpush.bf16.msra.mxu0 0
  %1324 = vmatpush.bf16.msra.mxu0 0
  %1325 = vmatpush.bf16.msra.mxu0 0
  %1326 = vmatpush.bf16.msra.mxu0 %v1317
  %1327 = vmatmul.bf16.gmra.mxu0 %v996
  %v1328 = vpop.f32.mrf.mxu0
  %v1329 = vadd.f32 0.0, %v1328
  %v1330 = vpop.f32.mrf.mxu0
  %1331 = vdwg.mxu0
  %v1333 = vsel %vm269, %v1228, 0
  %1335 = vmatpush.bf16.msra.mxu0 0
  %1336 = vmatpush.bf16.msra.mxu0 0
  %1337 = vmatpush.bf16.msra.mxu0 0
  %1338 = vmatpush.bf16.msra.mxu0 0
  %1339 = vmatpush.bf16.msra.mxu0 0
  %1340 = vmatpush.bf16.msra.mxu0 0
  %1341 = vmatpush.bf16.msra.mxu0 0
  %1342 = vmatpush.bf16.msra.mxu0 %v1333
  %1343 = vmatmul.bf16.gmra.mxu0 %v996
  %v1344 = vpop.f32.mrf.mxu0
  %v1345 = vadd.f32 0.0, %v1344
  %v1346 = vpop.f32.mrf.mxu0
  %1347 = vdwg.mxu0
  %v1349 = vsel %vm269, %v1229, 0
  %1351 = vmatpush.bf16.msra.mxu0 0
  %1352 = vmatpush.bf16.msra.mxu0 0
  %1353 = vmatpush.bf16.msra.mxu0 0
  %1354 = vmatpush.bf16.msra.mxu0 0
  %1355 = vmatpush.bf16.msra.mxu0 0
  %1356 = vmatpush.bf16.msra.mxu0 0
  %1357 = vmatpush.bf16.msra.mxu0 0
  %1358 = vmatpush.bf16.msra.mxu0 %v1349
  %1359 = vmatmul.bf16.gmra.mxu0 %v996
  %v1360 = vpop.f32.mrf.mxu0
  %v1361 = vadd.f32 0.0, %v1360
  %v1362 = vpop.f32.mrf.mxu0
  %1363 = vdwg.mxu0
  %v1365 = vsel %vm269, %v1230, 0
  %1367 = vmatpush.bf16.msra.mxu0 0
  %1368 = vmatpush.bf16.msra.mxu0 0
  %1369 = vmatpush.bf16.msra.mxu0 0
  %1370 = vmatpush.bf16.msra.mxu0 0
  %1371 = vmatpush.bf16.msra.mxu0 0
  %1372 = vmatpush.bf16.msra.mxu0 0
  %1373 = vmatpush.bf16.msra.mxu0 0
  %1374 = vmatpush.bf16.msra.mxu0 %v1365
  %1375 = vmatmul.bf16.gmra.mxu0 %v996
  %v1376 = vpop.f32.mrf.mxu0
  %v1377 = vadd.f32 0.0, %v1376
  %v1378 = vpop.f32.mrf.mxu0
  %1379 = vdwg.mxu0
  %v1381 = vsel %vm269, %v1231, 0
  %1383 = vmatpush.bf16.msra.mxu0 0
  %1384 = vmatpush.bf16.msra.mxu0 0
  %1385 = vmatpush.bf16.msra.mxu0 0
  %1386 = vmatpush.bf16.msra.mxu0 0
  %1387 = vmatpush.bf16.msra.mxu0 0
  %1388 = vmatpush.bf16.msra.mxu0 0
  %1389 = vmatpush.bf16.msra.mxu0 0
  %1390 = vmatpush.bf16.msra.mxu0 %v1381
  %1391 = vmatmul.bf16.gmra.mxu0 %v996
  %v1392 = vpop.f32.mrf.mxu0
  %v1393 = vadd.f32 0.0, %v1392
  %v1394 = vpop.f32.mrf.mxu0
  %1395 = vdwg.mxu0
  %v1397 = vsel %vm269, %v1232, 0
  %1399 = vmatpush.bf16.msra.mxu0 0
  %1400 = vmatpush.bf16.msra.mxu0 0
  %1401 = vmatpush.bf16.msra.mxu0 0
  %1402 = vmatpush.bf16.msra.mxu0 0
  %1403 = vmatpush.bf16.msra.mxu0 0
  %1404 = vmatpush.bf16.msra.mxu0 0
  %1405 = vmatpush.bf16.msra.mxu0 0
  %1406 = vmatpush.bf16.msra.mxu0 %v1397
  %1407 = vmatmul.bf16.gmra.mxu0 %v996
  %v1408 = vpop.f32.mrf.mxu0
  %v1409 = vadd.f32 0.0, %v1408
  %v1410 = vpop.f32.mrf.mxu0
  %1411 = vdwg.mxu0
  %v1413 = vsel %vm269, %v1233, 0
  %1415 = vmatpush.bf16.msra.mxu0 0
  %1416 = vmatpush.bf16.msra.mxu0 0
  %1417 = vmatpush.bf16.msra.mxu0 0
  %1418 = vmatpush.bf16.msra.mxu0 0
  %1419 = vmatpush.bf16.msra.mxu0 0
  %1420 = vmatpush.bf16.msra.mxu0 0
  %1421 = vmatpush.bf16.msra.mxu0 0
  %1422 = vmatpush.bf16.msra.mxu0 %v1413
  %1423 = vmatmul.bf16.gmra.mxu0 %v996
  %v1424 = vpop.f32.mrf.mxu0
  %v1425 = vadd.f32 0.0, %v1424
  %v1426 = vpop.f32.mrf.mxu0
  %1427 = vdwg.mxu0
  %v1429 = vsel %vm269, %v1234, 0
  %1431 = vmatpush.bf16.msra.mxu0 0
  %1432 = vmatpush.bf16.msra.mxu0 0
  %1433 = vmatpush.bf16.msra.mxu0 0
  %1434 = vmatpush.bf16.msra.mxu0 0
  %1435 = vmatpush.bf16.msra.mxu0 0
  %1436 = vmatpush.bf16.msra.mxu0 0
  %1437 = vmatpush.bf16.msra.mxu0 0
  %1438 = vmatpush.bf16.msra.mxu0 %v1429
  %1439 = vmatmul.bf16.gmra.mxu0 %v996
  %v1440 = vpop.f32.mrf.mxu0
  %v1441 = vadd.f32 0.0, %v1440
  %v1442 = vpop.f32.mrf.mxu0
  %1443 = vdwg.mxu0
  %v1445 = vsel %vm269, %v1235, 0
  %1447 = vmatpush.bf16.msra.mxu0 0
  %1448 = vmatpush.bf16.msra.mxu0 0
  %1449 = vmatpush.bf16.msra.mxu0 0
  %1450 = vmatpush.bf16.msra.mxu0 0
  %1451 = vmatpush.bf16.msra.mxu0 0
  %1452 = vmatpush.bf16.msra.mxu0 0
  %1453 = vmatpush.bf16.msra.mxu0 0
  %1454 = vmatpush.bf16.msra.mxu0 %v1445
  %1455 = vmatmul.bf16.gmra.mxu0 %v996
  %v1456 = vpop.f32.mrf.mxu0
  %v1457 = vadd.f32 0.0, %v1456
  %v1458 = vpop.f32.mrf.mxu0
  %1459 = vdwg.mxu0
  %v1460 = vld [vmem:[%s9] sm:$0xff]
  %v1461 = vld [vmem:[%s9 + $0x8] sm:$0xff]
  %v1462 = vld [vmem:[%s9 + $0x10] sm:$0xff]
  %v1463 = vpack.c.bf16 %v1460, %v1460
  %v1464 = vpack.c.bf16 %v1027, %v1011
  %v1465 = vpack.c.bf16 %v1059, %v1043
  %v1466 = vpack.c.bf16 %v1091, %v1075
  %v1467 = vpack.c.bf16 %v1123, %v1107
  %v1468 = vpack.c.bf16 %v1155, %v1139
  %v1469 = vpack.c.bf16 %v1187, %v1171
  %v1470 = vpack.c.bf16 %v1219, %v1203
  %v1471 = vpack.c.bf16 %v1461, %v1461
  %v1473 = vsel %vm88, %v1464, 0
  %v1476 = vsel %vm88, %v1465, 0
  %v1479 = vsel %vm88, %v1466, 0
  %v1482 = vsel %vm88, %v1467, 0
  %v1485 = vsel %vm88, %v1468, 0
  %v1488 = vsel %vm88, %v1469, 0
  %v1491 = vsel %vm88, %v1470, 0
  %v1494 = vsel %vm269, %v1471, 0
  %1496 = vmatpush.bf16.msra.mxu0 0
  %1497 = vmatpush.bf16.msra.mxu0 0
  %1498 = vmatpush.bf16.msra.mxu0 0
  %1499 = vmatpush.bf16.msra.mxu0 0
  %1500 = vmatpush.bf16.msra.mxu0 0
  %1501 = vmatpush.bf16.msra.mxu0 0
  %1502 = vmatpush.bf16.msra.mxu0 0
  %1503 = vmatpush.bf16.msra.mxu0 %v1494
  %1504 = vmatmul.bf16.gmra.mxu0 %v1473
  %v1505 = vpop.f32.mrf.mxu0
  %v1506 = vadd.f32 0.0, %v1505
  %v1507 = vpop.f32.mrf.mxu0
  %v1508 = vadd.f32 0.0, %v1507
  %1509 = vmatmul.bf16.gmra.mxu0 %v1476
  %v1510 = vpop.f32.mrf.mxu0
  %v1511 = vadd.f32 0.0, %v1510
  %v1512 = vpop.f32.mrf.mxu0
  %v1513 = vadd.f32 0.0, %v1512
  %1514 = vmatmul.bf16.gmra.mxu0 %v1479
  %v1515 = vpop.f32.mrf.mxu0
  %v1516 = vadd.f32 0.0, %v1515
  %v1517 = vpop.f32.mrf.mxu0
  %v1518 = vadd.f32 0.0, %v1517
  %1519 = vmatmul.bf16.gmra.mxu0 %v1482
  %v1520 = vpop.f32.mrf.mxu0
  %v1521 = vadd.f32 0.0, %v1520
  %v1522 = vpop.f32.mrf.mxu0
  %v1523 = vadd.f32 0.0, %v1522
  %1524 = vmatmul.bf16.gmra.mxu0 %v1485
  %v1525 = vpop.f32.mrf.mxu0
  %v1526 = vadd.f32 0.0, %v1525
  %v1527 = vpop.f32.mrf.mxu0
  %v1528 = vadd.f32 0.0, %v1527
  %1529 = vmatmul.bf16.gmra.mxu0 %v1488
  %v1530 = vpop.f32.mrf.mxu0
  %v1531 = vadd.f32 0.0, %v1530
  %v1532 = vpop.f32.mrf.mxu0
  %v1533 = vadd.f32 0.0, %v1532
  %1534 = vmatmul.bf16.gmra.mxu0 %v1491
  %v1535 = vpop.f32.mrf.mxu0
  %v1536 = vadd.f32 0.0, %v1535
  %v1537 = vpop.f32.mrf.mxu0
  %v1538 = vadd.f32 0.0, %v1537
  %1539 = vdwg.mxu0
  %v1541 = vsel %vm269, %v1463, 0
  %1543 = vmatpush.bf16.msra.mxu0 0
  %1544 = vmatpush.bf16.msra.mxu0 0
  %1545 = vmatpush.bf16.msra.mxu0 0
  %1546 = vmatpush.bf16.msra.mxu0 0
  %1547 = vmatpush.bf16.msra.mxu0 0
  %1548 = vmatpush.bf16.msra.mxu0 0
  %1549 = vmatpush.bf16.msra.mxu0 0
  %1550 = vmatpush.bf16.msra.mxu0 %v1541
  %1551 = vmatmul.bf16.gmra.mxu0 %v924
  %v1552 = vpop.f32.mrf.mxu0
  %v1553 = vadd.f32 %v1506, %v1552
  %v1554 = vpop.f32.mrf.mxu0
  %v1555 = vadd.f32 %v1508, %v1554
  %1556 = vmatmul.bf16.gmra.mxu0 %v927
  %v1557 = vpop.f32.mrf.mxu0
  %v1558 = vadd.f32 %v1511, %v1557
  %v1559 = vpop.f32.mrf.mxu0
  %v1560 = vadd.f32 %v1513, %v1559
  %1561 = vmatmul.bf16.gmra.mxu0 %v930
  %v1562 = vpop.f32.mrf.mxu0
  %v1563 = vadd.f32 %v1516, %v1562
  %v1564 = vpop.f32.mrf.mxu0
  %v1565 = vadd.f32 %v1518, %v1564
  %1566 = vmatmul.bf16.gmra.mxu0 %v933
  %v1567 = vpop.f32.mrf.mxu0
  %v1568 = vadd.f32 %v1521, %v1567
  %v1569 = vpop.f32.mrf.mxu0
  %v1570 = vadd.f32 %v1523, %v1569
  %1571 = vmatmul.bf16.gmra.mxu0 %v936
  %v1572 = vpop.f32.mrf.mxu0
  %v1573 = vadd.f32 %v1526, %v1572
  %v1574 = vpop.f32.mrf.mxu0
  %v1575 = vadd.f32 %v1528, %v1574
  %1576 = vmatmul.bf16.gmra.mxu0 %v939
  %v1577 = vpop.f32.mrf.mxu0
  %v1578 = vadd.f32 %v1531, %v1577
  %v1579 = vpop.f32.mrf.mxu0
  %v1580 = vadd.f32 %v1533, %v1579
  %1581 = vmatmul.bf16.gmra.mxu0 %v942
  %v1582 = vpop.f32.mrf.mxu0
  %v1583 = vadd.f32 %v1536, %v1582
  %v1584 = vpop.f32.mrf.mxu0
  %v1585 = vadd.f32 %v1538, %v1584
  %1586 = vdwg.mxu0
  %v1587 = vpack.c.bf16 %v1265, %v1249
  %v1588 = vpack.c.bf16 %v1297, %v1281
  %v1589 = vpack.c.bf16 %v1329, %v1313
  %v1590 = vpack.c.bf16 %v1361, %v1345
  %v1591 = vpack.c.bf16 %v1393, %v1377
  %v1592 = vpack.c.bf16 %v1425, %v1409
  %v1593 = vpack.c.bf16 %v1457, %v1441
  %v1594 = vpack.c.bf16 %v1462, %v1462
  %v1596 = vsel %vm88, %v1587, 0
  %v1599 = vsel %vm88, %v1588, 0
  %v1602 = vsel %vm88, %v1589, 0
  %v1605 = vsel %vm88, %v1590, 0
  %v1608 = vsel %vm88, %v1591, 0
  %v1611 = vsel %vm88, %v1592, 0
  %v1614 = vsel %vm88, %v1593, 0
  %v1617 = vsel %vm269, %v1594, 0
  %1619 = vmatpush.bf16.msra.mxu0 0
  %1620 = vmatpush.bf16.msra.mxu0 0
  %1621 = vmatpush.bf16.msra.mxu0 0
  %1622 = vmatpush.bf16.msra.mxu0 0
  %1623 = vmatpush.bf16.msra.mxu0 0
  %1624 = vmatpush.bf16.msra.mxu0 0
  %1625 = vmatpush.bf16.msra.mxu0 0
  %1626 = vmatpush.bf16.msra.mxu0 %v1617
  %1627 = vmatmul.bf16.gmra.mxu0 %v1596
  %v1628 = vpop.f32.mrf.mxu0
  %v1629 = vadd.f32 0.0, %v1628
  %v1630 = vpop.f32.mrf.mxu0
  %v1631 = vadd.f32 0.0, %v1630
  %1632 = vmatmul.bf16.gmra.mxu0 %v1599
  %v1633 = vpop.f32.mrf.mxu0
  %v1634 = vadd.f32 0.0, %v1633
  %v1635 = vpop.f32.mrf.mxu0
  %v1636 = vadd.f32 0.0, %v1635
  %1637 = vmatmul.bf16.gmra.mxu0 %v1602
  %v1638 = vpop.f32.mrf.mxu0
  %v1639 = vadd.f32 0.0, %v1638
  %v1640 = vpop.f32.mrf.mxu0
  %v1641 = vadd.f32 0.0, %v1640
  %1642 = vmatmul.bf16.gmra.mxu0 %v1605
  %v1643 = vpop.f32.mrf.mxu0
  %v1644 = vadd.f32 0.0, %v1643
  %v1645 = vpop.f32.mrf.mxu0
  %v1646 = vadd.f32 0.0, %v1645
  %1647 = vmatmul.bf16.gmra.mxu0 %v1608
  %v1648 = vpop.f32.mrf.mxu0
  %v1649 = vadd.f32 0.0, %v1648
  %v1650 = vpop.f32.mrf.mxu0
  %v1651 = vadd.f32 0.0, %v1650
  %1652 = vmatmul.bf16.gmra.mxu0 %v1611
  %v1653 = vpop.f32.mrf.mxu0
  %v1654 = vadd.f32 0.0, %v1653
  %v1655 = vpop.f32.mrf.mxu0
  %v1656 = vadd.f32 0.0, %v1655
  %1657 = vmatmul.bf16.gmra.mxu0 %v1614
  %v1658 = vpop.f32.mrf.mxu0
  %v1659 = vadd.f32 0.0, %v1658
  %v1660 = vpop.f32.mrf.mxu0
  %v1661 = vadd.f32 0.0, %v1660
  %1662 = vdwg.mxu0
  %v1663 = vadd.f32 %v1553, %v1629
  %v1664 = vadd.f32 %v1555, %v1631
  %v1665 = vadd.f32 %v1558, %v1634
  %v1666 = vadd.f32 %v1560, %v1636
  %v1667 = vadd.f32 %v1563, %v1639
  %v1668 = vadd.f32 %v1565, %v1641
  %v1669 = vadd.f32 %v1568, %v1644
  %v1670 = vadd.f32 %v1570, %v1646
  %v1671 = vadd.f32 %v1573, %v1649
  %v1672 = vadd.f32 %v1575, %v1651
  %v1673 = vadd.f32 %v1578, %v1654
  %v1674 = vadd.f32 %v1580, %v1656
  %v1675 = vadd.f32 %v1583, %v1659
  %v1676 = vadd.f32 %v1585, %v1661
  %v1677 = vld [vmem:[%s10] sm:$0x1]
  %v1679 = vperm.slane %v1677, 0
  %v1681 = vadd.f32 %v1663, %v1679
  %v1682 = vadd.f32 %v1664, %v1679
  %v1683 = vadd.f32 %v1665, %v1679
  %v1684 = vadd.f32 %v1666, %v1679
  %v1685 = vadd.f32 %v1667, %v1679
  %v1686 = vadd.f32 %v1668, %v1679
  %v1687 = vadd.f32 %v1669, %v1679
  %v1688 = vadd.f32 %v1670, %v1679
  %v1689 = vadd.f32 %v1671, %v1679
  %v1690 = vadd.f32 %v1672, %v1679
  %v1691 = vadd.f32 %v1673, %v1679
  %v1692 = vadd.f32 %v1674, %v1679
  %v1693 = vadd.f32 %v1675, %v1679
  %v1694 = vadd.f32 %v1676, %v1679
  %v1695 = vadd.f32 %v1681, %v285
  %v1696 = vadd.f32 %v1682, %v288
  %v1697 = vadd.f32 %v1683, %v290
  %v1698 = vadd.f32 %v1684, %v293
  %v1699 = vadd.f32 %v1685, %v295
  %v1700 = vadd.f32 %v1686, %v298
  %v1701 = vadd.f32 %v1687, %v300
  %v1702 = vadd.f32 %v1688, %v305
  %v1703 = vadd.f32 %v1689, %v308
  %v1704 = vadd.f32 %v1690, %v310
  %v1705 = vadd.f32 %v1691, %v313
  %v1706 = vadd.f32 %v1692, %v315
  %v1707 = vadd.f32 %v1693, %v318
  %v1708 = vadd.f32 %v1694, %v320
  %v1709 = vld [vmem:[%s11] sm:$0x1]
  %v1710 = vld [vmem:[%s12] sm:$0x1]
  %v1711 = vsel %vm88, %v1695, 0.0
  %v1712 = vsel %vm88, %v1696, 0.0
  %v1713 = vadd.f32 %v1711, %v1712
  %v1714 = vsel %vm88, %v1697, 0.0
  %v1715 = vadd.f32 %v1713, %v1714
  %v1716 = vsel %vm88, %v1698, 0.0
  %v1717 = vadd.f32 %v1715, %v1716
  %v1718 = vsel %vm88, %v1699, 0.0
  %v1719 = vadd.f32 %v1717, %v1718
  %v1720 = vsel %vm88, %v1700, 0.0
  %v1721 = vadd.f32 %v1719, %v1720
  %v1722 = vsel %vm88, %v1701, 0.0
  %v1723 = vadd.f32 %v1721, %v1722
  %v1724 = vsel %vm88, %v1702, 0.0
  %v1725 = vadd.f32 %v1723, %v1724
  %v1726 = vsel %vm88, %v1703, 0.0
  %v1727 = vadd.f32 %v1725, %v1726
  %v1728 = vsel %vm88, %v1704, 0.0
  %v1729 = vadd.f32 %v1727, %v1728
  %v1730 = vsel %vm88, %v1705, 0.0
  %v1731 = vadd.f32 %v1729, %v1730
  %v1732 = vsel %vm88, %v1706, 0.0
  %v1733 = vadd.f32 %v1731, %v1732
  %v1734 = vsel %vm88, %v1707, 0.0
  %v1735 = vadd.f32 %v1733, %v1734
  %v1736 = vsel %vm88, %v1708, 0.0
  %v1737 = vadd.f32 %v1735, %v1736
  %v1738 = vrot.slane %v1737, 4
  %v1739 = vadd.f32 %v1737, %v1738
  %v1740 = vrot.slane %v1739, 2
  %v1741 = vadd.f32 %v1739, %v1740
  %v1742 = vrot.slane %v1741, 1
  %v1743 = vadd.f32 %v1741, %v1742
  %v1744 = vrcp.pop 112.0
  %v1745 = vmul.f32 112.0, %v1744
  %v1746 = vsub.f32 1.0, %v1745
  %v1747 = vmul.f32 %v1744, %v1746
  %v1748 = vadd.f32 %v1744, %v1747
  %vm1749 = vweird.f32 %v1744
  %v1750 = vsel %vm1749, %v1744, %v1748
  %v1751 = vmul.f32 %v1743, %v1750
  %v1752 = vsub.f32 %v1695, %v1751
  %v1753 = vsub.f32 %v1696, %v1751
  %v1754 = vsub.f32 %v1697, %v1751
  %v1755 = vsub.f32 %v1698, %v1751
  %v1756 = vsub.f32 %v1699, %v1751
  %v1757 = vsub.f32 %v1700, %v1751
  %v1758 = vsub.f32 %v1701, %v1751
  %v1759 = vsub.f32 %v1702, %v1751
  %v1760 = vsub.f32 %v1703, %v1751
  %v1761 = vsub.f32 %v1704, %v1751
  %v1762 = vsub.f32 %v1705, %v1751
  %v1763 = vsub.f32 %v1706, %v1751
  %v1764 = vsub.f32 %v1707, %v1751
  %v1765 = vsub.f32 %v1708, %v1751
  %v1766 = vmul.f32 %v1752, %v1752
  %v1767 = vmul.f32 %v1753, %v1753
  %v1768 = vmul.f32 %v1754, %v1754
  %v1769 = vmul.f32 %v1755, %v1755
  %v1770 = vmul.f32 %v1756, %v1756
  %v1771 = vmul.f32 %v1757, %v1757
  %v1772 = vmul.f32 %v1758, %v1758
  %v1773 = vmul.f32 %v1759, %v1759
  %v1774 = vmul.f32 %v1760, %v1760
  %v1775 = vmul.f32 %v1761, %v1761
  %v1776 = vmul.f32 %v1762, %v1762
  %v1777 = vmul.f32 %v1763, %v1763
  %v1778 = vmul.f32 %v1764, %v1764
  %v1779 = vmul.f32 %v1765, %v1765
  %v1780 = vsel %vm88, %v1766, 0.0
  %v1781 = vsel %vm88, %v1767, 0.0
  %v1782 = vadd.f32 %v1780, %v1781
  %v1783 = vsel %vm88, %v1768, 0.0
  %v1784 = vadd.f32 %v1782, %v1783
  %v1785 = vsel %vm88, %v1769, 0.0
  %v1786 = vadd.f32 %v1784, %v1785
  %v1787 = vsel %vm88, %v1770, 0.0
  %v1788 = vadd.f32 %v1786, %v1787
  %v1789 = vsel %vm88, %v1771, 0.0
  %v1790 = vadd.f32 %v1788, %v1789
  %v1791 = vsel %vm88, %v1772, 0.0
  %v1792 = vadd.f32 %v1790, %v1791
  %v1793 = vsel %vm88, %v1773, 0.0
  %v1794 = vadd.f32 %v1792, %v1793
  %v1795 = vsel %vm88, %v1774, 0.0
  %v1796 = vadd.f32 %v1794, %v1795
  %v1797 = vsel %vm88, %v1775, 0.0
  %v1798 = vadd.f32 %v1796, %v1797
  %v1799 = vsel %vm88, %v1776, 0.0
  %v1800 = vadd.f32 %v1798, %v1799
  %v1801 = vsel %vm88, %v1777, 0.0
  %v1802 = vadd.f32 %v1800, %v1801
  %v1803 = vsel %vm88, %v1778, 0.0
  %v1804 = vadd.f32 %v1802, %v1803
  %v1805 = vsel %vm88, %v1779, 0.0
  %v1806 = vadd.f32 %v1804, %v1805
  %v1807 = vrot.slane %v1806, 4
  %v1808 = vadd.f32 %v1806, %v1807
  %v1809 = vrot.slane %v1808, 2
  %v1810 = vadd.f32 %v1808, %v1809
  %v1811 = vrot.slane %v1810, 1
  %v1812 = vadd.f32 %v1810, %v1811
  %v1813 = vmul.f32 %v1812, %v1750
  %v1814 = vadd.f32 %v1813, 1e-05
  %v1815 = vrsqrt.pop %v1814
  %v1816 = vmul.f32 %v1815, %v1814
  %v1817 = vmul.f32 %v1816, %v1815
  %v1818 = vmul.f32 0.5, %v1817
  %v1819 = vsub.f32 1.5, %v1818
  %v1820 = vmul.f32 %v1815, %v1819
  %vm1821 = vweird.f32 %v1814
  %vm1822 = vweird.f32 %v1815
  %vm1823 = vmor %vm1821, %vm1822
  %v1824 = vsel %vm1823, %v1815, %v1820
  %v1825 = vmul.f32 %v1752, %v1824
  %v1826 = vmul.f32 %v1753, %v1824
  %v1827 = vmul.f32 %v1754, %v1824
  %v1828 = vmul.f32 %v1755, %v1824
  %v1829 = vmul.f32 %v1756, %v1824
  %v1830 = vmul.f32 %v1757, %v1824
  %v1831 = vmul.f32 %v1758, %v1824
  %v1832 = vmul.f32 %v1759, %v1824
  %v1833 = vmul.f32 %v1760, %v1824
  %v1834 = vmul.f32 %v1761, %v1824
  %v1835 = vmul.f32 %v1762, %v1824
  %v1836 = vmul.f32 %v1763, %v1824
  %v1837 = vmul.f32 %v1764, %v1824
  %v1838 = vmul.f32 %v1765, %v1824
  %v1840 = vperm.slane %v1709, 0
  %v1842 = vmul.f32 %v1825, %v1840
  %v1843 = vmul.f32 %v1826, %v1840
  %v1844 = vmul.f32 %v1827, %v1840
  %v1845 = vmul.f32 %v1828, %v1840
  %v1846 = vmul.f32 %v1829, %v1840
  %v1847 = vmul.f32 %v1830, %v1840
  %v1848 = vmul.f32 %v1831, %v1840
  %v1849 = vmul.f32 %v1832, %v1840
  %v1850 = vmul.f32 %v1833, %v1840
  %v1851 = vmul.f32 %v1834, %v1840
  %v1852 = vmul.f32 %v1835, %v1840
  %v1853 = vmul.f32 %v1836, %v1840
  %v1854 = vmul.f32 %v1837, %v1840
  %v1855 = vmul.f32 %v1838, %v1840
  %v1857 = vperm.slane %v1710, 0
  %v1859 = vadd.f32 %v1842, %v1857
  %v1860 = vadd.f32 %v1843, %v1857
  %v1861 = vadd.f32 %v1844, %v1857
  %v1862 = vadd.f32 %v1845, %v1857
  %v1863 = vadd.f32 %v1846, %v1857
  %v1864 = vadd.f32 %v1847, %v1857
  %v1865 = vadd.f32 %v1848, %v1857
  %v1866 = vadd.f32 %v1849, %v1857
  %v1867 = vadd.f32 %v1850, %v1857
  %v1868 = vadd.f32 %v1851, %v1857
  %v1869 = vadd.f32 %v1852, %v1857
  %v1870 = vadd.f32 %v1853, %v1857
  %v1871 = vadd.f32 %v1854, %v1857
  %v1872 = vadd.f32 %v1855, %v1857
  %s1873 = scalar_lea.vmem %s5, 16
  %v1874 = vld [vmem:[%s1873] sm:$0xff]
  %v1875 = vld [vmem:[%s1873 + $0x8] sm:$0xff]
  %s1876 = scalar_lea.vmem %s6, 1
  %v1877 = vld [vmem:[%s1876] sm:$0x1]
  %v1878 = vpack.c.bf16 %v1860, %v1859
  %v1879 = vpack.c.bf16 %v1862, %v1861
  %v1880 = vpack.c.bf16 %v1866, %v1863
  %v1881 = vpack.c.bf16 %v1868, %v1867
  %v1882 = vpack.c.bf16 %v1870, %v1869
  %v1883 = vpack.c.bf16 %v1874, %v1874
  %v1885 = vsel %vm88, %v1878, 0
  %v1888 = vsel %vm88, %v1879, 0
  %v1891 = vsel %vm88, %v1880, 0
  %v1894 = vsel %vm88, %v1881, 0
  %v1897 = vsel %vm88, %v1882, 0
  %v1900 = vsel %vm269, %v1883, 0
  %1902 = vmatpush.bf16.msra.mxu0 0
  %1903 = vmatpush.bf16.msra.mxu0 0
  %1904 = vmatpush.bf16.msra.mxu0 0
  %1905 = vmatpush.bf16.msra.mxu0 0
  %1906 = vmatpush.bf16.msra.mxu0 0
  %1907 = vmatpush.bf16.msra.mxu0 0
  %1908 = vmatpush.bf16.msra.mxu0 0
  %1909 = vmatpush.bf16.msra.mxu0 %v1900
  %1910 = vmatmul.bf16.gmra.mxu0 %v1885
  %v1911 = vpop.f32.mrf.mxu0
  %v1912 = vadd.f32 0.0, %v1911
  %v1913 = vpop.f32.mrf.mxu0
  %v1914 = vadd.f32 0.0, %v1913
  %1915 = vmatmul.bf16.gmra.mxu0 %v1888
  %v1916 = vpop.f32.mrf.mxu0
  %v1917 = vadd.f32 0.0, %v1916
  %v1918 = vpop.f32.mrf.mxu0
  %v1919 = vadd.f32 0.0, %v1918
  %1920 = vmatmul.bf16.gmra.mxu0 %v1891
  %v1921 = vpop.f32.mrf.mxu0
  %v1922 = vadd.f32 0.0, %v1921
  %v1923 = vpop.f32.mrf.mxu0
  %v1924 = vadd.f32 0.0, %v1923
  %1925 = vmatmul.bf16.gmra.mxu0 %v1894
  %v1926 = vpop.f32.mrf.mxu0
  %v1927 = vadd.f32 0.0, %v1926
  %v1928 = vpop.f32.mrf.mxu0
  %v1929 = vadd.f32 0.0, %v1928
  %1930 = vmatmul.bf16.gmra.mxu0 %v1897
  %v1931 = vpop.f32.mrf.mxu0
  %v1932 = vadd.f32 0.0, %v1931
  %v1933 = vpop.f32.mrf.mxu0
  %v1934 = vadd.f32 0.0, %v1933
  %1935 = vdwg.mxu0
  %v1937 = vperm.slane %v1877, 0
  %v1939 = vadd.f32 %v1937, %v1912
  %v1940 = vadd.f32 %v1937, %v1914
  %v1941 = vadd.f32 %v1937, %v1917
  %v1942 = vadd.f32 %v1937, %v1919
  %v1943 = vadd.f32 %v1937, %v1922
  %v1944 = vadd.f32 %v1937, %v1924
  %v1945 = vadd.f32 %v1937, %v1927
  %v1946 = vadd.f32 %v1937, %v1929
  %v1947 = vadd.f32 %v1937, %v1932
  %v1948 = vadd.f32 %v1937, %v1934
  %v1949 = vpack.c.bf16 %v1864, %v1863
  %v1950 = vpack.c.bf16 %v1868, %v1865
  %v1951 = vpack.c.bf16 %v1872, %v1871
  %v1952 = vpack.c.bf16 %v1875, %v1875
  %v1954 = vsel %vm88, %v1949, 0
  %v1957 = vsel %vm88, %v1950, 0
  %v1960 = vsel %vm88, %v1951, 0
  %v1963 = vsel %vm269, %v1952, 0
  %1965 = vmatpush.bf16.msra.mxu0 0
  %1966 = vmatpush.bf16.msra.mxu0 0
  %1967 = vmatpush.bf16.msra.mxu0 0
  %1968 = vmatpush.bf16.msra.mxu0 0
  %1969 = vmatpush.bf16.msra.mxu0 0
  %1970 = vmatpush.bf16.msra.mxu0 0
  %1971 = vmatpush.bf16.msra.mxu0 0
  %1972 = vmatpush.bf16.msra.mxu0 %v1963
  %1973 = vmatmul.bf16.gmra.mxu0 %v1888
  %v1974 = vpop.f32.mrf.mxu0
  %v1975 = vadd.f32 0.0, %v1974
  %v1976 = vpop.f32.mrf.mxu0
  %v1977 = vadd.f32 0.0, %v1976
  %1978 = vmatmul.bf16.gmra.mxu0 %v1954
  %v1979 = vpop.f32.mrf.mxu0
  %v1980 = vadd.f32 0.0, %v1979
  %v1981 = vpop.f32.mrf.mxu0
  %v1982 = vadd.f32 0.0, %v1981
  %1983 = vmatmul.bf16.gmra.mxu0 %v1957
  %v1984 = vpop.f32.mrf.mxu0
  %v1985 = vadd.f32 0.0, %v1984
  %v1986 = vpop.f32.mrf.mxu0
  %v1987 = vadd.f32 0.0, %v1986
  %1988 = vmatmul.bf16.gmra.mxu0 %v1897
  %v1989 = vpop.f32.mrf.mxu0
  %v1990 = vadd.f32 0.0, %v1989
  %v1991 = vpop.f32.mrf.mxu0
  %v1992 = vadd.f32 0.0, %v1991
  %1993 = vmatmul.bf16.gmra.mxu0 %v1960
  %v1994 = vpop.f32.mrf.mxu0
  %v1995 = vadd.f32 0.0, %v1994
  %v1996 = vpop.f32.mrf.mxu0
  %v1997 = vadd.f32 0.0, %v1996
  %1998 = vdwg.mxu0
  %v1999 = vadd.f32 %v1939, %v1975
  %v2000 = vadd.f32 %v1940, %v1977
  %v2001 = vadd.f32 %v1941, %v1980
  %v2002 = vadd.f32 %v1942, %v1982
  %v2003 = vadd.f32 %v1943, %v1985
  %v2004 = vadd.f32 %v1944, %v1987
  %v2005 = vadd.f32 %v1945, %v1990
  %v2006 = vadd.f32 %v1946, %v1992
  %v2007 = vadd.f32 %v1947, %v1995
  %v2008 = vadd.f32 %v1948, %v1997
  %v2009 = vtanh.pop %v1999
  %v2010 = vtanh.pop %v2000
  %v2011 = vtanh.pop %v2001
  %v2012 = vtanh.pop %v2002
  %v2013 = vtanh.pop %v2003
  %v2014 = vtanh.pop %v2004
  %v2015 = vtanh.pop %v2005
  %v2016 = vtanh.pop %v2006
  %v2017 = vtanh.pop %v2007
  %v2018 = vtanh.pop %v2008
  %v2019 = vxor.u32 %v1999, 2147483648
  %v2020 = vxor.u32 %v2000, 2147483648
  %v2021 = vxor.u32 %v2001, 2147483648
  %v2022 = vxor.u32 %v2002, 2147483648
  %v2023 = vxor.u32 %v2003, 2147483648
  %v2024 = vxor.u32 %v2004, 2147483648
  %v2025 = vxor.u32 %v2005, 2147483648
  %v2026 = vxor.u32 %v2006, 2147483648
  %v2027 = vxor.u32 %v2007, 2147483648
  %v2028 = vxor.u32 %v2008, 2147483648
  %v2029 = vmul.f32 %v2019, 1.442695
  %v2030 = vpow.pop %v2029
  %v2031 = vmul.f32 %v2020, 1.442695
  %v2032 = vpow.pop %v2031
  %v2033 = vmul.f32 %v2021, 1.442695
  %v2034 = vpow.pop %v2033
  %v2035 = vmul.f32 %v2022, 1.442695
  %v2036 = vpow.pop %v2035
  %v2037 = vmul.f32 %v2023, 1.442695
  %v2038 = vpow.pop %v2037
  %v2039 = vmul.f32 %v2024, 1.442695
  %v2040 = vpow.pop %v2039
  %v2041 = vmul.f32 %v2025, 1.442695
  %v2042 = vpow.pop %v2041
  %v2043 = vmul.f32 %v2026, 1.442695
  %v2044 = vpow.pop %v2043
  %v2045 = vmul.f32 %v2027, 1.442695
  %v2046 = vpow.pop %v2045
  %v2047 = vmul.f32 %v2028, 1.442695
  %v2048 = vpow.pop %v2047
  %v2049 = vadd.f32 %v2030, 1.0
  %v2050 = vadd.f32 %v2032, 1.0
  %v2051 = vadd.f32 %v2034, 1.0
  %v2052 = vadd.f32 %v2036, 1.0
  %v2053 = vadd.f32 %v2038, 1.0
  %v2054 = vadd.f32 %v2040, 1.0
  %v2055 = vadd.f32 %v2042, 1.0
  %v2056 = vadd.f32 %v2044, 1.0
  %v2057 = vadd.f32 %v2046, 1.0
  %v2058 = vadd.f32 %v2048, 1.0
  %v2059 = vrcp.pop %v2049
  %v2060 = vmul.f32 %v2049, %v2059
  %v2061 = vsub.f32 1.0, %v2060
  %v2062 = vmul.f32 %v2059, %v2061
  %v2063 = vadd.f32 %v2059, %v2062
  %vm2064 = vweird.f32 %v2049
  %vm2065 = vweird.f32 %v2059
  %vm2066 = vmor %vm2064, %vm2065
  %v2067 = vsel %vm2066, %v2059, %v2063
  %v2068 = vand.u32 2147483647, %v2049
  %vm2069 = vcmp.eq.f32.partialorder %v2068, 8.507059e+37
  %v2070 = vand.u32 %v2049, 2147483648
  %v2071 = vor.u32 1.1754944e-38, %v2070
  %v2072 = vsel %vm2069, %v2071, %v2067
  %v2073 = vmul.f32 1.0, %v2072
  %v2074 = vrcp.pop %v2050
  %v2075 = vmul.f32 %v2050, %v2074
  %v2076 = vsub.f32 1.0, %v2075
  %v2077 = vmul.f32 %v2074, %v2076
  %v2078 = vadd.f32 %v2074, %v2077
  %vm2079 = vweird.f32 %v2050
  %vm2080 = vweird.f32 %v2074
  %vm2081 = vmor %vm2079, %vm2080
  %v2082 = vsel %vm2081, %v2074, %v2078
  %v2083 = vand.u32 2147483647, %v2050
  %vm2084 = vcmp.eq.f32.partialorder %v2083, 8.507059e+37
  %v2085 = vand.u32 %v2050, 2147483648
  %v2086 = vor.u32 1.1754944e-38, %v2085
  %v2087 = vsel %vm2084, %v2086, %v2082
  %v2088 = vmul.f32 1.0, %v2087
  %v2089 = vrcp.pop %v2051
  %v2090 = vmul.f32 %v2051, %v2089
  %v2091 = vsub.f32 1.0, %v2090
  %v2092 = vmul.f32 %v2089, %v2091
  %v2093 = vadd.f32 %v2089, %v2092
  %vm2094 = vweird.f32 %v2051
  %vm2095 = vweird.f32 %v2089
  %vm2096 = vmor %vm2094, %vm2095
  %v2097 = vsel %vm2096, %v2089, %v2093
  %v2098 = vand.u32 2147483647, %v2051
  %vm2099 = vcmp.eq.f32.partialorder %v2098, 8.507059e+37
  %v2100 = vand.u32 %v2051, 2147483648
  %v2101 = vor.u32 1.1754944e-38, %v2100
  %v2102 = vsel %vm2099, %v2101, %v2097
  %v2103 = vmul.f32 1.0, %v2102
  %v2104 = vrcp.pop %v2052
  %v2105 = vmul.f32 %v2052, %v2104
  %v2106 = vsub.f32 1.0, %v2105
  %v2107 = vmul.f32 %v2104, %v2106
  %v2108 = vadd.f32 %v2104, %v2107
  %vm2109 = vweird.f32 %v2052
  %vm2110 = vweird.f32 %v2104
  %vm2111 = vmor %vm2109, %vm2110
  %v2112 = vsel %vm2111, %v2104, %v2108
  %v2113 = vand.u32 2147483647, %v2052
  %vm2114 = vcmp.eq.f32.partialorder %v2113, 8.507059e+37
  %v2115 = vand.u32 %v2052, 2147483648
  %v2116 = vor.u32 1.1754944e-38, %v2115
  %v2117 = vsel %vm2114, %v2116, %v2112
  %v2118 = vmul.f32 1.0, %v2117
  %v2119 = vrcp.pop %v2053
  %v2120 = vmul.f32 %v2053, %v2119
  %v2121 = vsub.f32 1.0, %v2120
  %v2122 = vmul.f32 %v2119, %v2121
  %v2123 = vadd.f32 %v2119, %v2122
  %vm2124 = vweird.f32 %v2053
  %vm2125 = vweird.f32 %v2119
  %vm2126 = vmor %vm2124, %vm2125
  %v2127 = vsel %vm2126, %v2119, %v2123
  %v2128 = vand.u32 2147483647, %v2053
  %vm2129 = vcmp.eq.f32.partialorder %v2128, 8.507059e+37
  %v2130 = vand.u32 %v2053, 2147483648
  %v2131 = vor.u32 1.1754944e-38, %v2130
  %v2132 = vsel %vm2129, %v2131, %v2127
  %v2133 = vmul.f32 1.0, %v2132
  %v2134 = vrcp.pop %v2054
  %v2135 = vmul.f32 %v2054, %v2134
  %v2136 = vsub.f32 1.0, %v2135
  %v2137 = vmul.f32 %v2134, %v2136
  %v2138 = vadd.f32 %v2134, %v2137
  %vm2139 = vweird.f32 %v2054
  %vm2140 = vweird.f32 %v2134
  %vm2141 = vmor %vm2139, %vm2140
  %v2142 = vsel %vm2141, %v2134, %v2138
  %v2143 = vand.u32 2147483647, %v2054
  %vm2144 = vcmp.eq.f32.partialorder %v2143, 8.507059e+37
  %v2145 = vand.u32 %v2054, 2147483648
  %v2146 = vor.u32 1.1754944e-38, %v2145
  %v2147 = vsel %vm2144, %v2146, %v2142
  %v2148 = vmul.f32 1.0, %v2147
  %v2149 = vrcp.pop %v2055
  %v2150 = vmul.f32 %v2055, %v2149
  %v2151 = vsub.f32 1.0, %v2150
  %v2152 = vmul.f32 %v2149, %v2151
  %v2153 = vadd.f32 %v2149, %v2152
  %vm2154 = vweird.f32 %v2055
  %vm2155 = vweird.f32 %v2149
  %vm2156 = vmor %vm2154, %vm2155
  %v2157 = vsel %vm2156, %v2149, %v2153
  %v2158 = vand.u32 2147483647, %v2055
  %vm2159 = vcmp.eq.f32.partialorder %v2158, 8.507059e+37
  %v2160 = vand.u32 %v2055, 2147483648
  %v2161 = vor.u32 1.1754944e-38, %v2160
  %v2162 = vsel %vm2159, %v2161, %v2157
  %v2163 = vmul.f32 1.0, %v2162
  %v2164 = vrcp.pop %v2056
  %v2165 = vmul.f32 %v2056, %v2164
  %v2166 = vsub.f32 1.0, %v2165
  %v2167 = vmul.f32 %v2164, %v2166
  %v2168 = vadd.f32 %v2164, %v2167
  %vm2169 = vweird.f32 %v2056
  %vm2170 = vweird.f32 %v2164
  %vm2171 = vmor %vm2169, %vm2170
  %v2172 = vsel %vm2171, %v2164, %v2168
  %v2173 = vand.u32 2147483647, %v2056
  %vm2174 = vcmp.eq.f32.partialorder %v2173, 8.507059e+37
  %v2175 = vand.u32 %v2056, 2147483648
  %v2176 = vor.u32 1.1754944e-38, %v2175
  %v2177 = vsel %vm2174, %v2176, %v2172
  %v2178 = vmul.f32 1.0, %v2177
  %v2179 = vrcp.pop %v2057
  %v2180 = vmul.f32 %v2057, %v2179
  %v2181 = vsub.f32 1.0, %v2180
  %v2182 = vmul.f32 %v2179, %v2181
  %v2183 = vadd.f32 %v2179, %v2182
  %vm2184 = vweird.f32 %v2057
  %vm2185 = vweird.f32 %v2179
  %vm2186 = vmor %vm2184, %vm2185
  %v2187 = vsel %vm2186, %v2179, %v2183
  %v2188 = vand.u32 2147483647, %v2057
  %vm2189 = vcmp.eq.f32.partialorder %v2188, 8.507059e+37
  %v2190 = vand.u32 %v2057, 2147483648
  %v2191 = vor.u32 1.1754944e-38, %v2190
  %v2192 = vsel %vm2189, %v2191, %v2187
  %v2193 = vmul.f32 1.0, %v2192
  %v2194 = vrcp.pop %v2058
  %v2195 = vmul.f32 %v2058, %v2194
  %v2196 = vsub.f32 1.0, %v2195
  %v2197 = vmul.f32 %v2194, %v2196
  %v2198 = vadd.f32 %v2194, %v2197
  %vm2199 = vweird.f32 %v2058
  %vm2200 = vweird.f32 %v2194
  %vm2201 = vmor %vm2199, %vm2200
  %v2202 = vsel %vm2201, %v2194, %v2198
  %v2203 = vand.u32 2147483647, %v2058
  %vm2204 = vcmp.eq.f32.partialorder %v2203, 8.507059e+37
  %v2205 = vand.u32 %v2058, 2147483648
  %v2206 = vor.u32 1.1754944e-38, %v2205
  %v2207 = vsel %vm2204, %v2206, %v2202
  %v2208 = vmul.f32 1.0, %v2207
  %2219 = vrot.lane.b32.xlu0 %v2073, 120
  %v2220 = vpop.permute.xlu0 %2219
  %2221 = vrot.lane.b32.xlu0 %v2088, 120
  %v2222 = vpop.permute.xlu0 %2221
  %2223 = vrot.lane.b32.xlu0 %v2103, 120
  %v2224 = vpop.permute.xlu0 %2223
  %2225 = vrot.lane.b32.xlu0 %v2118, 120
  %v2226 = vpop.permute.xlu0 %2225
  %2227 = vrot.lane.b32.xlu0 %v2133, 120
  %v2228 = vpop.permute.xlu0 %2227
  %2229 = vrot.lane.b32.xlu0 %v2148, 120
  %v2230 = vpop.permute.xlu0 %2229
  %2231 = vrot.lane.b32.xlu0 %v2163, 120
  %v2232 = vpop.permute.xlu0 %2231
  %2233 = vrot.lane.b32.xlu0 %v2178, 120
  %v2234 = vpop.permute.xlu0 %2233
  %2235 = vrot.lane.b32.xlu0 %v2193, 120
  %v2236 = vpop.permute.xlu0 %2235
  %2237 = vrot.lane.b32.xlu0 %v2208, 120
  %v2238 = vpop.permute.xlu0 %2237
  %v2249 = vmul.f32 %v2009, %v2220
  %v2250 = vmul.f32 %v2010, %v2222
  %v2251 = vmul.f32 %v2011, %v2224
  %v2252 = vmul.f32 %v2012, %v2226
  %v2253 = vmul.f32 %v2013, %v2228
  %v2254 = vmul.f32 %v2014, %v2230
  %v2255 = vmul.f32 %v2015, %v2232
  %v2256 = vmul.f32 %v2016, %v2234
  %v2257 = vmul.f32 %v2017, %v2236
  %v2258 = vmul.f32 %v2018, %v2238
  %s2259 = scalar_lea.vmem %s7, 8
  %v2260 = vld [vmem:[%s2259] sm:$0xff]
  %v2261 = vpack.c.bf16 %v2250, %v2249
  %v2262 = vpack.c.bf16 %v2252, %v2251
  %v2263 = vpack.c.bf16 %v2254, %v2253
  %v2264 = vpack.c.bf16 %v2256, %v2255
  %v2265 = vpack.c.bf16 %v2258, %v2257
  %v2266 = vpack.c.bf16 %v2260, %v2260
  %s2267 = scalar_lea.vmem %s8, 1
  %v2268 = vld [vmem:[%s2267] sm:$0x1]
  %v2270 = vperm.slane %v2268, 0
  %v2273 = vsel %vm88, %v2261, 0
  %v2276 = vsel %vm88, %v2262, 0
  %v2279 = vsel %vm88, %v2263, 0
  %v2282 = vsel %vm88, %v2264, 0
  %v2285 = vsel %vm88, %v2265, 0
  %v2288 = vsel %vm269, %v2266, 0
  %2290 = vmatpush.bf16.msra.mxu0 0
  %2291 = vmatpush.bf16.msra.mxu0 0
  %2292 = vmatpush.bf16.msra.mxu0 0
  %2293 = vmatpush.bf16.msra.mxu0 0
  %2294 = vmatpush.bf16.msra.mxu0 0
  %2295 = vmatpush.bf16.msra.mxu0 0
  %2296 = vmatpush.bf16.msra.mxu0 0
  %2297 = vmatpush.bf16.msra.mxu0 %v2288
  %2298 = vmatmul.bf16.gmra.mxu0 %v2273
  %v2299 = vpop.f32.mrf.mxu0
  %v2300 = vpop.f32.mrf.mxu0
  %2301 = vmatmul.bf16.gmra.mxu0 %v2276
  %v2302 = vpop.f32.mrf.mxu0
  %v2303 = vpop.f32.mrf.mxu0
  %v2304 = vadd.f32 %v2270, %v2303
  %2305 = vmatmul.bf16.gmra.mxu0 %v2279
  %v2306 = vpop.f32.mrf.mxu0
  %v2307 = vadd.f32 %v2270, %v2306
  %v2308 = vpop.f32.mrf.mxu0
  %2309 = vmatmul.bf16.gmra.mxu0 %v2282
  %v2310 = vpop.f32.mrf.mxu0
  %v2311 = vpop.f32.mrf.mxu0
  %2312 = vmatmul.bf16.gmra.mxu0 %v2285
  %v2313 = vpop.f32.mrf.mxu0
  %v2314 = vadd.f32 %v2270, %v2313
  %v2315 = vpop.f32.mrf.mxu0
  %v2316 = vadd.f32 %v2270, %v2315
  %2317 = vdwg.mxu0
  %v2318 = vadd.f32 %v2304, %v964
  %v2319 = vadd.f32 %v2307, %v967
  %v2320 = vadd.f32 %v2314, %v977
  %v2321 = vadd.f32 %v2316, %v979
  %v2322 = vpack.c.bf16 %v2249, %v2249
  %v2323 = vpack.c.bf16 %v2250, %v2250
  %v2324 = vpack.c.bf16 %v2251, %v2251
  %v2325 = vpack.c.bf16 %v2252, %v2252
  %v2326 = vpack.c.bf16 %v2253, %v2253
  %v2327 = vpack.c.bf16 %v2254, %v2254
  %v2328 = vpack.c.bf16 %v2255, %v2255
  %v2329 = vpack.c.bf16 %v2256, %v2256
  %v2330 = vpack.c.bf16 %v2257, %v2257
  %v2331 = vpack.c.bf16 %v2258, %v2258
  %v2333 = vsel %vm269, %v2322, 0
  %2335 = vmatpush.bf16.msra.mxu0 0
  %2336 = vmatpush.bf16.msra.mxu0 0
  %2337 = vmatpush.bf16.msra.mxu0 0
  %2338 = vmatpush.bf16.msra.mxu0 0
  %2339 = vmatpush.bf16.msra.mxu0 0
  %2340 = vmatpush.bf16.msra.mxu0 0
  %2341 = vmatpush.bf16.msra.mxu0 0
  %2342 = vmatpush.bf16.msra.mxu0 %v2333
  %2343 = vmatmul.bf16.gmra.mxu0 %v996
  %v2344 = vpop.f32.mrf.mxu0
  %v2345 = vadd.f32 0.0, %v2344
  %v2346 = vpop.f32.mrf.mxu0
  %2347 = vdwg.mxu0
  %v2349 = vsel %vm269, %v2323, 0
  %2351 = vmatpush.bf16.msra.mxu0 0
  %2352 = vmatpush.bf16.msra.mxu0 0
  %2353 = vmatpush.bf16.msra.mxu0 0
  %2354 = vmatpush.bf16.msra.mxu0 0
  %2355 = vmatpush.bf16.msra.mxu0 0
  %2356 = vmatpush.bf16.msra.mxu0 0
  %2357 = vmatpush.bf16.msra.mxu0 0
  %2358 = vmatpush.bf16.msra.mxu0 %v2349
  %2359 = vmatmul.bf16.gmra.mxu0 %v996
  %v2360 = vpop.f32.mrf.mxu0
  %v2361 = vadd.f32 0.0, %v2360
  %v2362 = vpop.f32.mrf.mxu0
  %2363 = vdwg.mxu0
  %v2365 = vsel %vm269, %v2324, 0
  %2367 = vmatpush.bf16.msra.mxu0 0
  %2368 = vmatpush.bf16.msra.mxu0 0
  %2369 = vmatpush.bf16.msra.mxu0 0
  %2370 = vmatpush.bf16.msra.mxu0 0
  %2371 = vmatpush.bf16.msra.mxu0 0
  %2372 = vmatpush.bf16.msra.mxu0 0
  %2373 = vmatpush.bf16.msra.mxu0 0
  %2374 = vmatpush.bf16.msra.mxu0 %v2365
  %2375 = vmatmul.bf16.gmra.mxu0 %v996
  %v2376 = vpop.f32.mrf.mxu0
  %v2377 = vadd.f32 0.0, %v2376
  %v2378 = vpop.f32.mrf.mxu0
  %2379 = vdwg.mxu0
  %v2381 = vsel %vm269, %v2325, 0
  %2383 = vmatpush.bf16.msra.mxu0 0
  %2384 = vmatpush.bf16.msra.mxu0 0
  %2385 = vmatpush.bf16.msra.mxu0 0
  %2386 = vmatpush.bf16.msra.mxu0 0
  %2387 = vmatpush.bf16.msra.mxu0 0
  %2388 = vmatpush.bf16.msra.mxu0 0
  %2389 = vmatpush.bf16.msra.mxu0 0
  %2390 = vmatpush.bf16.msra.mxu0 %v2381
  %2391 = vmatmul.bf16.gmra.mxu0 %v996
  %v2392 = vpop.f32.mrf.mxu0
  %v2393 = vadd.f32 0.0, %v2392
  %v2394 = vpop.f32.mrf.mxu0
  %2395 = vdwg.mxu0
  %v2397 = vsel %vm269, %v2326, 0
  %2399 = vmatpush.bf16.msra.mxu0 0
  %2400 = vmatpush.bf16.msra.mxu0 0
  %2401 = vmatpush.bf16.msra.mxu0 0
  %2402 = vmatpush.bf16.msra.mxu0 0
  %2403 = vmatpush.bf16.msra.mxu0 0
  %2404 = vmatpush.bf16.msra.mxu0 0
  %2405 = vmatpush.bf16.msra.mxu0 0
  %2406 = vmatpush.bf16.msra.mxu0 %v2397
  %2407 = vmatmul.bf16.gmra.mxu0 %v996
  %v2408 = vpop.f32.mrf.mxu0
  %v2409 = vadd.f32 0.0, %v2408
  %v2410 = vpop.f32.mrf.mxu0
  %2411 = vdwg.mxu0
  %v2413 = vsel %vm269, %v2327, 0
  %2415 = vmatpush.bf16.msra.mxu0 0
  %2416 = vmatpush.bf16.msra.mxu0 0
  %2417 = vmatpush.bf16.msra.mxu0 0
  %2418 = vmatpush.bf16.msra.mxu0 0
  %2419 = vmatpush.bf16.msra.mxu0 0
  %2420 = vmatpush.bf16.msra.mxu0 0
  %2421 = vmatpush.bf16.msra.mxu0 0
  %2422 = vmatpush.bf16.msra.mxu0 %v2413
  %2423 = vmatmul.bf16.gmra.mxu0 %v996
  %v2424 = vpop.f32.mrf.mxu0
  %v2425 = vadd.f32 0.0, %v2424
  %v2426 = vpop.f32.mrf.mxu0
  %2427 = vdwg.mxu0
  %v2429 = vsel %vm269, %v2328, 0
  %2431 = vmatpush.bf16.msra.mxu0 0
  %2432 = vmatpush.bf16.msra.mxu0 0
  %2433 = vmatpush.bf16.msra.mxu0 0
  %2434 = vmatpush.bf16.msra.mxu0 0
  %2435 = vmatpush.bf16.msra.mxu0 0
  %2436 = vmatpush.bf16.msra.mxu0 0
  %2437 = vmatpush.bf16.msra.mxu0 0
  %2438 = vmatpush.bf16.msra.mxu0 %v2429
  %2439 = vmatmul.bf16.gmra.mxu0 %v996
  %v2440 = vpop.f32.mrf.mxu0
  %v2441 = vadd.f32 0.0, %v2440
  %v2442 = vpop.f32.mrf.mxu0
  %2443 = vdwg.mxu0
  %v2445 = vsel %vm269, %v2329, 0
  %2447 = vmatpush.bf16.msra.mxu0 0
  %2448 = vmatpush.bf16.msra.mxu0 0
  %2449 = vmatpush.bf16.msra.mxu0 0
  %2450 = vmatpush.bf16.msra.mxu0 0
  %2451 = vmatpush.bf16.msra.mxu0 0
  %2452 = vmatpush.bf16.msra.mxu0 0
  %2453 = vmatpush.bf16.msra.mxu0 0
  %2454 = vmatpush.bf16.msra.mxu0 %v2445
  %2455 = vmatmul.bf16.gmra.mxu0 %v996
  %v2456 = vpop.f32.mrf.mxu0
  %v2457 = vadd.f32 0.0, %v2456
  %v2458 = vpop.f32.mrf.mxu0
  %2459 = vdwg.mxu0
  %v2461 = vsel %vm269, %v2330, 0
  %2463 = vmatpush.bf16.msra.mxu0 0
  %2464 = vmatpush.bf16.msra.mxu0 0
  %2465 = vmatpush.bf16.msra.mxu0 0
  %2466 = vmatpush.bf16.msra.mxu0 0
  %2467 = vmatpush.bf16.msra.mxu0 0
  %2468 = vmatpush.bf16.msra.mxu0 0
  %2469 = vmatpush.bf16.msra.mxu0 0
  %2470 = vmatpush.bf16.msra.mxu0 %v2461
  %2471 = vmatmul.bf16.gmra.mxu0 %v996
  %v2472 = vpop.f32.mrf.mxu0
  %v2473 = vadd.f32 0.0, %v2472
  %v2474 = vpop.f32.mrf.mxu0
  %2475 = vdwg.mxu0
  %v2477 = vsel %vm269, %v2331, 0
  %2479 = vmatpush.bf16.msra.mxu0 0
  %2480 = vmatpush.bf16.msra.mxu0 0
  %2481 = vmatpush.bf16.msra.mxu0 0
  %2482 = vmatpush.bf16.msra.mxu0 0
  %2483 = vmatpush.bf16.msra.mxu0 0
  %2484 = vmatpush.bf16.msra.mxu0 0
  %2485 = vmatpush.bf16.msra.mxu0 0
  %2486 = vmatpush.bf16.msra.mxu0 %v2477
  %2487 = vmatmul.bf16.gmra.mxu0 %v996
  %v2488 = vpop.f32.mrf.mxu0
  %v2489 = vadd.f32 0.0, %v2488
  %v2490 = vpop.f32.mrf.mxu0
  %2491 = vdwg.mxu0
  %v2492 = vpack.c.bf16 %v2345, %v2345
  %v2493 = vpack.c.bf16 %v2361, %v2361
  %v2494 = vpack.c.bf16 %v2377, %v2377
  %v2495 = vpack.c.bf16 %v2393, %v2393
  %v2496 = vpack.c.bf16 %v2409, %v2409
  %v2497 = vpack.c.bf16 %v2425, %v2425
  %v2498 = vpack.c.bf16 %v2441, %v2441
  %v2499 = vpack.c.bf16 %v2457, %v2457
  %v2500 = vpack.c.bf16 %v2473, %v2473
  %v2501 = vpack.c.bf16 %v2489, %v2489
  %v2503 = vsel %vm269, %v2492, 0
  %2505 = vmatpush.bf16.msra.mxu0 0
  %2506 = vmatpush.bf16.msra.mxu0 0
  %2507 = vmatpush.bf16.msra.mxu0 0
  %2508 = vmatpush.bf16.msra.mxu0 0
  %2509 = vmatpush.bf16.msra.mxu0 0
  %2510 = vmatpush.bf16.msra.mxu0 0
  %2511 = vmatpush.bf16.msra.mxu0 0
  %2512 = vmatpush.bf16.msra.mxu0 %v2503
  %2513 = vmatmul.bf16.gmra.mxu0 %v996
  %v2514 = vpop.f32.mrf.mxu0
  %v2515 = vadd.f32 0.0, %v2514
  %v2516 = vpop.f32.mrf.mxu0
  %2517 = vdwg.mxu0
  %v2519 = vsel %vm269, %v2493, 0
  %2521 = vmatpush.bf16.msra.mxu0 0
  %2522 = vmatpush.bf16.msra.mxu0 0
  %2523 = vmatpush.bf16.msra.mxu0 0
  %2524 = vmatpush.bf16.msra.mxu0 0
  %2525 = vmatpush.bf16.msra.mxu0 0
  %2526 = vmatpush.bf16.msra.mxu0 0
  %2527 = vmatpush.bf16.msra.mxu0 0
  %2528 = vmatpush.bf16.msra.mxu0 %v2519
  %2529 = vmatmul.bf16.gmra.mxu0 %v996
  %v2530 = vpop.f32.mrf.mxu0
  %v2531 = vadd.f32 0.0, %v2530
  %v2532 = vpop.f32.mrf.mxu0
  %2533 = vdwg.mxu0
  %v2535 = vsel %vm269, %v2494, 0
  %2537 = vmatpush.bf16.msra.mxu0 0
  %2538 = vmatpush.bf16.msra.mxu0 0
  %2539 = vmatpush.bf16.msra.mxu0 0
  %2540 = vmatpush.bf16.msra.mxu0 0
  %2541 = vmatpush.bf16.msra.mxu0 0
  %2542 = vmatpush.bf16.msra.mxu0 0
  %2543 = vmatpush.bf16.msra.mxu0 0
  %2544 = vmatpush.bf16.msra.mxu0 %v2535
  %2545 = vmatmul.bf16.gmra.mxu0 %v996
  %v2546 = vpop.f32.mrf.mxu0
  %v2547 = vadd.f32 0.0, %v2546
  %v2548 = vpop.f32.mrf.mxu0
  %2549 = vdwg.mxu0
  %v2551 = vsel %vm269, %v2495, 0
  %2553 = vmatpush.bf16.msra.mxu0 0
  %2554 = vmatpush.bf16.msra.mxu0 0
  %2555 = vmatpush.bf16.msra.mxu0 0
  %2556 = vmatpush.bf16.msra.mxu0 0
  %2557 = vmatpush.bf16.msra.mxu0 0
  %2558 = vmatpush.bf16.msra.mxu0 0
  %2559 = vmatpush.bf16.msra.mxu0 0
  %2560 = vmatpush.bf16.msra.mxu0 %v2551
  %2561 = vmatmul.bf16.gmra.mxu0 %v996
  %v2562 = vpop.f32.mrf.mxu0
  %v2563 = vadd.f32 0.0, %v2562
  %v2564 = vpop.f32.mrf.mxu0
  %2565 = vdwg.mxu0
  %v2567 = vsel %vm269, %v2496, 0
  %2569 = vmatpush.bf16.msra.mxu0 0
  %2570 = vmatpush.bf16.msra.mxu0 0
  %2571 = vmatpush.bf16.msra.mxu0 0
  %2572 = vmatpush.bf16.msra.mxu0 0
  %2573 = vmatpush.bf16.msra.mxu0 0
  %2574 = vmatpush.bf16.msra.mxu0 0
  %2575 = vmatpush.bf16.msra.mxu0 0
  %2576 = vmatpush.bf16.msra.mxu0 %v2567
  %2577 = vmatmul.bf16.gmra.mxu0 %v996
  %v2578 = vpop.f32.mrf.mxu0
  %v2579 = vadd.f32 0.0, %v2578
  %v2580 = vpop.f32.mrf.mxu0
  %2581 = vdwg.mxu0
  %v2583 = vsel %vm269, %v2497, 0
  %2585 = vmatpush.bf16.msra.mxu0 0
  %2586 = vmatpush.bf16.msra.mxu0 0
  %2587 = vmatpush.bf16.msra.mxu0 0
  %2588 = vmatpush.bf16.msra.mxu0 0
  %2589 = vmatpush.bf16.msra.mxu0 0
  %2590 = vmatpush.bf16.msra.mxu0 0
  %2591 = vmatpush.bf16.msra.mxu0 0
  %2592 = vmatpush.bf16.msra.mxu0 %v2583
  %2593 = vmatmul.bf16.gmra.mxu0 %v996
  %v2594 = vpop.f32.mrf.mxu0
  %v2595 = vadd.f32 0.0, %v2594
  %v2596 = vpop.f32.mrf.mxu0
  %2597 = vdwg.mxu0
  %v2599 = vsel %vm269, %v2498, 0
  %2601 = vmatpush.bf16.msra.mxu0 0
  %2602 = vmatpush.bf16.msra.mxu0 0
  %2603 = vmatpush.bf16.msra.mxu0 0
  %2604 = vmatpush.bf16.msra.mxu0 0
  %2605 = vmatpush.bf16.msra.mxu0 0
  %2606 = vmatpush.bf16.msra.mxu0 0
  %2607 = vmatpush.bf16.msra.mxu0 0
  %2608 = vmatpush.bf16.msra.mxu0 %v2599
  %2609 = vmatmul.bf16.gmra.mxu0 %v996
  %v2610 = vpop.f32.mrf.mxu0
  %v2611 = vadd.f32 0.0, %v2610
  %v2612 = vpop.f32.mrf.mxu0
  %2613 = vdwg.mxu0
  %v2615 = vsel %vm269, %v2499, 0
  %2617 = vmatpush.bf16.msra.mxu0 0
  %2618 = vmatpush.bf16.msra.mxu0 0
  %2619 = vmatpush.bf16.msra.mxu0 0
  %2620 = vmatpush.bf16.msra.mxu0 0
  %2621 = vmatpush.bf16.msra.mxu0 0
  %2622 = vmatpush.bf16.msra.mxu0 0
  %2623 = vmatpush.bf16.msra.mxu0 0
  %2624 = vmatpush.bf16.msra.mxu0 %v2615
  %2625 = vmatmul.bf16.gmra.mxu0 %v996
  %v2626 = vpop.f32.mrf.mxu0
  %v2627 = vadd.f32 0.0, %v2626
  %v2628 = vpop.f32.mrf.mxu0
  %2629 = vdwg.mxu0
  %v2631 = vsel %vm269, %v2500, 0
  %2633 = vmatpush.bf16.msra.mxu0 0
  %2634 = vmatpush.bf16.msra.mxu0 0
  %2635 = vmatpush.bf16.msra.mxu0 0
  %2636 = vmatpush.bf16.msra.mxu0 0
  %2637 = vmatpush.bf16.msra.mxu0 0
  %2638 = vmatpush.bf16.msra.mxu0 0
  %2639 = vmatpush.bf16.msra.mxu0 0
  %2640 = vmatpush.bf16.msra.mxu0 %v2631
  %2641 = vmatmul.bf16.gmra.mxu0 %v996
  %v2642 = vpop.f32.mrf.mxu0
  %v2643 = vadd.f32 0.0, %v2642
  %v2644 = vpop.f32.mrf.mxu0
  %2645 = vdwg.mxu0
  %v2647 = vsel %vm269, %v2501, 0
  %2649 = vmatpush.bf16.msra.mxu0 0
  %2650 = vmatpush.bf16.msra.mxu0 0
  %2651 = vmatpush.bf16.msra.mxu0 0
  %2652 = vmatpush.bf16.msra.mxu0 0
  %2653 = vmatpush.bf16.msra.mxu0 0
  %2654 = vmatpush.bf16.msra.mxu0 0
  %2655 = vmatpush.bf16.msra.mxu0 0
  %2656 = vmatpush.bf16.msra.mxu0 %v2647
  %2657 = vmatmul.bf16.gmra.mxu0 %v996
  %v2658 = vpop.f32.mrf.mxu0
  %v2659 = vadd.f32 0.0, %v2658
  %v2660 = vpop.f32.mrf.mxu0
  %2661 = vdwg.mxu0
  %s2662 = scalar_lea.vmem %s9, 24
  %v2663 = vld [vmem:[%s2662] sm:$0xff]
  %v2664 = vld [vmem:[%s2662 + $0x8] sm:$0xff]
  %v2665 = vld [vmem:[%s2662 + $0x10] sm:$0xff]
  %v2666 = vpack.c.bf16 %v2663, %v2663
  %v2667 = vpack.c.bf16 %v2361, %v2345
  %v2668 = vpack.c.bf16 %v2393, %v2377
  %v2669 = vpack.c.bf16 %v2425, %v2409
  %v2670 = vpack.c.bf16 %v2457, %v2441
  %v2671 = vpack.c.bf16 %v2489, %v2473
  %v2672 = vpack.c.bf16 %v2664, %v2664
  %v2674 = vsel %vm88, %v2667, 0
  %v2677 = vsel %vm88, %v2668, 0
  %v2680 = vsel %vm88, %v2669, 0
  %v2683 = vsel %vm88, %v2670, 0
  %v2686 = vsel %vm88, %v2671, 0
  %v2689 = vsel %vm269, %v2672, 0
  %2691 = vmatpush.bf16.msra.mxu0 0
  %2692 = vmatpush.bf16.msra.mxu0 0
  %2693 = vmatpush.bf16.msra.mxu0 0
  %2694 = vmatpush.bf16.msra.mxu0 0
  %2695 = vmatpush.bf16.msra.mxu0 0
  %2696 = vmatpush.bf16.msra.mxu0 0
  %2697 = vmatpush.bf16.msra.mxu0 0
  %2698 = vmatpush.bf16.msra.mxu0 %v2689
  %2699 = vmatmul.bf16.gmra.mxu0 %v2674
  %v2700 = vpop.f32.mrf.mxu0
  %v2701 = vadd.f32 0.0, %v2700
  %v2702 = vpop.f32.mrf.mxu0
  %v2703 = vadd.f32 0.0, %v2702
  %2704 = vmatmul.bf16.gmra.mxu0 %v2677
  %v2705 = vpop.f32.mrf.mxu0
  %v2706 = vadd.f32 0.0, %v2705
  %v2707 = vpop.f32.mrf.mxu0
  %v2708 = vadd.f32 0.0, %v2707
  %2709 = vmatmul.bf16.gmra.mxu0 %v2680
  %v2710 = vpop.f32.mrf.mxu0
  %v2711 = vadd.f32 0.0, %v2710
  %v2712 = vpop.f32.mrf.mxu0
  %v2713 = vadd.f32 0.0, %v2712
  %2714 = vmatmul.bf16.gmra.mxu0 %v2683
  %v2715 = vpop.f32.mrf.mxu0
  %v2716 = vadd.f32 0.0, %v2715
  %v2717 = vpop.f32.mrf.mxu0
  %v2718 = vadd.f32 0.0, %v2717
  %2719 = vmatmul.bf16.gmra.mxu0 %v2686
  %v2720 = vpop.f32.mrf.mxu0
  %v2721 = vadd.f32 0.0, %v2720
  %v2722 = vpop.f32.mrf.mxu0
  %v2723 = vadd.f32 0.0, %v2722
  %2724 = vdwg.mxu0
  %v2726 = vsel %vm269, %v2666, 0
  %2728 = vmatpush.bf16.msra.mxu0 0
  %2729 = vmatpush.bf16.msra.mxu0 0
  %2730 = vmatpush.bf16.msra.mxu0 0
  %2731 = vmatpush.bf16.msra.mxu0 0
  %2732 = vmatpush.bf16.msra.mxu0 0
  %2733 = vmatpush.bf16.msra.mxu0 0
  %2734 = vmatpush.bf16.msra.mxu0 0
  %2735 = vmatpush.bf16.msra.mxu0 %v2726
  %2736 = vmatmul.bf16.gmra.mxu0 %v2273
  %v2737 = vpop.f32.mrf.mxu0
  %v2738 = vadd.f32 %v2701, %v2737
  %v2739 = vpop.f32.mrf.mxu0
  %v2740 = vadd.f32 %v2703, %v2739
  %2741 = vmatmul.bf16.gmra.mxu0 %v2276
  %v2742 = vpop.f32.mrf.mxu0
  %v2743 = vadd.f32 %v2706, %v2742
  %v2744 = vpop.f32.mrf.mxu0
  %v2745 = vadd.f32 %v2708, %v2744
  %2746 = vmatmul.bf16.gmra.mxu0 %v2279
  %v2747 = vpop.f32.mrf.mxu0
  %v2748 = vadd.f32 %v2711, %v2747
  %v2749 = vpop.f32.mrf.mxu0
  %v2750 = vadd.f32 %v2713, %v2749
  %2751 = vmatmul.bf16.gmra.mxu0 %v2282
  %v2752 = vpop.f32.mrf.mxu0
  %v2753 = vadd.f32 %v2716, %v2752
  %v2754 = vpop.f32.mrf.mxu0
  %v2755 = vadd.f32 %v2718, %v2754
  %2756 = vmatmul.bf16.gmra.mxu0 %v2285
  %v2757 = vpop.f32.mrf.mxu0
  %v2758 = vadd.f32 %v2721, %v2757
  %v2759 = vpop.f32.mrf.mxu0
  %v2760 = vadd.f32 %v2723, %v2759
  %2761 = vdwg.mxu0
  %v2762 = vpack.c.bf16 %v2531, %v2515
  %v2763 = vpack.c.bf16 %v2563, %v2547
  %v2764 = vpack.c.bf16 %v2595, %v2579
  %v2765 = vpack.c.bf16 %v2627, %v2611
  %v2766 = vpack.c.bf16 %v2659, %v2643
  %v2767 = vpack.c.bf16 %v2665, %v2665
  %v2769 = vsel %vm88, %v2762, 0
  %v2772 = vsel %vm88, %v2763, 0
  %v2775 = vsel %vm88, %v2764, 0
  %v2778 = vsel %vm88, %v2765, 0
  %v2781 = vsel %vm88, %v2766, 0
  %v2784 = vsel %vm269, %v2767, 0
  %2786 = vmatpush.bf16.msra.mxu0 0
  %2787 = vmatpush.bf16.msra.mxu0 0
  %2788 = vmatpush.bf16.msra.mxu0 0
  %2789 = vmatpush.bf16.msra.mxu0 0
  %2790 = vmatpush.bf16.msra.mxu0 0
  %2791 = vmatpush.bf16.msra.mxu0 0
  %2792 = vmatpush.bf16.msra.mxu0 0
  %2793 = vmatpush.bf16.msra.mxu0 %v2784
  %2794 = vmatmul.bf16.gmra.mxu0 %v2769
  %v2795 = vpop.f32.mrf.mxu0
  %v2796 = vadd.f32 0.0, %v2795
  %v2797 = vpop.f32.mrf.mxu0
  %v2798 = vadd.f32 0.0, %v2797
  %2799 = vmatmul.bf16.gmra.mxu0 %v2772
  %v2800 = vpop.f32.mrf.mxu0
  %v2801 = vadd.f32 0.0, %v2800
  %v2802 = vpop.f32.mrf.mxu0
  %v2803 = vadd.f32 0.0, %v2802
  %2804 = vmatmul.bf16.gmra.mxu0 %v2775
  %v2805 = vpop.f32.mrf.mxu0
  %v2806 = vadd.f32 0.0, %v2805
  %v2807 = vpop.f32.mrf.mxu0
  %v2808 = vadd.f32 0.0, %v2807
  %2809 = vmatmul.bf16.gmra.mxu0 %v2778
  %v2810 = vpop.f32.mrf.mxu0
  %v2811 = vadd.f32 0.0, %v2810
  %v2812 = vpop.f32.mrf.mxu0
  %v2813 = vadd.f32 0.0, %v2812
  %2814 = vmatmul.bf16.gmra.mxu0 %v2781
  %v2815 = vpop.f32.mrf.mxu0
  %v2816 = vadd.f32 0.0, %v2815
  %v2817 = vpop.f32.mrf.mxu0
  %v2818 = vadd.f32 0.0, %v2817
  %2819 = vdwg.mxu0
  %v2820 = vadd.f32 %v2738, %v2796
  %v2821 = vadd.f32 %v2740, %v2798
  %v2822 = vadd.f32 %v2743, %v2801
  %v2823 = vadd.f32 %v2745, %v2803
  %v2824 = vadd.f32 %v2748, %v2806
  %v2825 = vadd.f32 %v2750, %v2808
  %v2826 = vadd.f32 %v2753, %v2811
  %v2827 = vadd.f32 %v2755, %v2813
  %v2828 = vadd.f32 %v2758, %v2816
  %v2829 = vadd.f32 %v2760, %v2818
  %s2830 = scalar_lea.vmem %s10, 1
  %v2831 = vld [vmem:[%s2830] sm:$0x1]
  %v2833 = vperm.slane %v2831, 0
  %v2835 = vadd.f32 %v2820, %v2833
  %v2836 = vadd.f32 %v2821, %v2833
  %v2837 = vadd.f32 %v2822, %v2833
  %v2838 = vadd.f32 %v2823, %v2833
  %v2839 = vadd.f32 %v2824, %v2833
  %v2840 = vadd.f32 %v2825, %v2833
  %v2841 = vadd.f32 %v2826, %v2833
  %v2842 = vadd.f32 %v2827, %v2833
  %v2843 = vadd.f32 %v2828, %v2833
  %v2844 = vadd.f32 %v2829, %v2833
  %v2845 = vadd.f32 %v2835, %v1861
  %v2846 = vadd.f32 %v2836, %v1862
  %v2847 = vadd.f32 %v2837, %v1863
  %v2848 = vadd.f32 %v2838, %v1864
  %v2849 = vadd.f32 %v2839, %v1865
  %v2850 = vadd.f32 %v2840, %v1868
  %v2851 = vadd.f32 %v2841, %v1869
  %v2852 = vadd.f32 %v2842, %v1870
  %v2853 = vadd.f32 %v2843, %v1871
  %v2854 = vadd.f32 %v2844, %v1872
  %s2855 = scalar_lea.vmem %s11, 1
  %v2856 = vld [vmem:[%s2855] sm:$0x1]
  %s2857 = scalar_lea.vmem %s12, 1
  %v2858 = vld [vmem:[%s2857] sm:$0x1]
  %v2859 = vsel %vm88, %v2845, 0.0
  %v2860 = vsel %vm88, %v2846, 0.0
  %v2861 = vadd.f32 %v2859, %v2860
  %v2862 = vsel %vm88, %v2847, 0.0
  %v2863 = vadd.f32 %v2861, %v2862
  %v2864 = vsel %vm88, %v2848, 0.0
  %v2865 = vadd.f32 %v2863, %v2864
  %v2866 = vsel %vm88, %v2849, 0.0
  %v2867 = vadd.f32 %v2865, %v2866
  %v2868 = vsel %vm88, %v2850, 0.0
  %v2869 = vadd.f32 %v2867, %v2868
  %v2870 = vsel %vm88, %v2851, 0.0
  %v2871 = vadd.f32 %v2869, %v2870
  %v2872 = vsel %vm88, %v2852, 0.0
  %v2873 = vadd.f32 %v2871, %v2872
  %v2874 = vsel %vm88, %v2853, 0.0
  %v2875 = vadd.f32 %v2873, %v2874
  %v2876 = vsel %vm88, %v2854, 0.0
  %v2877 = vadd.f32 %v2875, %v2876
  %v2878 = vrot.slane %v2877, 4
  %v2879 = vadd.f32 %v2877, %v2878
  %v2880 = vrot.slane %v2879, 2
  %v2881 = vadd.f32 %v2879, %v2880
  %v2882 = vrot.slane %v2881, 1
  %v2883 = vadd.f32 %v2881, %v2882
  %v2884 = vrcp.pop 80.0
  %v2885 = vmul.f32 80.0, %v2884
  %v2886 = vsub.f32 1.0, %v2885
  %v2887 = vmul.f32 %v2884, %v2886
  %v2888 = vadd.f32 %v2884, %v2887
  %vm2889 = vweird.f32 %v2884
  %v2890 = vsel %vm2889, %v2884, %v2888
  %v2891 = vmul.f32 %v2883, %v2890
  %v2892 = vsub.f32 %v2845, %v2891
  %v2893 = vsub.f32 %v2846, %v2891
  %v2894 = vsub.f32 %v2847, %v2891
  %v2895 = vsub.f32 %v2848, %v2891
  %v2896 = vsub.f32 %v2849, %v2891
  %v2897 = vsub.f32 %v2850, %v2891
  %v2898 = vsub.f32 %v2851, %v2891
  %v2899 = vsub.f32 %v2852, %v2891
  %v2900 = vsub.f32 %v2853, %v2891
  %v2901 = vsub.f32 %v2854, %v2891
  %v2902 = vmul.f32 %v2892, %v2892
  %v2903 = vmul.f32 %v2893, %v2893
  %v2904 = vmul.f32 %v2894, %v2894
  %v2905 = vmul.f32 %v2895, %v2895
  %v2906 = vmul.f32 %v2896, %v2896
  %v2907 = vmul.f32 %v2897, %v2897
  %v2908 = vmul.f32 %v2898, %v2898
  %v2909 = vmul.f32 %v2899, %v2899
  %v2910 = vmul.f32 %v2900, %v2900
  %v2911 = vmul.f32 %v2901, %v2901
  %v2912 = vsel %vm88, %v2902, 0.0
  %v2913 = vsel %vm88, %v2903, 0.0
  %v2914 = vadd.f32 %v2912, %v2913
  %v2915 = vsel %vm88, %v2904, 0.0
  %v2916 = vadd.f32 %v2914, %v2915
  %v2917 = vsel %vm88, %v2905, 0.0
  %v2918 = vadd.f32 %v2916, %v2917
  %v2919 = vsel %vm88, %v2906, 0.0
  %v2920 = vadd.f32 %v2918, %v2919
  %v2921 = vsel %vm88, %v2907, 0.0
  %v2922 = vadd.f32 %v2920, %v2921
  %v2923 = vsel %vm88, %v2908, 0.0
  %v2924 = vadd.f32 %v2922, %v2923
  %v2925 = vsel %vm88, %v2909, 0.0
  %v2926 = vadd.f32 %v2924, %v2925
  %v2927 = vsel %vm88, %v2910, 0.0
  %v2928 = vadd.f32 %v2926, %v2927
  %v2929 = vsel %vm88, %v2911, 0.0
  %v2930 = vadd.f32 %v2928, %v2929
  %v2931 = vrot.slane %v2930, 4
  %v2932 = vadd.f32 %v2930, %v2931
  %v2933 = vrot.slane %v2932, 2
  %v2934 = vadd.f32 %v2932, %v2933
  %v2935 = vrot.slane %v2934, 1
  %v2936 = vadd.f32 %v2934, %v2935
  %v2937 = vmul.f32 %v2936, %v2890
  %v2938 = vadd.f32 %v2937, 1e-05
  %v2939 = vrsqrt.pop %v2938
  %v2940 = vmul.f32 %v2939, %v2938
  %v2941 = vmul.f32 %v2940, %v2939
  %v2942 = vmul.f32 0.5, %v2941
  %v2943 = vsub.f32 1.5, %v2942
  %v2944 = vmul.f32 %v2939, %v2943
  %vm2945 = vweird.f32 %v2938
  %vm2946 = vweird.f32 %v2939
  %vm2947 = vmor %vm2945, %vm2946
  %v2948 = vsel %vm2947, %v2939, %v2944
  %v2949 = vmul.f32 %v2892, %v2948
  %v2950 = vmul.f32 %v2893, %v2948
  %v2951 = vmul.f32 %v2894, %v2948
  %v2952 = vmul.f32 %v2895, %v2948
  %v2953 = vmul.f32 %v2896, %v2948
  %v2954 = vmul.f32 %v2897, %v2948
  %v2955 = vmul.f32 %v2898, %v2948
  %v2956 = vmul.f32 %v2899, %v2948
  %v2957 = vmul.f32 %v2900, %v2948
  %v2958 = vmul.f32 %v2901, %v2948
  %v2960 = vperm.slane %v2856, 0
  %v2962 = vmul.f32 %v2949, %v2960
  %v2963 = vmul.f32 %v2950, %v2960
  %v2964 = vmul.f32 %v2951, %v2960
  %v2965 = vmul.f32 %v2952, %v2960
  %v2966 = vmul.f32 %v2953, %v2960
  %v2967 = vmul.f32 %v2954, %v2960
  %v2968 = vmul.f32 %v2955, %v2960
  %v2969 = vmul.f32 %v2956, %v2960
  %v2970 = vmul.f32 %v2957, %v2960
  %v2971 = vmul.f32 %v2958, %v2960
  %v2973 = vperm.slane %v2858, 0
  %v2975 = vadd.f32 %v2962, %v2973
  %v2976 = vadd.f32 %v2963, %v2973
  %v2977 = vadd.f32 %v2964, %v2973
  %v2978 = vadd.f32 %v2965, %v2973
  %v2979 = vadd.f32 %v2966, %v2973
  %v2980 = vadd.f32 %v2967, %v2973
  %v2981 = vadd.f32 %v2968, %v2973
  %v2982 = vadd.f32 %v2969, %v2973
  %v2983 = vadd.f32 %v2970, %v2973
  %v2984 = vadd.f32 %v2971, %v2973
  %s2985 = scalar_lea.vmem %s5, 32
  %v2986 = vld [vmem:[%s2985] sm:$0xff]
  %v2987 = vld [vmem:[%s2985 + $0x8] sm:$0xff]
  %s2988 = scalar_lea.vmem %s6, 2
  %v2989 = vld [vmem:[%s2988] sm:$0x1]
  %v2990 = vpack.c.bf16 %v2976, %v2975
  %v2991 = vpack.c.bf16 %v2978, %v2977
  %v2992 = vpack.c.bf16 %v2981, %v2980
  %v2993 = vpack.c.bf16 %v2983, %v2982
  %v2994 = vpack.c.bf16 %v2986, %v2986
  %v2996 = vsel %vm88, %v2990, 0
  %v2999 = vsel %vm88, %v2991, 0
  %v3002 = vsel %vm88, %v2992, 0
  %v3005 = vsel %vm88, %v2993, 0
  %v3008 = vsel %vm269, %v2994, 0
  %3010 = vmatpush.bf16.msra.mxu0 0
  %3011 = vmatpush.bf16.msra.mxu0 0
  %3012 = vmatpush.bf16.msra.mxu0 0
  %3013 = vmatpush.bf16.msra.mxu0 0
  %3014 = vmatpush.bf16.msra.mxu0 0
  %3015 = vmatpush.bf16.msra.mxu0 0
  %3016 = vmatpush.bf16.msra.mxu0 0
  %3017 = vmatpush.bf16.msra.mxu0 %v3008
  %3018 = vmatmul.bf16.gmra.mxu0 %v2996
  %v3019 = vpop.f32.mrf.mxu0
  %v3020 = vadd.f32 0.0, %v3019
  %v3021 = vpop.f32.mrf.mxu0
  %v3022 = vadd.f32 0.0, %v3021
  %3023 = vmatmul.bf16.gmra.mxu0 %v2999
  %v3024 = vpop.f32.mrf.mxu0
  %v3025 = vadd.f32 0.0, %v3024
  %v3026 = vpop.f32.mrf.mxu0
  %v3027 = vadd.f32 0.0, %v3026
  %3028 = vmatmul.bf16.gmra.mxu0 %v3002
  %v3029 = vpop.f32.mrf.mxu0
  %v3030 = vadd.f32 0.0, %v3029
  %v3031 = vpop.f32.mrf.mxu0
  %v3032 = vadd.f32 0.0, %v3031
  %3033 = vmatmul.bf16.gmra.mxu0 %v3005
  %v3034 = vpop.f32.mrf.mxu0
  %v3035 = vadd.f32 0.0, %v3034
  %v3036 = vpop.f32.mrf.mxu0
  %v3037 = vadd.f32 0.0, %v3036
  %3038 = vdwg.mxu0
  %v3040 = vperm.slane %v2989, 0
  %v3042 = vadd.f32 %v3040, %v3020
  %v3043 = vadd.f32 %v3040, %v3022
  %v3044 = vadd.f32 %v3040, %v3025
  %v3045 = vadd.f32 %v3040, %v3027
  %v3046 = vadd.f32 %v3040, %v3030
  %v3047 = vadd.f32 %v3040, %v3032
  %v3048 = vadd.f32 %v3040, %v3035
  %v3049 = vadd.f32 %v3040, %v3037
  %v3050 = vpack.c.bf16 %v2977, %v2976
  %v3051 = vpack.c.bf16 %v2979, %v2978
  %v3052 = vpack.c.bf16 %v2982, %v2981
  %v3053 = vpack.c.bf16 %v2984, %v2983
  %v3054 = vpack.c.bf16 %v2987, %v2987
  %v3056 = vsel %vm88, %v3050, 0
  %v3059 = vsel %vm88, %v3051, 0
  %v3062 = vsel %vm88, %v3052, 0
  %v3065 = vsel %vm88, %v3053, 0
  %v3068 = vsel %vm269, %v3054, 0
  %3070 = vmatpush.bf16.msra.mxu0 0
  %3071 = vmatpush.bf16.msra.mxu0 0
  %3072 = vmatpush.bf16.msra.mxu0 0
  %3073 = vmatpush.bf16.msra.mxu0 0
  %3074 = vmatpush.bf16.msra.mxu0 0
  %3075 = vmatpush.bf16.msra.mxu0 0
  %3076 = vmatpush.bf16.msra.mxu0 0
  %3077 = vmatpush.bf16.msra.mxu0 %v3068
  %3078 = vmatmul.bf16.gmra.mxu0 %v3056
  %v3079 = vpop.f32.mrf.mxu0
  %v3080 = vadd.f32 0.0, %v3079
  %v3081 = vpop.f32.mrf.mxu0
  %v3082 = vadd.f32 0.0, %v3081
  %3083 = vmatmul.bf16.gmra.mxu0 %v3059
  %v3084 = vpop.f32.mrf.mxu0
  %v3085 = vadd.f32 0.0, %v3084
  %v3086 = vpop.f32.mrf.mxu0
  %v3087 = vadd.f32 0.0, %v3086
  %3088 = vmatmul.bf16.gmra.mxu0 %v3062
  %v3089 = vpop.f32.mrf.mxu0
  %v3090 = vadd.f32 0.0, %v3089
  %v3091 = vpop.f32.mrf.mxu0
  %v3092 = vadd.f32 0.0, %v3091
  %3093 = vmatmul.bf16.gmra.mxu0 %v3065
  %v3094 = vpop.f32.mrf.mxu0
  %v3095 = vadd.f32 0.0, %v3094
  %v3096 = vpop.f32.mrf.mxu0
  %v3097 = vadd.f32 0.0, %v3096
  %3098 = vdwg.mxu0
  %v3099 = vadd.f32 %v3042, %v3080
  %v3100 = vadd.f32 %v3043, %v3082
  %v3101 = vadd.f32 %v3044, %v3085
  %v3102 = vadd.f32 %v3045, %v3087
  %v3103 = vadd.f32 %v3046, %v3090
  %v3104 = vadd.f32 %v3047, %v3092
  %v3105 = vadd.f32 %v3048, %v3095
  %v3106 = vadd.f32 %v3049, %v3097
  %v3107 = vtanh.pop %v3099
  %v3108 = vtanh.pop %v3100
  %v3109 = vtanh.pop %v3101
  %v3110 = vtanh.pop %v3102
  %v3111 = vtanh.pop %v3103
  %v3112 = vtanh.pop %v3104
  %v3113 = vtanh.pop %v3105
  %v3114 = vtanh.pop %v3106
  %v3115 = vxor.u32 %v3099, 2147483648
  %v3116 = vxor.u32 %v3100, 2147483648
  %v3117 = vxor.u32 %v3101, 2147483648
  %v3118 = vxor.u32 %v3102, 2147483648
  %v3119 = vxor.u32 %v3103, 2147483648
  %v3120 = vxor.u32 %v3104, 2147483648
  %v3121 = vxor.u32 %v3105, 2147483648
  %v3122 = vxor.u32 %v3106, 2147483648
  %v3123 = vmul.f32 %v3115, 1.442695
  %v3124 = vpow.pop %v3123
  %v3125 = vmul.f32 %v3116, 1.442695
  %v3126 = vpow.pop %v3125
  %v3127 = vmul.f32 %v3117, 1.442695
  %v3128 = vpow.pop %v3127
  %v3129 = vmul.f32 %v3118, 1.442695
  %v3130 = vpow.pop %v3129
  %v3131 = vmul.f32 %v3119, 1.442695
  %v3132 = vpow.pop %v3131
  %v3133 = vmul.f32 %v3120, 1.442695
  %v3134 = vpow.pop %v3133
  %v3135 = vmul.f32 %v3121, 1.442695
  %v3136 = vpow.pop %v3135
  %v3137 = vmul.f32 %v3122, 1.442695
  %v3138 = vpow.pop %v3137
  %v3139 = vadd.f32 %v3124, 1.0
  %v3140 = vadd.f32 %v3126, 1.0
  %v3141 = vadd.f32 %v3128, 1.0
  %v3142 = vadd.f32 %v3130, 1.0
  %v3143 = vadd.f32 %v3132, 1.0
  %v3144 = vadd.f32 %v3134, 1.0
  %v3145 = vadd.f32 %v3136, 1.0
  %v3146 = vadd.f32 %v3138, 1.0
  %v3147 = vrcp.pop %v3139
  %v3148 = vmul.f32 %v3139, %v3147
  %v3149 = vsub.f32 1.0, %v3148
  %v3150 = vmul.f32 %v3147, %v3149
  %v3151 = vadd.f32 %v3147, %v3150
  %vm3152 = vweird.f32 %v3139
  %vm3153 = vweird.f32 %v3147
  %vm3154 = vmor %vm3152, %vm3153
  %v3155 = vsel %vm3154, %v3147, %v3151
  %v3156 = vand.u32 2147483647, %v3139
  %vm3157 = vcmp.eq.f32.partialorder %v3156, 8.507059e+37
  %v3158 = vand.u32 %v3139, 2147483648
  %v3159 = vor.u32 1.1754944e-38, %v3158
  %v3160 = vsel %vm3157, %v3159, %v3155
  %v3161 = vmul.f32 1.0, %v3160
  %v3162 = vrcp.pop %v3140
  %v3163 = vmul.f32 %v3140, %v3162
  %v3164 = vsub.f32 1.0, %v3163
  %v3165 = vmul.f32 %v3162, %v3164
  %v3166 = vadd.f32 %v3162, %v3165
  %vm3167 = vweird.f32 %v3140
  %vm3168 = vweird.f32 %v3162
  %vm3169 = vmor %vm3167, %vm3168
  %v3170 = vsel %vm3169, %v3162, %v3166
  %v3171 = vand.u32 2147483647, %v3140
  %vm3172 = vcmp.eq.f32.partialorder %v3171, 8.507059e+37
  %v3173 = vand.u32 %v3140, 2147483648
  %v3174 = vor.u32 1.1754944e-38, %v3173
  %v3175 = vsel %vm3172, %v3174, %v3170
  %v3176 = vmul.f32 1.0, %v3175
  %v3177 = vrcp.pop %v3141
  %v3178 = vmul.f32 %v3141, %v3177
  %v3179 = vsub.f32 1.0, %v3178
  %v3180 = vmul.f32 %v3177, %v3179
  %v3181 = vadd.f32 %v3177, %v3180
  %vm3182 = vweird.f32 %v3141
  %vm3183 = vweird.f32 %v3177
  %vm3184 = vmor %vm3182, %vm3183
  %v3185 = vsel %vm3184, %v3177, %v3181
  %v3186 = vand.u32 2147483647, %v3141
  %vm3187 = vcmp.eq.f32.partialorder %v3186, 8.507059e+37
  %v3188 = vand.u32 %v3141, 2147483648
  %v3189 = vor.u32 1.1754944e-38, %v3188
  %v3190 = vsel %vm3187, %v3189, %v3185
  %v3191 = vmul.f32 1.0, %v3190
  %v3192 = vrcp.pop %v3142
  %v3193 = vmul.f32 %v3142, %v3192
  %v3194 = vsub.f32 1.0, %v3193
  %v3195 = vmul.f32 %v3192, %v3194
  %v3196 = vadd.f32 %v3192, %v3195
  %vm3197 = vweird.f32 %v3142
  %vm3198 = vweird.f32 %v3192
  %vm3199 = vmor %vm3197, %vm3198
  %v3200 = vsel %vm3199, %v3192, %v3196
  %v3201 = vand.u32 2147483647, %v3142
  %vm3202 = vcmp.eq.f32.partialorder %v3201, 8.507059e+37
  %v3203 = vand.u32 %v3142, 2147483648
  %v3204 = vor.u32 1.1754944e-38, %v3203
  %v3205 = vsel %vm3202, %v3204, %v3200
  %v3206 = vmul.f32 1.0, %v3205
  %v3207 = vrcp.pop %v3143
  %v3208 = vmul.f32 %v3143, %v3207
  %v3209 = vsub.f32 1.0, %v3208
  %v3210 = vmul.f32 %v3207, %v3209
  %v3211 = vadd.f32 %v3207, %v3210
  %vm3212 = vweird.f32 %v3143
  %vm3213 = vweird.f32 %v3207
  %vm3214 = vmor %vm3212, %vm3213
  %v3215 = vsel %vm3214, %v3207, %v3211
  %v3216 = vand.u32 2147483647, %v3143
  %vm3217 = vcmp.eq.f32.partialorder %v3216, 8.507059e+37
  %v3218 = vand.u32 %v3143, 2147483648
  %v3219 = vor.u32 1.1754944e-38, %v3218
  %v3220 = vsel %vm3217, %v3219, %v3215
  %v3221 = vmul.f32 1.0, %v3220
  %v3222 = vrcp.pop %v3144
  %v3223 = vmul.f32 %v3144, %v3222
  %v3224 = vsub.f32 1.0, %v3223
  %v3225 = vmul.f32 %v3222, %v3224
  %v3226 = vadd.f32 %v3222, %v3225
  %vm3227 = vweird.f32 %v3144
  %vm3228 = vweird.f32 %v3222
  %vm3229 = vmor %vm3227, %vm3228
  %v3230 = vsel %vm3229, %v3222, %v3226
  %v3231 = vand.u32 2147483647, %v3144
  %vm3232 = vcmp.eq.f32.partialorder %v3231, 8.507059e+37
  %v3233 = vand.u32 %v3144, 2147483648
  %v3234 = vor.u32 1.1754944e-38, %v3233
  %v3235 = vsel %vm3232, %v3234, %v3230
  %v3236 = vmul.f32 1.0, %v3235
  %v3237 = vrcp.pop %v3145
  %v3238 = vmul.f32 %v3145, %v3237
  %v3239 = vsub.f32 1.0, %v3238
  %v3240 = vmul.f32 %v3237, %v3239
  %v3241 = vadd.f32 %v3237, %v3240
  %vm3242 = vweird.f32 %v3145
  %vm3243 = vweird.f32 %v3237
  %vm3244 = vmor %vm3242, %vm3243
  %v3245 = vsel %vm3244, %v3237, %v3241
  %v3246 = vand.u32 2147483647, %v3145
  %vm3247 = vcmp.eq.f32.partialorder %v3246, 8.507059e+37
  %v3248 = vand.u32 %v3145, 2147483648
  %v3249 = vor.u32 1.1754944e-38, %v3248
  %v3250 = vsel %vm3247, %v3249, %v3245
  %v3251 = vmul.f32 1.0, %v3250
  %v3252 = vrcp.pop %v3146
  %v3253 = vmul.f32 %v3146, %v3252
  %v3254 = vsub.f32 1.0, %v3253
  %v3255 = vmul.f32 %v3252, %v3254
  %v3256 = vadd.f32 %v3252, %v3255
  %vm3257 = vweird.f32 %v3146
  %vm3258 = vweird.f32 %v3252
  %vm3259 = vmor %vm3257, %vm3258
  %v3260 = vsel %vm3259, %v3252, %v3256
  %v3261 = vand.u32 2147483647, %v3146
  %vm3262 = vcmp.eq.f32.partialorder %v3261, 8.507059e+37
  %v3263 = vand.u32 %v3146, 2147483648
  %v3264 = vor.u32 1.1754944e-38, %v3263
  %v3265 = vsel %vm3262, %v3264, %v3260
  %v3266 = vmul.f32 1.0, %v3265
  %3275 = vrot.lane.b32.xlu0 %v3161, 120
  %v3276 = vpop.permute.xlu0 %3275
  %3277 = vrot.lane.b32.xlu0 %v3176, 120
  %v3278 = vpop.permute.xlu0 %3277
  %3279 = vrot.lane.b32.xlu0 %v3191, 120
  %v3280 = vpop.permute.xlu0 %3279
  %3281 = vrot.lane.b32.xlu0 %v3206, 120
  %v3282 = vpop.permute.xlu0 %3281
  %3283 = vrot.lane.b32.xlu0 %v3221, 120
  %v3284 = vpop.permute.xlu0 %3283
  %3285 = vrot.lane.b32.xlu0 %v3236, 120
  %v3286 = vpop.permute.xlu0 %3285
  %3287 = vrot.lane.b32.xlu0 %v3251, 120
  %v3288 = vpop.permute.xlu0 %3287
  %3289 = vrot.lane.b32.xlu0 %v3266, 120
  %v3290 = vpop.permute.xlu0 %3289
  %v3299 = vmul.f32 %v3107, %v3276
  %v3300 = vmul.f32 %v3108, %v3278
  %v3301 = vmul.f32 %v3109, %v3280
  %v3302 = vmul.f32 %v3110, %v3282
  %v3303 = vmul.f32 %v3111, %v3284
  %v3304 = vmul.f32 %v3112, %v3286
  %v3305 = vmul.f32 %v3113, %v3288
  %v3306 = vmul.f32 %v3114, %v3290
  %s3307 = scalar_lea.vmem %s7, 16
  %v3308 = vld [vmem:[%s3307] sm:$0xff]
  %v3309 = vpack.c.bf16 %v3300, %v3299
  %v3310 = vpack.c.bf16 %v3302, %v3301
  %v3311 = vpack.c.bf16 %v3304, %v3303
  %v3312 = vpack.c.bf16 %v3306, %v3305
  %v3313 = vpack.c.bf16 %v3308, %v3308
  %s3314 = scalar_lea.vmem %s8, 2
  %v3315 = vld [vmem:[%s3314] sm:$0x1]
  %v3317 = vperm.slane %v3315, 0
  %v3320 = vsel %vm88, %v3309, 0
  %v3323 = vsel %vm88, %v3310, 0
  %v3326 = vsel %vm88, %v3311, 0
  %v3329 = vsel %vm88, %v3312, 0
  %v3332 = vsel %vm269, %v3313, 0
  %3334 = vmatpush.bf16.msra.mxu0 0
  %3335 = vmatpush.bf16.msra.mxu0 0
  %3336 = vmatpush.bf16.msra.mxu0 0
  %3337 = vmatpush.bf16.msra.mxu0 0
  %3338 = vmatpush.bf16.msra.mxu0 0
  %3339 = vmatpush.bf16.msra.mxu0 0
  %3340 = vmatpush.bf16.msra.mxu0 0
  %3341 = vmatpush.bf16.msra.mxu0 %v3332
  %3342 = vmatmul.bf16.gmra.mxu0 %v3320
  %v3343 = vpop.f32.mrf.mxu0
  %v3344 = vpop.f32.mrf.mxu0
  %3345 = vmatmul.bf16.gmra.mxu0 %v3323
  %v3346 = vpop.f32.mrf.mxu0
  %v3347 = vadd.f32 %v3317, %v3346
  %v3348 = vpop.f32.mrf.mxu0
  %v3349 = vadd.f32 %v3317, %v3348
  %3350 = vmatmul.bf16.gmra.mxu0 %v3326
  %v3351 = vpop.f32.mrf.mxu0
  %v3352 = vpop.f32.mrf.mxu0
  %3353 = vmatmul.bf16.gmra.mxu0 %v3329
  %v3354 = vpop.f32.mrf.mxu0
  %v3355 = vadd.f32 %v3317, %v3354
  %v3356 = vpop.f32.mrf.mxu0
  %v3357 = vadd.f32 %v3317, %v3356
  %3358 = vdwg.mxu0
  %v3359 = vadd.f32 %v3347, %v2318
  %v3360 = vadd.f32 %v3349, %v2319
  %v3361 = vadd.f32 %v3355, %v2320
  %v3362 = vadd.f32 %v3357, %v2321
  %v3363 = vpack.c.bf16 %v3299, %v3299
  %v3364 = vpack.c.bf16 %v3300, %v3300
  %v3365 = vpack.c.bf16 %v3301, %v3301
  %v3366 = vpack.c.bf16 %v3302, %v3302
  %v3367 = vpack.c.bf16 %v3303, %v3303
  %v3368 = vpack.c.bf16 %v3304, %v3304
  %v3369 = vpack.c.bf16 %v3305, %v3305
  %v3370 = vpack.c.bf16 %v3306, %v3306
  %v3372 = vsel %vm269, %v3363, 0
  %3374 = vmatpush.bf16.msra.mxu0 0
  %3375 = vmatpush.bf16.msra.mxu0 0
  %3376 = vmatpush.bf16.msra.mxu0 0
  %3377 = vmatpush.bf16.msra.mxu0 0
  %3378 = vmatpush.bf16.msra.mxu0 0
  %3379 = vmatpush.bf16.msra.mxu0 0
  %3380 = vmatpush.bf16.msra.mxu0 0
  %3381 = vmatpush.bf16.msra.mxu0 %v3372
  %3382 = vmatmul.bf16.gmra.mxu0 %v996
  %v3383 = vpop.f32.mrf.mxu0
  %v3384 = vadd.f32 0.0, %v3383
  %v3385 = vpop.f32.mrf.mxu0
  %3386 = vdwg.mxu0
  %v3388 = vsel %vm269, %v3364, 0
  %3390 = vmatpush.bf16.msra.mxu0 0
  %3391 = vmatpush.bf16.msra.mxu0 0
  %3392 = vmatpush.bf16.msra.mxu0 0
  %3393 = vmatpush.bf16.msra.mxu0 0
  %3394 = vmatpush.bf16.msra.mxu0 0
  %3395 = vmatpush.bf16.msra.mxu0 0
  %3396 = vmatpush.bf16.msra.mxu0 0
  %3397 = vmatpush.bf16.msra.mxu0 %v3388
  %3398 = vmatmul.bf16.gmra.mxu0 %v996
  %v3399 = vpop.f32.mrf.mxu0
  %v3400 = vadd.f32 0.0, %v3399
  %v3401 = vpop.f32.mrf.mxu0
  %3402 = vdwg.mxu0
  %v3404 = vsel %vm269, %v3365, 0
  %3406 = vmatpush.bf16.msra.mxu0 0
  %3407 = vmatpush.bf16.msra.mxu0 0
  %3408 = vmatpush.bf16.msra.mxu0 0
  %3409 = vmatpush.bf16.msra.mxu0 0
  %3410 = vmatpush.bf16.msra.mxu0 0
  %3411 = vmatpush.bf16.msra.mxu0 0
  %3412 = vmatpush.bf16.msra.mxu0 0
  %3413 = vmatpush.bf16.msra.mxu0 %v3404
  %3414 = vmatmul.bf16.gmra.mxu0 %v996
  %v3415 = vpop.f32.mrf.mxu0
  %v3416 = vadd.f32 0.0, %v3415
  %v3417 = vpop.f32.mrf.mxu0
  %3418 = vdwg.mxu0
  %v3420 = vsel %vm269, %v3366, 0
  %3422 = vmatpush.bf16.msra.mxu0 0
  %3423 = vmatpush.bf16.msra.mxu0 0
  %3424 = vmatpush.bf16.msra.mxu0 0
  %3425 = vmatpush.bf16.msra.mxu0 0
  %3426 = vmatpush.bf16.msra.mxu0 0
  %3427 = vmatpush.bf16.msra.mxu0 0
  %3428 = vmatpush.bf16.msra.mxu0 0
  %3429 = vmatpush.bf16.msra.mxu0 %v3420
  %3430 = vmatmul.bf16.gmra.mxu0 %v996
  %v3431 = vpop.f32.mrf.mxu0
  %v3432 = vadd.f32 0.0, %v3431
  %v3433 = vpop.f32.mrf.mxu0
  %3434 = vdwg.mxu0
  %v3436 = vsel %vm269, %v3367, 0
  %3438 = vmatpush.bf16.msra.mxu0 0
  %3439 = vmatpush.bf16.msra.mxu0 0
  %3440 = vmatpush.bf16.msra.mxu0 0
  %3441 = vmatpush.bf16.msra.mxu0 0
  %3442 = vmatpush.bf16.msra.mxu0 0
  %3443 = vmatpush.bf16.msra.mxu0 0
  %3444 = vmatpush.bf16.msra.mxu0 0
  %3445 = vmatpush.bf16.msra.mxu0 %v3436
  %3446 = vmatmul.bf16.gmra.mxu0 %v996
  %v3447 = vpop.f32.mrf.mxu0
  %v3448 = vadd.f32 0.0, %v3447
  %v3449 = vpop.f32.mrf.mxu0
  %3450 = vdwg.mxu0
  %v3452 = vsel %vm269, %v3368, 0
  %3454 = vmatpush.bf16.msra.mxu0 0
  %3455 = vmatpush.bf16.msra.mxu0 0
  %3456 = vmatpush.bf16.msra.mxu0 0
  %3457 = vmatpush.bf16.msra.mxu0 0
  %3458 = vmatpush.bf16.msra.mxu0 0
  %3459 = vmatpush.bf16.msra.mxu0 0
  %3460 = vmatpush.bf16.msra.mxu0 0
  %3461 = vmatpush.bf16.msra.mxu0 %v3452
  %3462 = vmatmul.bf16.gmra.mxu0 %v996
  %v3463 = vpop.f32.mrf.mxu0
  %v3464 = vadd.f32 0.0, %v3463
  %v3465 = vpop.f32.mrf.mxu0
  %3466 = vdwg.mxu0
  %v3468 = vsel %vm269, %v3369, 0
  %3470 = vmatpush.bf16.msra.mxu0 0
  %3471 = vmatpush.bf16.msra.mxu0 0
  %3472 = vmatpush.bf16.msra.mxu0 0
  %3473 = vmatpush.bf16.msra.mxu0 0
  %3474 = vmatpush.bf16.msra.mxu0 0
  %3475 = vmatpush.bf16.msra.mxu0 0
  %3476 = vmatpush.bf16.msra.mxu0 0
  %3477 = vmatpush.bf16.msra.mxu0 %v3468
  %3478 = vmatmul.bf16.gmra.mxu0 %v996
  %v3479 = vpop.f32.mrf.mxu0
  %v3480 = vadd.f32 0.0, %v3479
  %v3481 = vpop.f32.mrf.mxu0
  %3482 = vdwg.mxu0
  %v3484 = vsel %vm269, %v3370, 0
  %3486 = vmatpush.bf16.msra.mxu0 0
  %3487 = vmatpush.bf16.msra.mxu0 0
  %3488 = vmatpush.bf16.msra.mxu0 0
  %3489 = vmatpush.bf16.msra.mxu0 0
  %3490 = vmatpush.bf16.msra.mxu0 0
  %3491 = vmatpush.bf16.msra.mxu0 0
  %3492 = vmatpush.bf16.msra.mxu0 0
  %3493 = vmatpush.bf16.msra.mxu0 %v3484
  %3494 = vmatmul.bf16.gmra.mxu0 %v996
  %v3495 = vpop.f32.mrf.mxu0
  %v3496 = vadd.f32 0.0, %v3495
  %v3497 = vpop.f32.mrf.mxu0
  %3498 = vdwg.mxu0
  %v3499 = vpack.c.bf16 %v3384, %v3384
  %v3500 = vpack.c.bf16 %v3400, %v3400
  %v3501 = vpack.c.bf16 %v3416, %v3416
  %v3502 = vpack.c.bf16 %v3432, %v3432
  %v3503 = vpack.c.bf16 %v3448, %v3448
  %v3504 = vpack.c.bf16 %v3464, %v3464
  %v3505 = vpack.c.bf16 %v3480, %v3480
  %v3506 = vpack.c.bf16 %v3496, %v3496
  %v3508 = vsel %vm269, %v3499, 0
  %3510 = vmatpush.bf16.msra.mxu0 0
  %3511 = vmatpush.bf16.msra.mxu0 0
  %3512 = vmatpush.bf16.msra.mxu0 0
  %3513 = vmatpush.bf16.msra.mxu0 0
  %3514 = vmatpush.bf16.msra.mxu0 0
  %3515 = vmatpush.bf16.msra.mxu0 0
  %3516 = vmatpush.bf16.msra.mxu0 0
  %3517 = vmatpush.bf16.msra.mxu0 %v3508
  %3518 = vmatmul.bf16.gmra.mxu0 %v996
  %v3519 = vpop.f32.mrf.mxu0
  %v3520 = vadd.f32 0.0, %v3519
  %v3521 = vpop.f32.mrf.mxu0
  %3522 = vdwg.mxu0
  %v3524 = vsel %vm269, %v3500, 0
  %3526 = vmatpush.bf16.msra.mxu0 0
  %3527 = vmatpush.bf16.msra.mxu0 0
  %3528 = vmatpush.bf16.msra.mxu0 0
  %3529 = vmatpush.bf16.msra.mxu0 0
  %3530 = vmatpush.bf16.msra.mxu0 0
  %3531 = vmatpush.bf16.msra.mxu0 0
  %3532 = vmatpush.bf16.msra.mxu0 0
  %3533 = vmatpush.bf16.msra.mxu0 %v3524
  %3534 = vmatmul.bf16.gmra.mxu0 %v996
  %v3535 = vpop.f32.mrf.mxu0
  %v3536 = vadd.f32 0.0, %v3535
  %v3537 = vpop.f32.mrf.mxu0
  %3538 = vdwg.mxu0
  %v3540 = vsel %vm269, %v3501, 0
  %3542 = vmatpush.bf16.msra.mxu0 0
  %3543 = vmatpush.bf16.msra.mxu0 0
  %3544 = vmatpush.bf16.msra.mxu0 0
  %3545 = vmatpush.bf16.msra.mxu0 0
  %3546 = vmatpush.bf16.msra.mxu0 0
  %3547 = vmatpush.bf16.msra.mxu0 0
  %3548 = vmatpush.bf16.msra.mxu0 0
  %3549 = vmatpush.bf16.msra.mxu0 %v3540
  %3550 = vmatmul.bf16.gmra.mxu0 %v996
  %v3551 = vpop.f32.mrf.mxu0
  %v3552 = vadd.f32 0.0, %v3551
  %v3553 = vpop.f32.mrf.mxu0
  %3554 = vdwg.mxu0
  %v3556 = vsel %vm269, %v3502, 0
  %3558 = vmatpush.bf16.msra.mxu0 0
  %3559 = vmatpush.bf16.msra.mxu0 0
  %3560 = vmatpush.bf16.msra.mxu0 0
  %3561 = vmatpush.bf16.msra.mxu0 0
  %3562 = vmatpush.bf16.msra.mxu0 0
  %3563 = vmatpush.bf16.msra.mxu0 0
  %3564 = vmatpush.bf16.msra.mxu0 0
  %3565 = vmatpush.bf16.msra.mxu0 %v3556
  %3566 = vmatmul.bf16.gmra.mxu0 %v996
  %v3567 = vpop.f32.mrf.mxu0
  %v3568 = vadd.f32 0.0, %v3567
  %v3569 = vpop.f32.mrf.mxu0
  %3570 = vdwg.mxu0
  %v3572 = vsel %vm269, %v3503, 0
  %3574 = vmatpush.bf16.msra.mxu0 0
  %3575 = vmatpush.bf16.msra.mxu0 0
  %3576 = vmatpush.bf16.msra.mxu0 0
  %3577 = vmatpush.bf16.msra.mxu0 0
  %3578 = vmatpush.bf16.msra.mxu0 0
  %3579 = vmatpush.bf16.msra.mxu0 0
  %3580 = vmatpush.bf16.msra.mxu0 0
  %3581 = vmatpush.bf16.msra.mxu0 %v3572
  %3582 = vmatmul.bf16.gmra.mxu0 %v996
  %v3583 = vpop.f32.mrf.mxu0
  %v3584 = vadd.f32 0.0, %v3583
  %v3585 = vpop.f32.mrf.mxu0
  %3586 = vdwg.mxu0
  %v3588 = vsel %vm269, %v3504, 0
  %3590 = vmatpush.bf16.msra.mxu0 0
  %3591 = vmatpush.bf16.msra.mxu0 0
  %3592 = vmatpush.bf16.msra.mxu0 0
  %3593 = vmatpush.bf16.msra.mxu0 0
  %3594 = vmatpush.bf16.msra.mxu0 0
  %3595 = vmatpush.bf16.msra.mxu0 0
  %3596 = vmatpush.bf16.msra.mxu0 0
  %3597 = vmatpush.bf16.msra.mxu0 %v3588
  %3598 = vmatmul.bf16.gmra.mxu0 %v996
  %v3599 = vpop.f32.mrf.mxu0
  %v3600 = vadd.f32 0.0, %v3599
  %v3601 = vpop.f32.mrf.mxu0
  %3602 = vdwg.mxu0
  %v3604 = vsel %vm269, %v3505, 0
  %3606 = vmatpush.bf16.msra.mxu0 0
  %3607 = vmatpush.bf16.msra.mxu0 0
  %3608 = vmatpush.bf16.msra.mxu0 0
  %3609 = vmatpush.bf16.msra.mxu0 0
  %3610 = vmatpush.bf16.msra.mxu0 0
  %3611 = vmatpush.bf16.msra.mxu0 0
  %3612 = vmatpush.bf16.msra.mxu0 0
  %3613 = vmatpush.bf16.msra.mxu0 %v3604
  %3614 = vmatmul.bf16.gmra.mxu0 %v996
  %v3615 = vpop.f32.mrf.mxu0
  %v3616 = vadd.f32 0.0, %v3615
  %v3617 = vpop.f32.mrf.mxu0
  %3618 = vdwg.mxu0
  %v3620 = vsel %vm269, %v3506, 0
  %3622 = vmatpush.bf16.msra.mxu0 0
  %3623 = vmatpush.bf16.msra.mxu0 0
  %3624 = vmatpush.bf16.msra.mxu0 0
  %3625 = vmatpush.bf16.msra.mxu0 0
  %3626 = vmatpush.bf16.msra.mxu0 0
  %3627 = vmatpush.bf16.msra.mxu0 0
  %3628 = vmatpush.bf16.msra.mxu0 0
  %3629 = vmatpush.bf16.msra.mxu0 %v3620
  %3630 = vmatmul.bf16.gmra.mxu0 %v996
  %v3631 = vpop.f32.mrf.mxu0
  %v3632 = vadd.f32 0.0, %v3631
  %v3633 = vpop.f32.mrf.mxu0
  %3634 = vdwg.mxu0
  %s3635 = scalar_lea.vmem %s9, 48
  %v3636 = vld [vmem:[%s3635] sm:$0xff]
  %v3637 = vld [vmem:[%s3635 + $0x8] sm:$0xff]
  %v3638 = vld [vmem:[%s3635 + $0x10] sm:$0xff]
  %v3639 = vpack.c.bf16 %v3636, %v3636
  %v3640 = vpack.c.bf16 %v3400, %v3384
  %v3641 = vpack.c.bf16 %v3432, %v3416
  %v3642 = vpack.c.bf16 %v3464, %v3448
  %v3643 = vpack.c.bf16 %v3496, %v3480
  %v3644 = vpack.c.bf16 %v3637, %v3637
  %v3646 = vsel %vm88, %v3640, 0
  %v3649 = vsel %vm88, %v3641, 0
  %v3652 = vsel %vm88, %v3642, 0
  %v3655 = vsel %vm88, %v3643, 0
  %v3658 = vsel %vm269, %v3644, 0
  %3660 = vmatpush.bf16.msra.mxu0 0
  %3661 = vmatpush.bf16.msra.mxu0 0
  %3662 = vmatpush.bf16.msra.mxu0 0
  %3663 = vmatpush.bf16.msra.mxu0 0
  %3664 = vmatpush.bf16.msra.mxu0 0
  %3665 = vmatpush.bf16.msra.mxu0 0
  %3666 = vmatpush.bf16.msra.mxu0 0
  %3667 = vmatpush.bf16.msra.mxu0 %v3658
  %3668 = vmatmul.bf16.gmra.mxu0 %v3646
  %v3669 = vpop.f32.mrf.mxu0
  %v3670 = vadd.f32 0.0, %v3669
  %v3671 = vpop.f32.mrf.mxu0
  %v3672 = vadd.f32 0.0, %v3671
  %3673 = vmatmul.bf16.gmra.mxu0 %v3649
  %v3674 = vpop.f32.mrf.mxu0
  %v3675 = vadd.f32 0.0, %v3674
  %v3676 = vpop.f32.mrf.mxu0
  %v3677 = vadd.f32 0.0, %v3676
  %3678 = vmatmul.bf16.gmra.mxu0 %v3652
  %v3679 = vpop.f32.mrf.mxu0
  %v3680 = vadd.f32 0.0, %v3679
  %v3681 = vpop.f32.mrf.mxu0
  %v3682 = vadd.f32 0.0, %v3681
  %3683 = vmatmul.bf16.gmra.mxu0 %v3655
  %v3684 = vpop.f32.mrf.mxu0
  %v3685 = vadd.f32 0.0, %v3684
  %v3686 = vpop.f32.mrf.mxu0
  %v3687 = vadd.f32 0.0, %v3686
  %3688 = vdwg.mxu0
  %v3690 = vsel %vm269, %v3639, 0
  %3692 = vmatpush.bf16.msra.mxu0 0
  %3693 = vmatpush.bf16.msra.mxu0 0
  %3694 = vmatpush.bf16.msra.mxu0 0
  %3695 = vmatpush.bf16.msra.mxu0 0
  %3696 = vmatpush.bf16.msra.mxu0 0
  %3697 = vmatpush.bf16.msra.mxu0 0
  %3698 = vmatpush.bf16.msra.mxu0 0
  %3699 = vmatpush.bf16.msra.mxu0 %v3690
  %3700 = vmatmul.bf16.gmra.mxu0 %v3320
  %v3701 = vpop.f32.mrf.mxu0
  %v3702 = vadd.f32 %v3670, %v3701
  %v3703 = vpop.f32.mrf.mxu0
  %v3704 = vadd.f32 %v3672, %v3703
  %3705 = vmatmul.bf16.gmra.mxu0 %v3323
  %v3706 = vpop.f32.mrf.mxu0
  %v3707 = vadd.f32 %v3675, %v3706
  %v3708 = vpop.f32.mrf.mxu0
  %v3709 = vadd.f32 %v3677, %v3708
  %3710 = vmatmul.bf16.gmra.mxu0 %v3326
  %v3711 = vpop.f32.mrf.mxu0
  %v3712 = vadd.f32 %v3680, %v3711
  %v3713 = vpop.f32.mrf.mxu0
  %v3714 = vadd.f32 %v3682, %v3713
  %3715 = vmatmul.bf16.gmra.mxu0 %v3329
  %v3716 = vpop.f32.mrf.mxu0
  %v3717 = vadd.f32 %v3685, %v3716
  %v3718 = vpop.f32.mrf.mxu0
  %v3719 = vadd.f32 %v3687, %v3718
  %3720 = vdwg.mxu0
  %v3721 = vpack.c.bf16 %v3536, %v3520
  %v3722 = vpack.c.bf16 %v3568, %v3552
  %v3723 = vpack.c.bf16 %v3600, %v3584
  %v3724 = vpack.c.bf16 %v3632, %v3616
  %v3725 = vpack.c.bf16 %v3638, %v3638
  %v3727 = vsel %vm88, %v3721, 0
  %v3730 = vsel %vm88, %v3722, 0
  %v3733 = vsel %vm88, %v3723, 0
  %v3736 = vsel %vm88, %v3724, 0
  %v3739 = vsel %vm269, %v3725, 0
  %3741 = vmatpush.bf16.msra.mxu0 0
  %3742 = vmatpush.bf16.msra.mxu0 0
  %3743 = vmatpush.bf16.msra.mxu0 0
  %3744 = vmatpush.bf16.msra.mxu0 0
  %3745 = vmatpush.bf16.msra.mxu0 0
  %3746 = vmatpush.bf16.msra.mxu0 0
  %3747 = vmatpush.bf16.msra.mxu0 0
  %3748 = vmatpush.bf16.msra.mxu0 %v3739
  %3749 = vmatmul.bf16.gmra.mxu0 %v3727
  %v3750 = vpop.f32.mrf.mxu0
  %v3751 = vadd.f32 0.0, %v3750
  %v3752 = vpop.f32.mrf.mxu0
  %v3753 = vadd.f32 0.0, %v3752
  %3754 = vmatmul.bf16.gmra.mxu0 %v3730
  %v3755 = vpop.f32.mrf.mxu0
  %v3756 = vadd.f32 0.0, %v3755
  %v3757 = vpop.f32.mrf.mxu0
  %v3758 = vadd.f32 0.0, %v3757
  %3759 = vmatmul.bf16.gmra.mxu0 %v3733
  %v3760 = vpop.f32.mrf.mxu0
  %v3761 = vadd.f32 0.0, %v3760
  %v3762 = vpop.f32.mrf.mxu0
  %v3763 = vadd.f32 0.0, %v3762
  %3764 = vmatmul.bf16.gmra.mxu0 %v3736
  %v3765 = vpop.f32.mrf.mxu0
  %v3766 = vadd.f32 0.0, %v3765
  %v3767 = vpop.f32.mrf.mxu0
  %v3768 = vadd.f32 0.0, %v3767
  %3769 = vdwg.mxu0
  %v3770 = vadd.f32 %v3702, %v3751
  %v3771 = vadd.f32 %v3704, %v3753
  %v3772 = vadd.f32 %v3707, %v3756
  %v3773 = vadd.f32 %v3709, %v3758
  %v3774 = vadd.f32 %v3712, %v3761
  %v3775 = vadd.f32 %v3714, %v3763
  %v3776 = vadd.f32 %v3717, %v3766
  %v3777 = vadd.f32 %v3719, %v3768
  %s3778 = scalar_lea.vmem %s10, 2
  %v3779 = vld [vmem:[%s3778] sm:$0x1]
  %v3781 = vperm.slane %v3779, 0
  %v3783 = vadd.f32 %v3770, %v3781
  %v3784 = vadd.f32 %v3771, %v3781
  %v3785 = vadd.f32 %v3772, %v3781
  %v3786 = vadd.f32 %v3773, %v3781
  %v3787 = vadd.f32 %v3774, %v3781
  %v3788 = vadd.f32 %v3775, %v3781
  %v3789 = vadd.f32 %v3776, %v3781
  %v3790 = vadd.f32 %v3777, %v3781
  %v3791 = vadd.f32 %v3783, %v2976
  %v3792 = vadd.f32 %v3784, %v2977
  %v3793 = vadd.f32 %v3785, %v2978
  %v3794 = vadd.f32 %v3786, %v2979
  %v3795 = vadd.f32 %v3787, %v2981
  %v3796 = vadd.f32 %v3788, %v2982
  %v3797 = vadd.f32 %v3789, %v2983
  %v3798 = vadd.f32 %v3790, %v2984
  %s3799 = scalar_lea.vmem %s11, 2
  %v3800 = vld [vmem:[%s3799] sm:$0x1]
  %s3801 = scalar_lea.vmem %s12, 2
  %v3802 = vld [vmem:[%s3801] sm:$0x1]
  %v3803 = vsel %vm88, %v3791, 0.0
  %v3804 = vsel %vm88, %v3792, 0.0
  %v3805 = vadd.f32 %v3803, %v3804
  %v3806 = vsel %vm88, %v3793, 0.0
  %v3807 = vadd.f32 %v3805, %v3806
  %v3808 = vsel %vm88, %v3794, 0.0
  %v3809 = vadd.f32 %v3807, %v3808
  %v3810 = vsel %vm88, %v3795, 0.0
  %v3811 = vadd.f32 %v3809, %v3810
  %v3812 = vsel %vm88, %v3796, 0.0
  %v3813 = vadd.f32 %v3811, %v3812
  %v3814 = vsel %vm88, %v3797, 0.0
  %v3815 = vadd.f32 %v3813, %v3814
  %v3816 = vsel %vm88, %v3798, 0.0
  %v3817 = vadd.f32 %v3815, %v3816
  %v3818 = vrot.slane %v3817, 4
  %v3819 = vadd.f32 %v3817, %v3818
  %v3820 = vrot.slane %v3819, 2
  %v3821 = vadd.f32 %v3819, %v3820
  %v3822 = vrot.slane %v3821, 1
  %v3823 = vadd.f32 %v3821, %v3822
  %v3824 = vrcp.pop 64.0
  %v3825 = vmul.f32 64.0, %v3824
  %v3826 = vsub.f32 1.0, %v3825
  %v3827 = vmul.f32 %v3824, %v3826
  %v3828 = vadd.f32 %v3824, %v3827
  %vm3829 = vweird.f32 %v3824
  %v3830 = vsel %vm3829, %v3824, %v3828
  %v3831 = vmul.f32 %v3823, %v3830
  %v3832 = vsub.f32 %v3791, %v3831
  %v3833 = vsub.f32 %v3792, %v3831
  %v3834 = vsub.f32 %v3793, %v3831
  %v3835 = vsub.f32 %v3794, %v3831
  %v3836 = vsub.f32 %v3795, %v3831
  %v3837 = vsub.f32 %v3796, %v3831
  %v3838 = vsub.f32 %v3797, %v3831
  %v3839 = vsub.f32 %v3798, %v3831
  %v3840 = vmul.f32 %v3832, %v3832
  %v3841 = vmul.f32 %v3833, %v3833
  %v3842 = vmul.f32 %v3834, %v3834
  %v3843 = vmul.f32 %v3835, %v3835
  %v3844 = vmul.f32 %v3836, %v3836
  %v3845 = vmul.f32 %v3837, %v3837
  %v3846 = vmul.f32 %v3838, %v3838
  %v3847 = vmul.f32 %v3839, %v3839
  %v3848 = vsel %vm88, %v3840, 0.0
  %v3849 = vsel %vm88, %v3841, 0.0
  %v3850 = vadd.f32 %v3848, %v3849
  %v3851 = vsel %vm88, %v3842, 0.0
  %v3852 = vadd.f32 %v3850, %v3851
  %v3853 = vsel %vm88, %v3843, 0.0
  %v3854 = vadd.f32 %v3852, %v3853
  %v3855 = vsel %vm88, %v3844, 0.0
  %v3856 = vadd.f32 %v3854, %v3855
  %v3857 = vsel %vm88, %v3845, 0.0
  %v3858 = vadd.f32 %v3856, %v3857
  %v3859 = vsel %vm88, %v3846, 0.0
  %v3860 = vadd.f32 %v3858, %v3859
  %v3861 = vsel %vm88, %v3847, 0.0
  %v3862 = vadd.f32 %v3860, %v3861
  %v3863 = vrot.slane %v3862, 4
  %v3864 = vadd.f32 %v3862, %v3863
  %v3865 = vrot.slane %v3864, 2
  %v3866 = vadd.f32 %v3864, %v3865
  %v3867 = vrot.slane %v3866, 1
  %v3868 = vadd.f32 %v3866, %v3867
  %v3869 = vmul.f32 %v3868, %v3830
  %v3870 = vadd.f32 %v3869, 1e-05
  %v3871 = vrsqrt.pop %v3870
  %v3872 = vmul.f32 %v3871, %v3870
  %v3873 = vmul.f32 %v3872, %v3871
  %v3874 = vmul.f32 0.5, %v3873
  %v3875 = vsub.f32 1.5, %v3874
  %v3876 = vmul.f32 %v3871, %v3875
  %vm3877 = vweird.f32 %v3870
  %vm3878 = vweird.f32 %v3871
  %vm3879 = vmor %vm3877, %vm3878
  %v3880 = vsel %vm3879, %v3871, %v3876
  %v3881 = vmul.f32 %v3832, %v3880
  %v3882 = vmul.f32 %v3833, %v3880
  %v3883 = vmul.f32 %v3834, %v3880
  %v3884 = vmul.f32 %v3835, %v3880
  %v3885 = vmul.f32 %v3836, %v3880
  %v3886 = vmul.f32 %v3837, %v3880
  %v3887 = vmul.f32 %v3838, %v3880
  %v3888 = vmul.f32 %v3839, %v3880
  %v3890 = vperm.slane %v3800, 0
  %v3892 = vmul.f32 %v3881, %v3890
  %v3893 = vmul.f32 %v3882, %v3890
  %v3894 = vmul.f32 %v3883, %v3890
  %v3895 = vmul.f32 %v3884, %v3890
  %v3896 = vmul.f32 %v3885, %v3890
  %v3897 = vmul.f32 %v3886, %v3890
  %v3898 = vmul.f32 %v3887, %v3890
  %v3899 = vmul.f32 %v3888, %v3890
  %v3901 = vperm.slane %v3802, 0
  %v3903 = vadd.f32 %v3892, %v3901
  %v3904 = vadd.f32 %v3893, %v3901
  %v3905 = vadd.f32 %v3894, %v3901
  %v3906 = vadd.f32 %v3895, %v3901
  %v3907 = vadd.f32 %v3896, %v3901
  %v3908 = vadd.f32 %v3897, %v3901
  %v3909 = vadd.f32 %v3898, %v3901
  %v3910 = vadd.f32 %v3899, %v3901
  %s3911 = scalar_lea.vmem %s5, 48
  %v3912 = vld [vmem:[%s3911] sm:$0xff]
  %v3913 = vld [vmem:[%s3911 + $0x8] sm:$0xff]
  %s3914 = scalar_lea.vmem %s6, 3
  %v3915 = vld [vmem:[%s3914] sm:$0x1]
  %v3916 = vpack.c.bf16 %v3904, %v3903
  %v3917 = vpack.c.bf16 %v3908, %v3907
  %v3918 = vpack.c.bf16 %v3912, %v3912
  %v3920 = vsel %vm88, %v3916, 0
  %v3923 = vsel %vm88, %v3917, 0
  %v3926 = vsel %vm269, %v3918, 0
  %3928 = vmatpush.bf16.msra.mxu0 0
  %3929 = vmatpush.bf16.msra.mxu0 0
  %3930 = vmatpush.bf16.msra.mxu0 0
  %3931 = vmatpush.bf16.msra.mxu0 0
  %3932 = vmatpush.bf16.msra.mxu0 0
  %3933 = vmatpush.bf16.msra.mxu0 0
  %3934 = vmatpush.bf16.msra.mxu0 0
  %3935 = vmatpush.bf16.msra.mxu0 %v3926
  %3936 = vmatmul.bf16.gmra.mxu0 %v3920
  %v3937 = vpop.f32.mrf.mxu0
  %v3938 = vadd.f32 0.0, %v3937
  %v3939 = vpop.f32.mrf.mxu0
  %v3940 = vadd.f32 0.0, %v3939
  %3941 = vmatmul.bf16.gmra.mxu0 %v3923
  %v3942 = vpop.f32.mrf.mxu0
  %v3943 = vadd.f32 0.0, %v3942
  %v3944 = vpop.f32.mrf.mxu0
  %v3945 = vadd.f32 0.0, %v3944
  %3946 = vdwg.mxu0
  %v3948 = vperm.slane %v3915, 0
  %v3950 = vadd.f32 %v3948, %v3938
  %v3951 = vadd.f32 %v3948, %v3940
  %v3952 = vadd.f32 %v3948, %v3943
  %v3953 = vadd.f32 %v3948, %v3945
  %v3954 = vpack.c.bf16 %v3906, %v3905
  %v3955 = vpack.c.bf16 %v3910, %v3909
  %v3956 = vpack.c.bf16 %v3913, %v3913
  %v3958 = vsel %vm88, %v3954, 0
  %v3961 = vsel %vm88, %v3955, 0
  %v3964 = vsel %vm269, %v3956, 0
  %3966 = vmatpush.bf16.msra.mxu0 0
  %3967 = vmatpush.bf16.msra.mxu0 0
  %3968 = vmatpush.bf16.msra.mxu0 0
  %3969 = vmatpush.bf16.msra.mxu0 0
  %3970 = vmatpush.bf16.msra.mxu0 0
  %3971 = vmatpush.bf16.msra.mxu0 0
  %3972 = vmatpush.bf16.msra.mxu0 0
  %3973 = vmatpush.bf16.msra.mxu0 %v3964
  %3974 = vmatmul.bf16.gmra.mxu0 %v3958
  %v3975 = vpop.f32.mrf.mxu0
  %v3976 = vadd.f32 0.0, %v3975
  %v3977 = vpop.f32.mrf.mxu0
  %v3978 = vadd.f32 0.0, %v3977
  %3979 = vmatmul.bf16.gmra.mxu0 %v3961
  %v3980 = vpop.f32.mrf.mxu0
  %v3981 = vadd.f32 0.0, %v3980
  %v3982 = vpop.f32.mrf.mxu0
  %v3983 = vadd.f32 0.0, %v3982
  %3984 = vdwg.mxu0
  %v3985 = vadd.f32 %v3950, %v3976
  %v3986 = vadd.f32 %v3951, %v3978
  %v3987 = vadd.f32 %v3952, %v3981
  %v3988 = vadd.f32 %v3953, %v3983
  %v3989 = vtanh.pop %v3985
  %v3990 = vtanh.pop %v3986
  %v3991 = vtanh.pop %v3987
  %v3992 = vtanh.pop %v3988
  %v3993 = vxor.u32 %v3985, 2147483648
  %v3994 = vxor.u32 %v3986, 2147483648
  %v3995 = vxor.u32 %v3987, 2147483648
  %v3996 = vxor.u32 %v3988, 2147483648
  %v3997 = vmul.f32 %v3993, 1.442695
  %v3998 = vpow.pop %v3997
  %v3999 = vmul.f32 %v3994, 1.442695
  %v4000 = vpow.pop %v3999
  %v4001 = vmul.f32 %v3995, 1.442695
  %v4002 = vpow.pop %v4001
  %v4003 = vmul.f32 %v3996, 1.442695
  %v4004 = vpow.pop %v4003
  %v4005 = vadd.f32 %v3998, 1.0
  %v4006 = vadd.f32 %v4000, 1.0
  %v4007 = vadd.f32 %v4002, 1.0
  %v4008 = vadd.f32 %v4004, 1.0
  %v4009 = vrcp.pop %v4005
  %v4010 = vmul.f32 %v4005, %v4009
  %v4011 = vsub.f32 1.0, %v4010
  %v4012 = vmul.f32 %v4009, %v4011
  %v4013 = vadd.f32 %v4009, %v4012
  %vm4014 = vweird.f32 %v4005
  %vm4015 = vweird.f32 %v4009
  %vm4016 = vmor %vm4014, %vm4015
  %v4017 = vsel %vm4016, %v4009, %v4013
  %v4018 = vand.u32 2147483647, %v4005
  %vm4019 = vcmp.eq.f32.partialorder %v4018, 8.507059e+37
  %v4020 = vand.u32 %v4005, 2147483648
  %v4021 = vor.u32 1.1754944e-38, %v4020
  %v4022 = vsel %vm4019, %v4021, %v4017
  %v4023 = vmul.f32 1.0, %v4022
  %v4024 = vrcp.pop %v4006
  %v4025 = vmul.f32 %v4006, %v4024
  %v4026 = vsub.f32 1.0, %v4025
  %v4027 = vmul.f32 %v4024, %v4026
  %v4028 = vadd.f32 %v4024, %v4027
  %vm4029 = vweird.f32 %v4006
  %vm4030 = vweird.f32 %v4024
  %vm4031 = vmor %vm4029, %vm4030
  %v4032 = vsel %vm4031, %v4024, %v4028
  %v4033 = vand.u32 2147483647, %v4006
  %vm4034 = vcmp.eq.f32.partialorder %v4033, 8.507059e+37
  %v4035 = vand.u32 %v4006, 2147483648
  %v4036 = vor.u32 1.1754944e-38, %v4035
  %v4037 = vsel %vm4034, %v4036, %v4032
  %v4038 = vmul.f32 1.0, %v4037
  %v4039 = vrcp.pop %v4007
  %v4040 = vmul.f32 %v4007, %v4039
  %v4041 = vsub.f32 1.0, %v4040
  %v4042 = vmul.f32 %v4039, %v4041
  %v4043 = vadd.f32 %v4039, %v4042
  %vm4044 = vweird.f32 %v4007
  %vm4045 = vweird.f32 %v4039
  %vm4046 = vmor %vm4044, %vm4045
  %v4047 = vsel %vm4046, %v4039, %v4043
  %v4048 = vand.u32 2147483647, %v4007
  %vm4049 = vcmp.eq.f32.partialorder %v4048, 8.507059e+37
  %v4050 = vand.u32 %v4007, 2147483648
  %v4051 = vor.u32 1.1754944e-38, %v4050
  %v4052 = vsel %vm4049, %v4051, %v4047
  %v4053 = vmul.f32 1.0, %v4052
  %v4054 = vrcp.pop %v4008
  %v4055 = vmul.f32 %v4008, %v4054
  %v4056 = vsub.f32 1.0, %v4055
  %v4057 = vmul.f32 %v4054, %v4056
  %v4058 = vadd.f32 %v4054, %v4057
  %vm4059 = vweird.f32 %v4008
  %vm4060 = vweird.f32 %v4054
  %vm4061 = vmor %vm4059, %vm4060
  %v4062 = vsel %vm4061, %v4054, %v4058
  %v4063 = vand.u32 2147483647, %v4008
  %vm4064 = vcmp.eq.f32.partialorder %v4063, 8.507059e+37
  %v4065 = vand.u32 %v4008, 2147483648
  %v4066 = vor.u32 1.1754944e-38, %v4065
  %v4067 = vsel %vm4064, %v4066, %v4062
  %v4068 = vmul.f32 1.0, %v4067
  %4073 = vrot.lane.b32.xlu0 %v4023, 120
  %v4074 = vpop.permute.xlu0 %4073
  %4075 = vrot.lane.b32.xlu0 %v4038, 120
  %v4076 = vpop.permute.xlu0 %4075
  %4077 = vrot.lane.b32.xlu0 %v4053, 120
  %v4078 = vpop.permute.xlu0 %4077
  %4079 = vrot.lane.b32.xlu0 %v4068, 120
  %v4080 = vpop.permute.xlu0 %4079
  %v4085 = vmul.f32 %v3989, %v4074
  %v4086 = vmul.f32 %v3990, %v4076
  %v4087 = vmul.f32 %v3991, %v4078
  %v4088 = vmul.f32 %v3992, %v4080
  %s4089 = scalar_lea.vmem %s7, 24
  %v4090 = vld [vmem:[%s4089] sm:$0xff]
  %v4091 = vpack.c.bf16 %v4086, %v4085
  %v4092 = vpack.c.bf16 %v4088, %v4087
  %v4093 = vpack.c.bf16 %v4090, %v4090
  %s4094 = scalar_lea.vmem %s8, 3
  %v4095 = vld [vmem:[%s4094] sm:$0x1]
  %v4097 = vperm.slane %v4095, 0
  %v4100 = vsel %vm88, %v4091, 0
  %v4103 = vsel %vm88, %v4092, 0
  %v4106 = vsel %vm269, %v4093, 0
  %4108 = vmatpush.bf16.msra.mxu0 0
  %4109 = vmatpush.bf16.msra.mxu0 0
  %4110 = vmatpush.bf16.msra.mxu0 0
  %4111 = vmatpush.bf16.msra.mxu0 0
  %4112 = vmatpush.bf16.msra.mxu0 0
  %4113 = vmatpush.bf16.msra.mxu0 0
  %4114 = vmatpush.bf16.msra.mxu0 0
  %4115 = vmatpush.bf16.msra.mxu0 %v4106
  %4116 = vmatmul.bf16.gmra.mxu0 %v4100
  %v4117 = vpop.f32.mrf.mxu0
  %v4118 = vadd.f32 %v4097, %v4117
  %v4119 = vpop.f32.mrf.mxu0
  %v4120 = vadd.f32 %v4097, %v4119
  %4121 = vmatmul.bf16.gmra.mxu0 %v4103
  %v4122 = vpop.f32.mrf.mxu0
  %v4123 = vadd.f32 %v4097, %v4122
  %v4124 = vpop.f32.mrf.mxu0
  %v4125 = vadd.f32 %v4097, %v4124
  %4126 = vdwg.mxu0
  %v4127 = vadd.f32 %v4118, %v3359
  %v4128 = vadd.f32 %v4120, %v3360
  %v4129 = vadd.f32 %v4123, %v3361
  %v4130 = vadd.f32 %v4125, %v3362
  %v4131 = vmax.f32 %v4127, 0.0
  %v4132 = vmax.f32 %v4128, 0.0
  %v4133 = vmax.f32 %v4129, 0.0
  %v4134 = vmax.f32 %v4130, 0.0
  %vm4135 = vcmask 130048
  %v4136 = vsel %vm4135, %v4131, 0.0
  %v4137 = vsel %vm4135, %v4132, 0.0
  %v4138 = vadd.f32 %v4136, %v4137
  %v4139 = vsel %vm4135, %v4133, 0.0
  %v4140 = vadd.f32 %v4138, %v4139
  %v4141 = vsel %vm4135, %v4134, 0.0
  %v4142 = vadd.f32 %v4140, %v4141
  %v4143 = vrcp.pop 4.0
  %v4144 = vmul.f32 4.0, %v4143
  %v4145 = vsub.f32 1.0, %v4144
  %v4146 = vmul.f32 %v4143, %v4145
  %v4147 = vadd.f32 %v4143, %v4146
  %vm4148 = vweird.f32 %v4143
  %v4149 = vsel %vm4148, %v4143, %v4147
  %v4150 = vmul.f32 %v4142, %v4149
  %v4151 = vld [vmem:[%s13] sm:$0xff]
  %v4152 = vld [vmem:[%s13 + $0x8] sm:$0xff]
  %v4153 = vld [vmem:[%s15] sm:$0xff]
  %v4154 = vld [vmem:[%s14] sm:$0xff]
  %v4155 = vld [vmem:[%s14 + $0x8] sm:$0xff]
  %4157 = vset.pattern.permute.xlu0 0
  %4158 = vperm.xlu0 %4157, %v4154
  %v4159 = vpop.permute.xlu0 %4158
  %4162 = vset.pattern.permute.xlu0 0
  %4163 = vperm.xlu0 %4162, %v4155
  %v4164 = vpop.permute.xlu0 %4163
  %v4167 = vsel %vm88, %v4151, 0
  %v4170 = vsel %vm88, %v4152, 0
  %4172 = vmatpush.msra.mxu0 0.0
  %4173 = vmatpush.msra.mxu0 0.0
  %4174 = vmatpush.msra.mxu0 0.0
  %4175 = vmatpush.msra.mxu0 0.0
  %4176 = vmatpush.msra.mxu0 0.0
  %4177 = vmatpush.msra.mxu0 0.0
  %4178 = vmatpush.msra.mxu0 0.0
  %4179 = vmatpush.msra.mxu0 0.0
  %4180 = vmatpush.msra.mxu0 0.0
  %4181 = vmatpush.msra.mxu0 0.0
  %4182 = vmatpush.msra.mxu0 0.0
  %4183 = vmatpush.msra.mxu0 0.0
  %4184 = vmatpush.msra.mxu0 0.0
  %4185 = vmatpush.msra.mxu0 0.0
  %4186 = vmatpush.msra.mxu0 0.0
  %4187 = vmatpush.msra.mxu0 %v4153
  %4188 = vmatmul.f32.gmra.mxu0 %v4167
  %v4189 = vpop.f32.mrf.mxu0
  %v4190 = vadd.f32 %v4159, %v4189
  %4191 = vmatmul.f32.gmra.mxu0 %v4170
  %v4192 = vpop.f32.mrf.mxu0
  %v4193 = vadd.f32 %v4164, %v4192
  %4194 = vdwg.mxu0
  %v4196 = vsel %vm4135, %v4150, 0
  %4198 = vmatpush.msra.mxu0 0.0
  %4199 = vmatpush.msra.mxu0 0.0
  %4200 = vmatpush.msra.mxu0 0.0
  %4201 = vmatpush.msra.mxu0 0.0
  %4202 = vmatpush.msra.mxu0 0.0
  %4203 = vmatpush.msra.mxu0 0.0
  %4204 = vmatpush.msra.mxu0 0.0
  %4205 = vmatpush.msra.mxu0 0.0
  %4206 = vmatpush.msra.mxu0 0.0
  %4207 = vmatpush.msra.mxu0 0.0
  %4208 = vmatpush.msra.mxu0 0.0
  %4209 = vmatpush.msra.mxu0 0.0
  %4210 = vmatpush.msra.mxu0 0.0
  %4211 = vmatpush.msra.mxu0 0.0
  %4212 = vmatpush.msra.mxu0 %v4193
  %4213 = vmatpush.msra.mxu0 %v4190
  %4214 = vmatmul.f32.gmra.mxu0 %v4196
  %v4215 = vpop.f32.mrf.mxu0
  %v4216 = vadd.f32 0.0, %v4215
  %4217 = vdwg.mxu0
  %v4218 = vmul.f32 %v4216, 0.25
  %v4219 = vsel %vm88, %v4218, -inf
  %v4220 = vrot.slane %v4219, 4
  %v4221 = vmax.f32 %v4219, %v4220
  %v4222 = vrot.slane %v4221, 2
  %v4223 = vmax.f32 %v4221, %v4222
  %v4224 = vrot.slane %v4223, 1
  %v4225 = vmax.f32 %v4223, %v4224
  %v4226 = vsub.f32 %v4218, %v4225
  %v4227 = vmul.f32 %v4226, 1.442695
  %v4228 = vpow.pop %v4227
  %v4229 = vsel %vm88, %v4228, 0.0
  %v4230 = vrot.slane %v4229, 4
  %v4231 = vadd.f32 %v4229, %v4230
  %v4232 = vrot.slane %v4231, 2
  %v4233 = vadd.f32 %v4231, %v4232
  %v4234 = vrot.slane %v4233, 1
  %v4235 = vadd.f32 %v4233, %v4234
  %v4236 = vrcp.pop %v4235
  %v4237 = vmul.f32 %v4228, %v4236
  %4238 = vst.msk [vmem:[%s22] sm:$0xff] %vm88, %v4237
  %v4239 = vld [vmem:[%s16] sm:$0xff]
  %v4240 = vmul.f32 %v4239, %v4237
  %v4241 = vsel %vm88, %v4240, 0.0
  %4242 = vadd.xlane.f32.xlu0 %v4241
  %v4243 = vpop.xlane.xlu0 %4242
  %v4244 = vxor.u32 %v4243, 2147483648
  %v4245 = vmul.f32 %v4244, 1.442695
  %v4246 = vpow.pop %v4245
  %v4247 = vadd.f32 %v4246, 1.0
  %v4248 = vrcp.pop %v4247
  %v4249 = vmul.f32 %v4247, %v4248
  %v4250 = vsub.f32 1.0, %v4249
  %v4251 = vmul.f32 %v4248, %v4250
  %v4252 = vadd.f32 %v4248, %v4251
  %vm4253 = vweird.f32 %v4247
  %vm4254 = vweird.f32 %v4248
  %vm4255 = vmor %vm4253, %vm4254
  %v4256 = vsel %vm4255, %v4248, %v4252
  %v4257 = vand.u32 2147483647, %v4247
  %vm4258 = vcmp.eq.f32.partialorder %v4257, 8.507059e+37
  %v4259 = vand.u32 %v4247, 2147483648
  %v4260 = vor.u32 1.1754944e-38, %v4259
  %v4261 = vsel %vm4258, %v4260, %v4256
  %v4262 = vmul.f32 1.0, %v4261
  %vm4263 = vcmask 7168
  %4264 = vst.msk [vmem:[%s23] sm:$0xff] %vm4263, %v4262
  %v4265 = vadd.f32 %v4262, 1.0
  %v4266 = vmul.f32 %v4131, %v4265
  %v4267 = vmul.f32 %v4132, %v4265
  %v4268 = vmul.f32 %v4133, %v4265
  %v4269 = vmul.f32 %v4134, %v4265
  %v4270 = vld [vmem:[%s17] sm:$0xff]
  %v4271 = vld [vmem:[%s17 + $0x8] sm:$0xff]
  %v4272 = vpack.c.bf16 %v4267, %v4266
  %v4273 = vpack.c.bf16 %v4269, %v4268
  %v4274 = vpack.c.bf16 %v4271, %v4270
  %v4275 = vld [vmem:[%s18] sm:$0x1]
  %v4277 = vperm.slane %v4275, 0
  %v4280 = vsel %vm4135, %v4272, 0
  %v4283 = vsel %vm4135, %v4273, 0
  %4285 = vmatpush.bf16.msra.mxu0 0
  %4286 = vmatpush.bf16.msra.mxu0 0
  %4287 = vmatpush.bf16.msra.mxu0 0
  %4288 = vmatpush.bf16.msra.mxu0 0
  %4289 = vmatpush.bf16.msra.mxu0 0
  %4290 = vmatpush.bf16.msra.mxu0 0
  %4291 = vmatpush.bf16.msra.mxu0 0
  %4292 = vmatpush.bf16.msra.mxu0 %v4274
  %4293 = vmatmul.bf16.gmra.mxu0 %v4280
  %v4294 = vpop.f32.mrf.mxu0
  %v4295 = vadd.f32 %v4277, %v4294
  %v4296 = vpop.f32.mrf.mxu0
  %v4297 = vadd.f32 %v4277, %v4296
  %4298 = vmatmul.bf16.gmra.mxu0 %v4283
  %v4299 = vpop.f32.mrf.mxu0
  %v4300 = vadd.f32 %v4277, %v4299
  %v4301 = vpop.f32.mrf.mxu0
  %v4302 = vadd.f32 %v4277, %v4301
  %4303 = vdwg.mxu0
  %v4304 = vmax.f32 %v4295, 0.0
  %v4305 = vmax.f32 %v4297, 0.0
  %v4306 = vmax.f32 %v4300, 0.0
  %v4307 = vmax.f32 %v4302, 0.0
  %v4308 = vld [vmem:[%s19] sm:$0xff]
  %v4309 = vld [vmem:[%s19 + $0x8] sm:$0xff]
  %v4310 = vld [vmem:[%s19 + $0x10] sm:$0xff]
  %v4311 = vld [vmem:[%s19 + $0x18] sm:$0xff]
  %v4312 = vpack.c.bf16 %v4305, %v4304
  %v4313 = vpack.c.bf16 %v4307, %v4306
  %v4314 = vpack.c.bf16 %v4309, %v4308
  %v4315 = vpack.c.bf16 %v4311, %v4310
  %v4316 = vld [vmem:[%s20] sm:$0x1]
  %v4318 = vperm.slane %v4316, 0
  %vm4320 = vcmask 261120
  %v4322 = vsel %vm4320, %v4312, 0
  %v4325 = vsel %vm4320, %v4313, 0
  %4327 = vmatpush.bf16.msra.mxu0 0
  %4328 = vmatpush.bf16.msra.mxu0 0
  %4329 = vmatpush.bf16.msra.mxu0 0
  %4330 = vmatpush.bf16.msra.mxu0 0
  %4331 = vmatpush.bf16.msra.mxu0 0
  %4332 = vmatpush.bf16.msra.mxu0 0
  %4333 = vmatpush.bf16.msra.mxu0 %v4315
  %4334 = vmatpush.bf16.msra.mxu0 %v4314
  %4335 = vmatmul.bf16.gmra.mxu0 %v4322
  %v4336 = vpop.f32.mrf.mxu0
  %v4337 = vadd.f32 %v4318, %v4336
  %v4338 = vpop.f32.mrf.mxu0
  %v4339 = vadd.f32 %v4318, %v4338
  %4340 = vmatmul.bf16.gmra.mxu0 %v4325
  %v4341 = vpop.f32.mrf.mxu0
  %v4342 = vadd.f32 %v4318, %v4341
  %v4343 = vpop.f32.mrf.mxu0
  %v4344 = vadd.f32 %v4318, %v4343
  %4345 = vdwg.mxu0
  %vm4346 = vcmask 31744
  %4347 = vst.msk [vmem:[%s21] sm:$0xff] %vm4346, %v4337
  %4348 = vst.msk [vmem:[%s21 + $0x8] sm:$0xff] %vm4346, %v4339
  %4349 = vst.msk [vmem:[%s21 + $0x10] sm:$0xff] %vm4346, %v4342
  %4350 = vst.msk [vmem:[%s21 + $0x18] sm:$0xff] %vm4346, %v4344
  // Predicated region
  $region86: #{pgwnet_forward.1} parent=0 // pred_check
    _
  $region87: #{pgwnet_forward.1} parent=0 // pred_check_branch
    %4352 = sbr.rel (0) target = $region89
  $region88: #{pgwnet_forward.1} parent=0 // pred_region
    _
  $region89: #{pgwnet_forward.1} parent=0 // pred_fallthru
    _
  // Predicated region
  $region90: #{pgwnet_forward.1} parent=0 // pred_check
    _
  $region91: #{pgwnet_forward.1} parent=0 // pred_check_branch
    %4354 = sbr.rel (0) target = $region93
  $region92: #{pgwnet_forward.1} parent=0 // pred_region
    _
  $region93: #{pgwnet_forward.1} parent=0 // pred_fallthru
    _
  // Predicated region
  $region94: #{pgwnet_forward.1} parent=0 // pred_check
    _
  $region95: #{pgwnet_forward.1} parent=0 // pred_check_branch
    %4356 = sbr.rel (0) target = $region97
  $region96: #{pgwnet_forward.1} parent=0 // pred_region
    _
  $region97: #{pgwnet_forward.1} parent=0 // pred_fallthru
    _
  // Predicated region
  $region98: #{pgwnet_forward.1} parent=0 // pred_check
    _
  $region99: #{pgwnet_forward.1} parent=0 // pred_check_branch
    %4358 = sbr.rel (0) target = $region101
  $region100: #{pgwnet_forward.1} parent=0 // pred_region
    _
  $region101: #{pgwnet_forward.1} parent=0 // pred_fallthru
    _
  // Predicated region
  $region102: #{pgwnet_forward.1} parent=0 // pred_check
    _
  $region103: #{pgwnet_forward.1} parent=0 // pred_check_branch
    %4360 = sbr.rel (0) target = $region105
  $region104: #{pgwnet_forward.1} parent=0 // pred_region
    _
  $region105: #{pgwnet_forward.1} parent=0 // pred_fallthru
    _
  // Predicated region
  $region106: #{pgwnet_forward.1} parent=0 // pred_check
    _
  $region107: #{pgwnet_forward.1} parent=0 // pred_check_branch
    %4362 = sbr.rel (0) target = $region109
  $region108: #{pgwnet_forward.1} parent=0 // pred_region
    _
  $region109: #{pgwnet_forward.1} parent=0 // pred_fallthru
    _

</llo_original>
